<compile_context>
chip_gen: v7x
topology: tpu7x:2x2x1
jax: 0.10.0
libtpu: 0.0.40
codegen_flags: <defaults>
</compile_context>

<pallas_src>
import jax
import jax.numpy as jnp
from jax.experimental import pallas as pl
from jax.experimental.pallas import tpu as pltpu

EPS = 1e-5
_PER_DY_MIN_C = 64   # >= this many channels: 3 per-dy matmuls instead of fused-9


# ----------------------------------------------------------------------------
# In-kernel helpers
# ----------------------------------------------------------------------------
def _conv3x3(zp, w_flat):
    """3x3 'same' conv of one H-tile as MXU matmul(s).

    zp:     (TH+2, W, C) bf16 — tile with its 1-row top/bottom halo already in
            place (true-edge halos zeroed by the caller). W-direction zero
            padding is injected here with zero columns.
    w_flat: (9*C, Cout) bf16 — (3, 3, C, Cout) reshaped, K ordered [dy, dx, ci].
    returns (TH*W, Cout) f32.
    """
    Hp, W, C = zp.shape
    TH = Hp - 2
    Cout = w_flat.shape[-1]
    zcol = jnp.zeros((TH, 1, C), zp.dtype)

    def dy_taps(dy):
        slab = zp[dy:dy + TH]                                   # (TH, W, C) major-axis slice
        # TODO(synk): replace the zero-column concats with pltpu.roll(axis=1)
        # + an edge mask so the W-shifts ride the idle XLU slot.
        left = jnp.concatenate([zcol, slab[:, :W - 1, :]], axis=1)
        right = jnp.concatenate([slab[:, 1:, :], zcol], axis=1)
        return [left, slab, right]                              # dx = -1, 0, +1

    if C < _PER_DY_MIN_C:
        # Tiny C (test shape): one fused K=9*C MXU push, all-bf16 patches.
        taps = []
        for dy in range(3):
            taps += dy_taps(dy)
        patches = jnp.concatenate(taps, axis=-1).reshape(TH * W, 9 * C)
        return jnp.dot(patches, w_flat, preferred_element_type=jnp.float32)

    # Large C: 3 per-dy matmuls (K = 3*C) -> im2col temporary is 3x, not 9x.
    acc = jnp.zeros((TH * W, Cout), jnp.float32)
    for dy in range(3):
        p = jnp.concatenate(dy_taps(dy), axis=-1).reshape(TH * W, 3 * C)
        acc = acc + jnp.dot(p, w_flat[dy * 3 * C:(dy + 1) * 3 * C],
                            preferred_element_type=jnp.float32)
    return acc


def _tile_stats(acc):
    """Per-tile per-channel [sum; M2], M2 = sum((x - tile_mean)^2).

    Combined with the exact parallel-variance formula in _finalize_bn; avoids
    the E[x^2]-E[x]^2 cancellation flagged in review.
    """
    s = jnp.sum(acc, axis=0, keepdims=True)
    mu = s / acc.shape[0]
    d = acc - mu
    m2 = jnp.sum(d * d, axis=0, keepdims=True)
    return jnp.concatenate([s, m2], axis=0)                     # (2, Cout)


# ----------------------------------------------------------------------------
# Kernels
# ----------------------------------------------------------------------------
def _conv1_kernel(xm_ref, xt_ref, xb_ref, w_ref, y_ref, st_ref):
    # xm: (1, TH, W, Cin) bf16 main tile;  xt/xb: (1, 1, W, Cin) bf16 halo rows
    # (row indices clamped in the index_map; zeroed here at true image edges).
    _, TH, W, _ = xm_ref.shape
    i = pl.program_id(1)
    top_ok = (i > 0).astype(xm_ref.dtype)
    bot_ok = (i < pl.num_programs(1) - 1).astype(xm_ref.dtype)
    zp = jnp.concatenate([xt_ref[0] * top_ok, xm_ref[0], xb_ref[0] * bot_ok],
                         axis=0)                                # (TH+2, W, Cin) bf16
    acc = _conv3x3(zp, w_ref[...])                              # (TH*W, Cout) f32, bias-free
    st_ref[0, 0] = _tile_stats(acc)
    y_ref[0] = acc.reshape(TH, W, -1).astype(y_ref.dtype)       # bf16 HBM intermediate


def _bn1_relu_conv2_kernel(ym_ref, yt_ref, yb_ref, w_ref, aff_ref, y2_ref, st_ref):
    # ym/yt/yb: bf16 tiles of raw conv1 output; aff = [scale1; shift1] (f32).
    _, TH, W, C = ym_ref.shape
    i = pl.program_id(1)
    scale = aff_ref[0:1, :].reshape(1, 1, C)
    shift = aff_ref[1:2, :].reshape(1, 1, C)

    def bn_relu(v):   # bf16 -> BN1 affine in f32 -> ReLU -> bf16 (pre-im2col cast)
        return jnp.maximum(v.astype(jnp.float32) * scale + shift, 0.0).astype(v.dtype)

    top_ok = (i > 0).astype(ym_ref.dtype)
    bot_ok = (i < pl.num_programs(1) - 1).astype(ym_ref.dtype)
    zp = jnp.concatenate([bn_relu(yt_ref[0]) * top_ok,          # zero pad applies to z,
                          bn_relu(ym_ref[0]),                   # so mask AFTER BN+ReLU
                          bn_relu(yb_ref[0]) * bot_ok], axis=0)
    acc = _conv3x3(zp, w_ref[...])                              # (TH*W, Cout) f32
    st_ref[0, 0] = _tile_stats(acc)
    y2_ref[0] = acc.reshape(TH, W, -1).astype(y2_ref.dtype)


def _bn2_relu_kernel(y2_ref, aff_ref, o_ref):
    # y2: (1, TH, W, C) bf16 raw conv2 output; aff = [scale2; shift2] (f32).
    _, TH, W, C = y2_ref.shape
    scale = aff_ref[0:1, :].reshape(1, 1, C)
    shift = aff_ref[1:2, :].reshape(1, 1, C)
    z = jnp.maximum(y2_ref[0].astype(jnp.float32) * scale + shift, 0.0)
    o_ref[0] = z.astype(o_ref.dtype)
    # TODO(synk): with a bf16 final output this phase could alias onto y2 via
    # input_output_aliases={0: 0}; skipped because the module returns f32.


# ----------------------------------------------------------------------------
# Host-side helpers
# ----------------------------------------------------------------------------
def _finalize_bn(st, gamma, beta, n_tile, m):
    # st: (N, nH, 2, C) per-tile [sum; M2]; exact parallel-variance combine.
    sum_t = st[:, :, 0, :]
    m2_t = st[:, :, 1, :]
    total = jnp.sum(sum_t, axis=(0, 1))
    mean = total / m
    mean_t = sum_t / n_tile
    m2 = jnp.sum(m2_t, axis=(0, 1)) + n_tile * jnp.sum((mean_t - mean) ** 2, axis=(0, 1))
    var = jnp.maximum(m2 / m, 0.0)
    scale = gamma * jax.lax.rsqrt(var + EPS)
    shift = beta - mean * scale
    return jnp.stack([scale, shift], axis=0)                    # (2, C) f32


def _vmem_limit_bytes():
    # v5e/v6e: 128 MiB physical VMEM, v7x: 64 MiB. Ask for ~3/4 of whatever the
    # chip has (capped at 96 MiB) instead of a one-size-fits-all 32 MiB.
    phys = 64 * 1024 * 1024
    try:
        phys = int(getattr(pltpu.get_tpu_info(), "vmem_capacity_bytes", phys))
    except Exception:
        pass
    return int(min(96 * 1024 * 1024, (phys * 3) // 4))


def _pick_h_tile(H, W, C, Cout):
    # Size the H-tile so the per-step working set (dominated by the bf16
    # im2col patches) stays well under a conservative per-step budget, while
    # keeping >= 2 H-tiles so both v7x TensorCores get pipelined steps.
    budget = 4 * 1024 * 1024
    k_blowup = 9 if C < _PER_DY_MIN_C else 3
    per_row = W * (2 * 3 * C            # bf16 tile + halo rows (double-buffered-ish)
                   + 2 * k_blowup * C   # bf16 im2col patches
                   + 4 * Cout           # f32 accumulator
                   + 2 * Cout)          # bf16 output tile
    th = max(1, min(H, budget // max(per_row, 1)))
    if H >= 2:
        th = min(th, max(1, H // 2))    # at least 2 H-tiles when possible
    while H % th:
        th -= 1
    return th


@jax.jit
def double_conv(x_nchw, params):
    """(N, Cin, H, W) f32 -> (N, Cout, H, W) f32.  Matches DoubleConv.forward
    in training mode (batch-statistics BatchNorm, dropout p=0 == Identity)."""
    w1, b1, g1, be1, w2, b2, g2, be2 = params   # b1/b2 unused: cancelled by BN mean
    N, Cin, H, W = x_nchw.shape
    Cout = w1.shape[-1]
    m = N * H * W
    TH = _pick_h_tile(H, W, max(Cin, Cout), Cout)
    nH = H // TH

    # NCHW -> NHWC (C on lanes) + bf16 (MXU operands, halved x DMA traffic).
    # TODO(synk): in an end-to-end NHWC pipeline these wrapper transposes disappear.
    x = jnp.transpose(x_nchw, (0, 2, 3, 1)).astype(jnp.bfloat16)
    w1f = w1.reshape(9 * Cin, Cout).astype(jnp.bfloat16)
    w2f = w2.reshape(9 * Cout, Cout).astype(jnp.bfloat16)

    cparams = pltpu.CompilerParams(
        dimension_semantics=("parallel", "parallel"),
        vmem_limit_bytes=_vmem_limit_bytes())
    grid = (N, nH)

    def tile_spec(C):      # (1, TH, W, C) tile at (batch n, h-tile i)
        return pl.BlockSpec((1, TH, W, C), lambda n, i: (n, i, 0, 0))

    def halo_top_spec(C):  # 1-row halo above the tile (row i*TH-1, clamped)
        return pl.BlockSpec((1, 1, W, C),
                            lambda n, i: (n, jnp.maximum(i * TH - 1, 0), 0, 0))

    def halo_bot_spec(C):  # 1-row halo below the tile (row (i+1)*TH, clamped)
        return pl.BlockSpec((1, 1, W, C),
                            lambda n, i: (n, jnp.minimum((i + 1) * TH, H - 1), 0, 0))

    def whole(shape):      # small resident array (weights / BN affine)
        return pl.BlockSpec(shape, lambda n, i: (0,) * len(shape))

    st_spec = pl.BlockSpec((1, 1, 2, Cout), lambda n, i: (n, i, 0, 0))
    st_shape = jax.ShapeDtypeStruct((N, nH, 2, Cout), jnp.float32)

    # Phase 1: conv1 (bias-free, bf16 MXU) + per-tile partial BN1 stats.
    y1, st1 = pl.pallas_call(
        _conv1_kernel,
        grid=grid,
        in_specs=[tile_spec(Cin), halo_top_spec(Cin), halo_bot_spec(Cin),
                  whole((9 * Cin, Cout))],
        out_specs=[tile_spec(Cout), st_spec],
        out_shape=[jax.ShapeDtypeStruct((N, H, W, Cout), jnp.bfloat16), st_shape],
        compiler_params=cparams,
    )(x, x, x, w1f)

    aff1 = _finalize_bn(st1, g1, be1, TH * W, m)

    # Phase 2: BN1 + ReLU + conv2 + per-tile partial BN2 stats.
    y2, st2 = pl.pallas_call(
        _bn1_relu_conv2_kernel,
        grid=grid,
        in_specs=[tile_spec(Cout), halo_top_spec(Cout), halo_bot_spec(Cout),
                  whole((9 * Cout, Cout)), whole((2, Cout))],
        out_specs=[tile_spec(Cout), st_spec],
        out_shape=[jax.ShapeDtypeStruct((N, H, W, Cout), jnp.bfloat16), st_shape],
        compiler_params=cparams,
    )(y1, y1, y1, w2f, aff1)

    aff2 = _finalize_bn(st2, g2, be2, TH * W, m)

    # Phase 3: BN2 + ReLU (f32 final output).
    out_nhwc = pl.pallas_call(
        _bn2_relu_kernel,
        grid=grid,
        in_specs=[tile_spec(Cout), whole((2, Cout))],
        out_specs=tile_spec(Cout),
        out_shape=jax.ShapeDtypeStruct((N, H, W, Cout), jnp.float32),
        compiler_params=cparams,
    )(y2, aff2)

    return jnp.transpose(out_nhwc, (0, 3, 1, 2))


# ----------------------------------------------------------------------------
# Parameters + pure-JAX reference (module semantics, f32)
# ----------------------------------------------------------------------------
def make_params(key, in_ch, out_ch):
    """Synthetic parameters; shapes mirror nn.Conv2d / nn.BatchNorm2d."""
    k1, k2, k3, k4 = jax.random.split(key, 4)
    scale1 = 1.0 / jnp.sqrt(in_ch * 9.0)
    scale2 = 1.0 / jnp.sqrt(out_ch * 9.0)
    w1 = jax.random.uniform(k1, (3, 3, in_ch, out_ch), jnp.float32, -scale1, scale1)
    b1 = jax.random.uniform(k2, (out_ch,), jnp.float32, -scale1, scale1)
    w2 = jax.random.uniform(k3, (3, 3, out_ch, out_ch), jnp.float32, -scale2, scale2)
    b2 = jax.random.uniform(k4, (out_ch,), jnp.float32, -scale2, scale2)
    g1 = jnp.ones((out_ch,), jnp.float32)
    be1 = jnp.zeros((out_ch,), jnp.float32)
    g2 = jnp.ones((out_ch,), jnp.float32)
    be2 = jnp.zeros((out_ch,), jnp.float32)
    return (w1, b1, g1, be1, w2, b2, g2, be2)


def reference_double_conv(x_nchw, params):
    """All-f32 XLA reference of the PyTorch module (training-mode BN)."""
    w1, b1, g1, be1, w2, b2, g2, be2 = params

    def conv(x, w, b):
        y = jax.lax.conv_general_dilated(
            x, w, window_strides=(1, 1), padding="SAME",
            dimension_numbers=("NCHW", "HWIO", "NCHW"))
        return y + b.reshape(1, -1, 1, 1)

    def bn_relu(y, g, be):
        mean = jnp.mean(y, axis=(0, 2, 3), keepdims=True)
        var = jnp.mean((y - mean) ** 2, axis=(0, 2, 3), keepdims=True)
        yn = (y - mean) / jnp.sqrt(var + EPS)
        yn = yn * g.reshape(1, -1, 1, 1) + be.reshape(1, -1, 1, 1)
        return jnp.maximum(yn, 0.0)

    y = bn_relu(conv(x_nchw, w1, b1), g1, be1)
    y = bn_relu(conv(y, w2, b2), g2, be2)
    return y


if __name__ == "__main__":
    key = jax.random.PRNGKey(0)
    kx, kp = jax.random.split(key)

    N, IN_CH, OUT_CH, H, W = 2, 4, 8, 16, 16
    x = jax.random.normal(kx, (N, IN_CH, H, W), jnp.float32)
    params = make_params(kp, IN_CH, OUT_CH)

    out = jax.block_until_ready(double_conv(x, params))
    ref = reference_double_conv(x, params)

    assert out.shape == (N, OUT_CH, H, W), out.shape
    # bf16 MXU operands + bf16 HBM intermediates (f32 accumulation, f32 BN
    # statistics) vs. the all-f32 reference -> bf16-appropriate tolerances.
    max_err = float(jnp.max(jnp.abs(out - ref)))
    assert jnp.allclose(out, ref, atol=7.5e-2, rtol=5e-2), max_err

    print("KERNEL_OK")
</pallas_src>

<mosaic_0001>
module attributes {stable_mosaic.version = 11 : i64} {
  func.func @_bn1_relu_conv2_kernel(%arg0: i32, %arg1: i32, %arg2: memref<1x8x16x8xbf16, #tpu.memory_space<vmem>>, %arg3: memref<1x1x16x8xbf16, #tpu.memory_space<vmem>>, %arg4: memref<1x1x16x8xbf16, #tpu.memory_space<vmem>>, %arg5: memref<72x8xbf16, #tpu.memory_space<vmem>>, %arg6: memref<2x8xf32, #tpu.memory_space<vmem>>, %arg7: memref<1x8x16x8xbf16, #tpu.memory_space<vmem>>, %arg8: memref<1x1x2x8xf32, #tpu.memory_space<vmem>>) attributes {dimension_semantics = [#tpu.dimension_semantics<parallel>, #tpu.dimension_semantics<parallel>], iteration_bounds = array<i64: 2, 2>, scalar_prefetch = 0 : i64, scratch_operands = 0 : i64, tpu.core_type = #tpu.core_type<tc>, window_params = [{transform_indices = @transform_0, window_bounds = array<i64: 1, 8, 16, 8>}, {transform_indices = @transform_1, window_bounds = array<i64: 1, 1, 16, 8>}, {transform_indices = @transform_2, window_bounds = array<i64: 1, 1, 16, 8>}, {pipeline_mode = #tpu.pipeline_mode<synchronous>, transform_indices = @transform_3, window_bounds = array<i64: 72, 8>}, {pipeline_mode = #tpu.pipeline_mode<synchronous>, transform_indices = @transform_4, window_bounds = array<i64: 2, 8>}, {transform_indices = @transform_5, window_bounds = array<i64: 1, 8, 16, 8>}, {transform_indices = @transform_6, window_bounds = array<i64: 1, 1, 2, 8>}]} {
    %c0 = arith.constant 0 : index
    %c0_0 = arith.constant 0 : index
    %0 = vector.load %arg6[%c0, %c0_0] : memref<2x8xf32, #tpu.memory_space<vmem>>, vector<1x8xf32>
    %1 = vector.shape_cast %0 : vector<1x8xf32> to vector<1x1x8xf32>
    %c1 = arith.constant 1 : index
    %c0_1 = arith.constant 0 : index
    %2 = vector.load %arg6[%c1, %c0_1] : memref<2x8xf32, #tpu.memory_space<vmem>>, vector<1x8xf32>
    %3 = vector.shape_cast %2 : vector<1x8xf32> to vector<1x1x8xf32>
    %c0_i32 = arith.constant 0 : i32
    %4 = arith.cmpi sgt, %arg1, %c0_i32 : i32
    %5 = arith.extui %4 : i1 to i32
    %6 = arith.sitofp %5 : i32 to f32
    %7 = arith.truncf %6 : f32 to bf16
    %c1_i32 = arith.constant 1 : i32
    %8 = arith.cmpi slt, %arg1, %c1_i32 : i32
    %9 = arith.extui %8 : i1 to i32
    %10 = arith.sitofp %9 : i32 to f32
    %11 = arith.truncf %10 : f32 to bf16
    %c0_2 = arith.constant 0 : index
    %c0_3 = arith.constant 0 : index
    %c0_4 = arith.constant 0 : index
    %c0_5 = arith.constant 0 : index
    %12 = vector.load %arg3[%c0_2, %c0_3, %c0_4, %c0_5] : memref<1x1x16x8xbf16, #tpu.memory_space<vmem>>, vector<1x1x16x8xbf16>
    %13 = vector.shape_cast %12 : vector<1x1x16x8xbf16> to vector<1x16x8xbf16>
    %14 = arith.extf %13 : vector<1x16x8xbf16> to vector<1x16x8xf32>
    %15 = vector.broadcast %1 : vector<1x1x8xf32> to vector<1x16x8xf32>
    %16 = arith.mulf %14, %15 : vector<1x16x8xf32>
    %17 = vector.broadcast %3 : vector<1x1x8xf32> to vector<1x16x8xf32>
    %18 = arith.addf %16, %17 : vector<1x16x8xf32>
    %cst = arith.constant 0.000000e+00 : f32
    %19 = vector.broadcast %cst : f32 to vector<1x16x8xf32>
    %20 = arith.maximumf %18, %19 : vector<1x16x8xf32>
    %21 = arith.truncf %20 : vector<1x16x8xf32> to vector<1x16x8xbf16>
    %22 = vector.broadcast %7 : bf16 to vector<1x16x8xbf16>
    %23 = arith.mulf %21, %22 : vector<1x16x8xbf16>
    %c0_6 = arith.constant 0 : index
    %c0_7 = arith.constant 0 : index
    %c0_8 = arith.constant 0 : index
    %c0_9 = arith.constant 0 : index
    %24 = vector.load %arg2[%c0_6, %c0_7, %c0_8, %c0_9] : memref<1x8x16x8xbf16, #tpu.memory_space<vmem>>, vector<1x8x16x8xbf16>
    %25 = vector.shape_cast %24 : vector<1x8x16x8xbf16> to vector<8x16x8xbf16>
    %26 = arith.extf %25 : vector<8x16x8xbf16> to vector<8x16x8xf32>
    %27 = vector.broadcast %1 : vector<1x1x8xf32> to vector<8x16x8xf32>
    %28 = arith.mulf %26, %27 : vector<8x16x8xf32>
    %29 = vector.broadcast %3 : vector<1x1x8xf32> to vector<8x16x8xf32>
    %30 = arith.addf %28, %29 : vector<8x16x8xf32>
    %cst_10 = arith.constant 0.000000e+00 : f32
    %31 = vector.broadcast %cst_10 : f32 to vector<8x16x8xf32>
    %32 = arith.maximumf %30, %31 : vector<8x16x8xf32>
    %33 = arith.truncf %32 : vector<8x16x8xf32> to vector<8x16x8xbf16>
    %c0_11 = arith.constant 0 : index
    %c0_12 = arith.constant 0 : index
    %c0_13 = arith.constant 0 : index
    %c0_14 = arith.constant 0 : index
    %34 = vector.load %arg4[%c0_11, %c0_12, %c0_13, %c0_14] : memref<1x1x16x8xbf16, #tpu.memory_space<vmem>>, vector<1x1x16x8xbf16>
    %35 = vector.shape_cast %34 : vector<1x1x16x8xbf16> to vector<1x16x8xbf16>
    %36 = arith.extf %35 : vector<1x16x8xbf16> to vector<1x16x8xf32>
    %37 = vector.broadcast %1 : vector<1x1x8xf32> to vector<1x16x8xf32>
    %38 = arith.mulf %36, %37 : vector<1x16x8xf32>
    %39 = vector.broadcast %3 : vector<1x1x8xf32> to vector<1x16x8xf32>
    %40 = arith.addf %38, %39 : vector<1x16x8xf32>
    %cst_15 = arith.constant 0.000000e+00 : f32
    %41 = vector.broadcast %cst_15 : f32 to vector<1x16x8xf32>
    %42 = arith.maximumf %40, %41 : vector<1x16x8xf32>
    %43 = arith.truncf %42 : vector<1x16x8xf32> to vector<1x16x8xbf16>
    %44 = vector.broadcast %11 : bf16 to vector<1x16x8xbf16>
    %45 = arith.mulf %43, %44 : vector<1x16x8xbf16>
    %46 = tpu.concatenate %23, %33, %45 in 0 : vector<1x16x8xbf16>, vector<8x16x8xbf16>, vector<1x16x8xbf16> -> vector<10x16x8xbf16>
    %c0_16 = arith.constant 0 : index
    %c0_17 = arith.constant 0 : index
    %47 = vector.load %arg5[%c0_16, %c0_17] : memref<72x8xbf16, #tpu.memory_space<vmem>>, vector<72x8xbf16>
    %cst_18 = arith.constant 0.000000e+00 : bf16
    %48 = vector.broadcast %cst_18 : bf16 to vector<8x1x8xbf16>
    %49 = vector.extract_strided_slice %46 {offsets = [0, 0, 0], sizes = [8, 16, 8], strides = [1, 1, 1]} : vector<10x16x8xbf16> to vector<8x16x8xbf16>
    %50 = vector.extract_strided_slice %49 {offsets = [0, 0, 0], sizes = [8, 15, 8], strides = [1, 1, 1]} : vector<8x16x8xbf16> to vector<8x15x8xbf16>
    %51 = tpu.concatenate %48, %50 in 1 : vector<8x1x8xbf16>, vector<8x15x8xbf16> -> vector<8x16x8xbf16>
    %52 = vector.extract_strided_slice %49 {offsets = [0, 1, 0], sizes = [8, 15, 8], strides = [1, 1, 1]} : vector<8x16x8xbf16> to vector<8x15x8xbf16>
    %53 = tpu.concatenate %52, %48 in 1 : vector<8x15x8xbf16>, vector<8x1x8xbf16> -> vector<8x16x8xbf16>
    %54 = vector.extract_strided_slice %46 {offsets = [1, 0, 0], sizes = [8, 16, 8], strides = [1, 1, 1]} : vector<10x16x8xbf16> to vector<8x16x8xbf16>
    %55 = vector.extract_strided_slice %54 {offsets = [0, 0, 0], sizes = [8, 15, 8], strides = [1, 1, 1]} : vector<8x16x8xbf16> to vector<8x15x8xbf16>
    %56 = tpu.concatenate %48, %55 in 1 : vector<8x1x8xbf16>, vector<8x15x8xbf16> -> vector<8x16x8xbf16>
    %57 = vector.extract_strided_slice %54 {offsets = [0, 1, 0], sizes = [8, 15, 8], strides = [1, 1, 1]} : vector<8x16x8xbf16> to vector<8x15x8xbf16>
    %58 = tpu.concatenate %57, %48 in 1 : vector<8x15x8xbf16>, vector<8x1x8xbf16> -> vector<8x16x8xbf16>
    %59 = vector.extract_strided_slice %46 {offsets = [2, 0, 0], sizes = [8, 16, 8], strides = [1, 1, 1]} : vector<10x16x8xbf16> to vector<8x16x8xbf16>
    %60 = vector.extract_strided_slice %59 {offsets = [0, 0, 0], sizes = [8, 15, 8], strides = [1, 1, 1]} : vector<8x16x8xbf16> to vector<8x15x8xbf16>
    %61 = tpu.concatenate %48, %60 in 1 : vector<8x1x8xbf16>, vector<8x15x8xbf16> -> vector<8x16x8xbf16>
    %62 = vector.extract_strided_slice %59 {offsets = [0, 1, 0], sizes = [8, 15, 8], strides = [1, 1, 1]} : vector<8x16x8xbf16> to vector<8x15x8xbf16>
    %63 = tpu.concatenate %62, %48 in 1 : vector<8x15x8xbf16>, vector<8x1x8xbf16> -> vector<8x16x8xbf16>
    %64 = tpu.concatenate %51, %49, %53, %56, %54, %58, %61, %59, %63 in 2 : vector<8x16x8xbf16>, vector<8x16x8xbf16>, vector<8x16x8xbf16>, vector<8x16x8xbf16>, vector<8x16x8xbf16>, vector<8x16x8xbf16>, vector<8x16x8xbf16>, vector<8x16x8xbf16>, vector<8x16x8xbf16> -> vector<8x16x72xbf16>
    %65 = vector.shape_cast %64 : vector<8x16x72xbf16> to vector<128x72xbf16>
    %cst_19 = arith.constant dense<0.000000e+00> : vector<128x8xf32>
    %66 = tpu.matmul %65, %47, %cst_19 {dimension_numbers = #tpu.dot_dimension_numbers<[1], [0], [0], [1], [0, 0, 1, 1], [], []>} : vector<128x72xbf16>, vector<72x8xbf16>, vector<128x8xf32> -> vector<128x8xf32>
    %cst_20 = arith.constant dense<0.000000e+00> : vector<8xf32>
    %67 = vector.multi_reduction <add>, %66, %cst_20 [0] : vector<128x8xf32> to vector<8xf32>
    %68 = vector.shape_cast %67 : vector<8xf32> to vector<1x8xf32>
    %cst_21 = arith.constant 1.280000e+02 : f32
    %69 = vector.broadcast %cst_21 : f32 to vector<1x8xf32>
    %70 = arith.divf %68, %69 : vector<1x8xf32>
    %71 = vector.broadcast %70 : vector<1x8xf32> to vector<128x8xf32>
    %72 = arith.subf %66, %71 : vector<128x8xf32>
    %73 = arith.mulf %72, %72 : vector<128x8xf32>
    %cst_22 = arith.constant dense<0.000000e+00> : vector<8xf32>
    %74 = vector.multi_reduction <add>, %73, %cst_22 [0] : vector<128x8xf32> to vector<8xf32>
    %75 = vector.shape_cast %74 : vector<8xf32> to vector<1x8xf32>
    %76 = tpu.concatenate %68, %75 in 0 : vector<1x8xf32>, vector<1x8xf32> -> vector<2x8xf32>
    %c0_23 = arith.constant 0 : index
    %c0_24 = arith.constant 0 : index
    %c0_25 = arith.constant 0 : index
    %c0_26 = arith.constant 0 : index
    %77 = vector.load %arg8[%c0_23, %c0_24, %c0_25, %c0_26] : memref<1x1x2x8xf32, #tpu.memory_space<vmem>>, vector<1x1x2x8xf32>
    %78 = vector.shape_cast %77 : vector<1x1x2x8xf32> to vector<2x8xf32>
    %79 = vector.shape_cast %76 : vector<2x8xf32> to vector<1x1x2x8xf32>
    tpu.vector_store %arg8[%c0_23, %c0_24, %c0_25, %c0_26], %79 {strides = array<i32>} : memref<1x1x2x8xf32, #tpu.memory_space<vmem>>, vector<1x1x2x8xf32>,
    %80 = vector.shape_cast %66 : vector<128x8xf32> to vector<8x16x8xf32>
    %81 = arith.truncf %80 : vector<8x16x8xf32> to vector<8x16x8xbf16>
    %c0_27 = arith.constant 0 : index
    %c0_28 = arith.constant 0 : index
    %c0_29 = arith.constant 0 : index
    %c0_30 = arith.constant 0 : index
    %82 = vector.load %arg7[%c0_27, %c0_28, %c0_29, %c0_30] : memref<1x8x16x8xbf16, #tpu.memory_space<vmem>>, vector<1x8x16x8xbf16>
    %83 = vector.shape_cast %82 : vector<1x8x16x8xbf16> to vector<8x16x8xbf16>
    %84 = vector.shape_cast %81 : vector<8x16x8xbf16> to vector<1x8x16x8xbf16>
    tpu.vector_store %arg7[%c0_27, %c0_28, %c0_29, %c0_30], %84 {strides = array<i32>} : memref<1x8x16x8xbf16, #tpu.memory_space<vmem>>, vector<1x8x16x8xbf16>,
    return
  }
  func.func @transform_0(%arg0: i32, %arg1: i32) -> (i32, i32, i32, i32) {
    %c0_i32 = arith.constant 0 : i32
    %c0_i32_0 = arith.constant 0 : i32
    %c0_i32_1 = arith.constant 0 : i32
    return %arg0, %arg1, %c0_i32, %c0_i32_0 : i32, i32, i32, i32
  }
  func.func @transform_1(%arg0: i32, %arg1: i32) -> (i32, i32, i32, i32) {
    %c8_i32 = arith.constant 8 : i32
    %0 = arith.muli %arg1, %c8_i32 : i32
    %c1_i32 = arith.constant 1 : i32
    %1 = arith.subi %0, %c1_i32 : i32
    %c0_i32 = arith.constant 0 : i32
    %2 = arith.maxsi %1, %c0_i32 : i32
    %c0_i32_0 = arith.constant 0 : i32
    %c0_i32_1 = arith.constant 0 : i32
    %c0_i32_2 = arith.constant 0 : i32
    return %arg0, %2, %c0_i32_0, %c0_i32_1 : i32, i32, i32, i32
  }
  func.func @transform_2(%arg0: i32, %arg1: i32) -> (i32, i32, i32, i32) {
    %c1_i32 = arith.constant 1 : i32
    %0 = arith.addi %arg1, %c1_i32 : i32
    %c8_i32 = arith.constant 8 : i32
    %1 = arith.muli %0, %c8_i32 : i32
    %c15_i32 = arith.constant 15 : i32
    %2 = arith.minsi %1, %c15_i32 : i32
    %c0_i32 = arith.constant 0 : i32
    %c0_i32_0 = arith.constant 0 : i32
    %c0_i32_1 = arith.constant 0 : i32
    return %arg0, %2, %c0_i32, %c0_i32_0 : i32, i32, i32, i32
  }
  func.func @transform_3(%arg0: i32, %arg1: i32) -> (i32, i32) {
    %c0_i32 = arith.constant 0 : i32
    %c0_i32_0 = arith.constant 0 : i32
    %c0_i32_1 = arith.constant 0 : i32
    return %c0_i32, %c0_i32_0 : i32, i32
  }
  func.func @transform_4(%arg0: i32, %arg1: i32) -> (i32, i32) {
    %c0_i32 = arith.constant 0 : i32
    %c0_i32_0 = arith.constant 0 : i32
    %c0_i32_1 = arith.constant 0 : i32
    return %c0_i32, %c0_i32_0 : i32, i32
  }
  func.func @transform_5(%arg0: i32, %arg1: i32) -> (i32, i32, i32, i32) {
    %c0_i32 = arith.constant 0 : i32
    %c0_i32_0 = arith.constant 0 : i32
    %c0_i32_1 = arith.constant 0 : i32
    return %arg0, %arg1, %c0_i32, %c0_i32_0 : i32, i32, i32, i32
  }
  func.func @transform_6(%arg0: i32, %arg1: i32) -> (i32, i32, i32, i32) {
    %c0_i32 = arith.constant 0 : i32
    %c0_i32_0 = arith.constant 0 : i32
    %c0_i32_1 = arith.constant 0 : i32
    return %arg0, %arg1, %c0_i32, %c0_i32_0 : i32, i32, i32, i32
  }
}

module attributes {stable_mosaic.version = 11 : i64} {
  func.func @_bn2_relu_kernel(%arg0: i32, %arg1: i32, %arg2: memref<1x8x16x8xbf16, #tpu.memory_space<vmem>>, %arg3: memref<2x8xf32, #tpu.memory_space<vmem>>, %arg4: memref<1x8x16x8xf32, #tpu.memory_space<vmem>>) attributes {dimension_semantics = [#tpu.dimension_semantics<parallel>, #tpu.dimension_semantics<parallel>], iteration_bounds = array<i64: 2, 2>, scalar_prefetch = 0 : i64, scratch_operands = 0 : i64, tpu.core_type = #tpu.core_type<tc>, window_params = [{transform_indices = @transform_0, window_bounds = array<i64: 1, 8, 16, 8>}, {pipeline_mode = #tpu.pipeline_mode<synchronous>, transform_indices = @transform_1, window_bounds = array<i64: 2, 8>}, {transform_indices = @transform_2, window_bounds = array<i64: 1, 8, 16, 8>}]} {
    %c0 = arith.constant 0 : index
    %c0_0 = arith.constant 0 : index
    %0 = vector.load %arg3[%c0, %c0_0] : memref<2x8xf32, #tpu.memory_space<vmem>>, vector<1x8xf32>
    %1 = vector.shape_cast %0 : vector<1x8xf32> to vector<1x1x8xf32>
    %c1 = arith.constant 1 : index
    %c0_1 = arith.constant 0 : index
    %2 = vector.load %arg3[%c1, %c0_1] : memref<2x8xf32, #tpu.memory_space<vmem>>, vector<1x8xf32>
    %3 = vector.shape_cast %2 : vector<1x8xf32> to vector<1x1x8xf32>
    %c0_2 = arith.constant 0 : index
    %c0_3 = arith.constant 0 : index
    %c0_4 = arith.constant 0 : index
    %c0_5 = arith.constant 0 : index
    %4 = vector.load %arg2[%c0_2, %c0_3, %c0_4, %c0_5] : memref<1x8x16x8xbf16, #tpu.memory_space<vmem>>, vector<1x8x16x8xbf16>
    %5 = vector.shape_cast %4 : vector<1x8x16x8xbf16> to vector<8x16x8xbf16>
    %6 = arith.extf %5 : vector<8x16x8xbf16> to vector<8x16x8xf32>
    %7 = vector.broadcast %1 : vector<1x1x8xf32> to vector<8x16x8xf32>
    %8 = arith.mulf %6, %7 : vector<8x16x8xf32>
    %9 = vector.broadcast %3 : vector<1x1x8xf32> to vector<8x16x8xf32>
    %10 = arith.addf %8, %9 : vector<8x16x8xf32>
    %cst = arith.constant 0.000000e+00 : f32
    %11 = vector.broadcast %cst : f32 to vector<8x16x8xf32>
    %12 = arith.maximumf %10, %11 : vector<8x16x8xf32>
    %c0_6 = arith.constant 0 : index
    %c0_7 = arith.constant 0 : index
    %c0_8 = arith.constant 0 : index
    %c0_9 = arith.constant 0 : index
    %13 = vector.load %arg4[%c0_6, %c0_7, %c0_8, %c0_9] : memref<1x8x16x8xf32, #tpu.memory_space<vmem>>, vector<1x8x16x8xf32>
    %14 = vector.shape_cast %13 : vector<1x8x16x8xf32> to vector<8x16x8xf32>
    %15 = vector.shape_cast %12 : vector<8x16x8xf32> to vector<1x8x16x8xf32>
    tpu.vector_store %arg4[%c0_6, %c0_7, %c0_8, %c0_9], %15 {strides = array<i32>} : memref<1x8x16x8xf32, #tpu.memory_space<vmem>>, vector<1x8x16x8xf32>,
    return
  }
  func.func @transform_0(%arg0: i32, %arg1: i32) -> (i32, i32, i32, i32) {
    %c0_i32 = arith.constant 0 : i32
    %c0_i32_0 = arith.constant 0 : i32
    %c0_i32_1 = arith.constant 0 : i32
    return %arg0, %arg1, %c0_i32, %c0_i32_0 : i32, i32, i32, i32
  }
  func.func @transform_1(%arg0: i32, %arg1: i32) -> (i32, i32) {
    %c0_i32 = arith.constant 0 : i32
    %c0_i32_0 = arith.constant 0 : i32
    %c0_i32_1 = arith.constant 0 : i32
    return %c0_i32, %c0_i32_0 : i32, i32
  }
  func.func @transform_2(%arg0: i32, %arg1: i32) -> (i32, i32, i32, i32) {
    %c0_i32 = arith.constant 0 : i32
    %c0_i32_0 = arith.constant 0 : i32
    %c0_i32_1 = arith.constant 0 : i32
    return %arg0, %arg1, %c0_i32, %c0_i32_0 : i32, i32, i32, i32
  }
}

module attributes {stable_mosaic.version = 11 : i64} {
  func.func @_conv1_kernel(%arg0: i32, %arg1: i32, %arg2: memref<1x8x16x4xbf16, #tpu.memory_space<vmem>>, %arg3: memref<1x1x16x4xbf16, #tpu.memory_space<vmem>>, %arg4: memref<1x1x16x4xbf16, #tpu.memory_space<vmem>>, %arg5: memref<36x8xbf16, #tpu.memory_space<vmem>>, %arg6: memref<1x8x16x8xbf16, #tpu.memory_space<vmem>>, %arg7: memref<1x1x2x8xf32, #tpu.memory_space<vmem>>) attributes {dimension_semantics = [#tpu.dimension_semantics<parallel>, #tpu.dimension_semantics<parallel>], iteration_bounds = array<i64: 2, 2>, scalar_prefetch = 0 : i64, scratch_operands = 0 : i64, tpu.core_type = #tpu.core_type<tc>, window_params = [{transform_indices = @transform_0, window_bounds = array<i64: 1, 8, 16, 4>}, {transform_indices = @transform_1, window_bounds = array<i64: 1, 1, 16, 4>}, {transform_indices = @transform_2, window_bounds = array<i64: 1, 1, 16, 4>}, {pipeline_mode = #tpu.pipeline_mode<synchronous>, transform_indices = @transform_3, window_bounds = array<i64: 36, 8>}, {transform_indices = @transform_4, window_bounds = array<i64: 1, 8, 16, 8>}, {transform_indices = @transform_5, window_bounds = array<i64: 1, 1, 2, 8>}]} {
    %c0_i32 = arith.constant 0 : i32
    %0 = arith.cmpi sgt, %arg1, %c0_i32 : i32
    %1 = arith.extui %0 : i1 to i32
    %2 = arith.sitofp %1 : i32 to f32
    %3 = arith.truncf %2 : f32 to bf16
    %c1_i32 = arith.constant 1 : i32
    %4 = arith.cmpi slt, %arg1, %c1_i32 : i32
    %5 = arith.extui %4 : i1 to i32
    %6 = arith.sitofp %5 : i32 to f32
    %7 = arith.truncf %6 : f32 to bf16
    %c0 = arith.constant 0 : index
    %c0_0 = arith.constant 0 : index
    %c0_1 = arith.constant 0 : index
    %c0_2 = arith.constant 0 : index
    %8 = vector.load %arg3[%c0, %c0_0, %c0_1, %c0_2] : memref<1x1x16x4xbf16, #tpu.memory_space<vmem>>, vector<1x1x16x4xbf16>
    %9 = vector.shape_cast %8 : vector<1x1x16x4xbf16> to vector<1x16x4xbf16>
    %10 = vector.broadcast %3 : bf16 to vector<1x16x4xbf16>
    %11 = arith.mulf %9, %10 : vector<1x16x4xbf16>
    %c0_3 = arith.constant 0 : index
    %c0_4 = arith.constant 0 : index
    %c0_5 = arith.constant 0 : index
    %c0_6 = arith.constant 0 : index
    %12 = vector.load %arg2[%c0_3, %c0_4, %c0_5, %c0_6] : memref<1x8x16x4xbf16, #tpu.memory_space<vmem>>, vector<1x8x16x4xbf16>
    %13 = vector.shape_cast %12 : vector<1x8x16x4xbf16> to vector<8x16x4xbf16>
    %c0_7 = arith.constant 0 : index
    %c0_8 = arith.constant 0 : index
    %c0_9 = arith.constant 0 : index
    %c0_10 = arith.constant 0 : index
    %14 = vector.load %arg4[%c0_7, %c0_8, %c0_9, %c0_10] : memref<1x1x16x4xbf16, #tpu.memory_space<vmem>>, vector<1x1x16x4xbf16>
    %15 = vector.shape_cast %14 : vector<1x1x16x4xbf16> to vector<1x16x4xbf16>
    %16 = vector.broadcast %7 : bf16 to vector<1x16x4xbf16>
    %17 = arith.mulf %15, %16 : vector<1x16x4xbf16>
    %18 = tpu.concatenate %11, %13, %17 in 0 : vector<1x16x4xbf16>, vector<8x16x4xbf16>, vector<1x16x4xbf16> -> vector<10x16x4xbf16>
    %c0_11 = arith.constant 0 : index
    %c0_12 = arith.constant 0 : index
    %19 = vector.load %arg5[%c0_11, %c0_12] : memref<36x8xbf16, #tpu.memory_space<vmem>>, vector<36x8xbf16>
    %cst = arith.constant 0.000000e+00 : bf16
    %20 = vector.broadcast %cst : bf16 to vector<8x1x4xbf16>
    %21 = vector.extract_strided_slice %18 {offsets = [0, 0, 0], sizes = [8, 16, 4], strides = [1, 1, 1]} : vector<10x16x4xbf16> to vector<8x16x4xbf16>
    %22 = vector.extract_strided_slice %21 {offsets = [0, 0, 0], sizes = [8, 15, 4], strides = [1, 1, 1]} : vector<8x16x4xbf16> to vector<8x15x4xbf16>
    %23 = tpu.concatenate %20, %22 in 1 : vector<8x1x4xbf16>, vector<8x15x4xbf16> -> vector<8x16x4xbf16>
    %24 = vector.extract_strided_slice %21 {offsets = [0, 1, 0], sizes = [8, 15, 4], strides = [1, 1, 1]} : vector<8x16x4xbf16> to vector<8x15x4xbf16>
    %25 = tpu.concatenate %24, %20 in 1 : vector<8x15x4xbf16>, vector<8x1x4xbf16> -> vector<8x16x4xbf16>
    %26 = vector.extract_strided_slice %18 {offsets = [1, 0, 0], sizes = [8, 16, 4], strides = [1, 1, 1]} : vector<10x16x4xbf16> to vector<8x16x4xbf16>
    %27 = vector.extract_strided_slice %26 {offsets = [0, 0, 0], sizes = [8, 15, 4], strides = [1, 1, 1]} : vector<8x16x4xbf16> to vector<8x15x4xbf16>
    %28 = tpu.concatenate %20, %27 in 1 : vector<8x1x4xbf16>, vector<8x15x4xbf16> -> vector<8x16x4xbf16>
    %29 = vector.extract_strided_slice %26 {offsets = [0, 1, 0], sizes = [8, 15, 4], strides = [1, 1, 1]} : vector<8x16x4xbf16> to vector<8x15x4xbf16>
    %30 = tpu.concatenate %29, %20 in 1 : vector<8x15x4xbf16>, vector<8x1x4xbf16> -> vector<8x16x4xbf16>
    %31 = vector.extract_strided_slice %18 {offsets = [2, 0, 0], sizes = [8, 16, 4], strides = [1, 1, 1]} : vector<10x16x4xbf16> to vector<8x16x4xbf16>
    %32 = vector.extract_strided_slice %31 {offsets = [0, 0, 0], sizes = [8, 15, 4], strides = [1, 1, 1]} : vector<8x16x4xbf16> to vector<8x15x4xbf16>
    %33 = tpu.concatenate %20, %32 in 1 : vector<8x1x4xbf16>, vector<8x15x4xbf16> -> vector<8x16x4xbf16>
    %34 = vector.extract_strided_slice %31 {offsets = [0, 1, 0], sizes = [8, 15, 4], strides = [1, 1, 1]} : vector<8x16x4xbf16> to vector<8x15x4xbf16>
    %35 = tpu.concatenate %34, %20 in 1 : vector<8x15x4xbf16>, vector<8x1x4xbf16> -> vector<8x16x4xbf16>
    %36 = tpu.concatenate %23, %21, %25, %28, %26, %30, %33, %31, %35 in 2 : vector<8x16x4xbf16>, vector<8x16x4xbf16>, vector<8x16x4xbf16>, vector<8x16x4xbf16>, vector<8x16x4xbf16>, vector<8x16x4xbf16>, vector<8x16x4xbf16>, vector<8x16x4xbf16>, vector<8x16x4xbf16> -> vector<8x16x36xbf16>
    %37 = vector.shape_cast %36 : vector<8x16x36xbf16> to vector<128x36xbf16>
    %cst_13 = arith.constant dense<0.000000e+00> : vector<128x8xf32>
    %38 = tpu.matmul %37, %19, %cst_13 {dimension_numbers = #tpu.dot_dimension_numbers<[1], [0], [0], [1], [0, 0, 1, 1], [], []>} : vector<128x36xbf16>, vector<36x8xbf16>, vector<128x8xf32> -> vector<128x8xf32>
    %cst_14 = arith.constant dense<0.000000e+00> : vector<8xf32>
    %39 = vector.multi_reduction <add>, %38, %cst_14 [0] : vector<128x8xf32> to vector<8xf32>
    %40 = vector.shape_cast %39 : vector<8xf32> to vector<1x8xf32>
    %cst_15 = arith.constant 1.280000e+02 : f32
    %41 = vector.broadcast %cst_15 : f32 to vector<1x8xf32>
    %42 = arith.divf %40, %41 : vector<1x8xf32>
    %43 = vector.broadcast %42 : vector<1x8xf32> to vector<128x8xf32>
    %44 = arith.subf %38, %43 : vector<128x8xf32>
    %45 = arith.mulf %44, %44 : vector<128x8xf32>
    %cst_16 = arith.constant dense<0.000000e+00> : vector<8xf32>
    %46 = vector.multi_reduction <add>, %45, %cst_16 [0] : vector<128x8xf32> to vector<8xf32>
    %47 = vector.shape_cast %46 : vector<8xf32> to vector<1x8xf32>
    %48 = tpu.concatenate %40, %47 in 0 : vector<1x8xf32>, vector<1x8xf32> -> vector<2x8xf32>
    %c0_17 = arith.constant 0 : index
    %c0_18 = arith.constant 0 : index
    %c0_19 = arith.constant 0 : index
    %c0_20 = arith.constant 0 : index
    %49 = vector.load %arg7[%c0_17, %c0_18, %c0_19, %c0_20] : memref<1x1x2x8xf32, #tpu.memory_space<vmem>>, vector<1x1x2x8xf32>
    %50 = vector.shape_cast %49 : vector<1x1x2x8xf32> to vector<2x8xf32>
    %51 = vector.shape_cast %48 : vector<2x8xf32> to vector<1x1x2x8xf32>
    tpu.vector_store %arg7[%c0_17, %c0_18, %c0_19, %c0_20], %51 {strides = array<i32>} : memref<1x1x2x8xf32, #tpu.memory_space<vmem>>, vector<1x1x2x8xf32>,
    %52 = vector.shape_cast %38 : vector<128x8xf32> to vector<8x16x8xf32>
    %53 = arith.truncf %52 : vector<8x16x8xf32> to vector<8x16x8xbf16>
    %c0_21 = arith.constant 0 : index
    %c0_22 = arith.constant 0 : index
    %c0_23 = arith.constant 0 : index
    %c0_24 = arith.constant 0 : index
    %54 = vector.load %arg6[%c0_21, %c0_22, %c0_23, %c0_24] : memref<1x8x16x8xbf16, #tpu.memory_space<vmem>>, vector<1x8x16x8xbf16>
    %55 = vector.shape_cast %54 : vector<1x8x16x8xbf16> to vector<8x16x8xbf16>
    %56 = vector.shape_cast %53 : vector<8x16x8xbf16> to vector<1x8x16x8xbf16>
    tpu.vector_store %arg6[%c0_21, %c0_22, %c0_23, %c0_24], %56 {strides = array<i32>} : memref<1x8x16x8xbf16, #tpu.memory_space<vmem>>, vector<1x8x16x8xbf16>,
    return
  }
  func.func @transform_0(%arg0: i32, %arg1: i32) -> (i32, i32, i32, i32) {
    %c0_i32 = arith.constant 0 : i32
    %c0_i32_0 = arith.constant 0 : i32
    %c0_i32_1 = arith.constant 0 : i32
    return %arg0, %arg1, %c0_i32, %c0_i32_0 : i32, i32, i32, i32
  }
  func.func @transform_1(%arg0: i32, %arg1: i32) -> (i32, i32, i32, i32) {
    %c8_i32 = arith.constant 8 : i32
    %0 = arith.muli %arg1, %c8_i32 : i32
    %c1_i32 = arith.constant 1 : i32
    %1 = arith.subi %0, %c1_i32 : i32
    %c0_i32 = arith.constant 0 : i32
    %2 = arith.maxsi %1, %c0_i32 : i32
    %c0_i32_0 = arith.constant 0 : i32
    %c0_i32_1 = arith.constant 0 : i32
    %c0_i32_2 = arith.constant 0 : i32
    return %arg0, %2, %c0_i32_0, %c0_i32_1 : i32, i32, i32, i32
  }
  func.func @transform_2(%arg0: i32, %arg1: i32) -> (i32, i32, i32, i32) {
    %c1_i32 = arith.constant 1 : i32
    %0 = arith.addi %arg1, %c1_i32 : i32
    %c8_i32 = arith.constant 8 : i32
    %1 = arith.muli %0, %c8_i32 : i32
    %c15_i32 = arith.constant 15 : i32
    %2 = arith.minsi %1, %c15_i32 : i32
    %c0_i32 = arith.constant 0 : i32
    %c0_i32_0 = arith.constant 0 : i32
    %c0_i32_1 = arith.constant 0 : i32
    return %arg0, %2, %c0_i32, %c0_i32_0 : i32, i32, i32, i32
  }
  func.func @transform_3(%arg0: i32, %arg1: i32) -> (i32, i32) {
    %c0_i32 = arith.constant 0 : i32
    %c0_i32_0 = arith.constant 0 : i32
    %c0_i32_1 = arith.constant 0 : i32
    return %c0_i32, %c0_i32_0 : i32, i32
  }
  func.func @transform_4(%arg0: i32, %arg1: i32) -> (i32, i32, i32, i32) {
    %c0_i32 = arith.constant 0 : i32
    %c0_i32_0 = arith.constant 0 : i32
    %c0_i32_1 = arith.constant 0 : i32
    return %arg0, %arg1, %c0_i32, %c0_i32_0 : i32, i32, i32, i32
  }
  func.func @transform_5(%arg0: i32, %arg1: i32) -> (i32, i32, i32, i32) {
    %c0_i32 = arith.constant 0 : i32
    %c0_i32_0 = arith.constant 0 : i32
    %c0_i32_1 = arith.constant 0 : i32
    return %arg0, %arg1, %c0_i32, %c0_i32_0 : i32, i32, i32, i32
  }
}

</mosaic_0001>

<llo_original>
// kernel: double_conv.5
$region0: #{double_conv.5}
  #allocation0 [shape = 'u32[]', space=smem, size = 0x4, offset = 0x4, fixed_abs, tag = 'smem constant byte address 0x4 - core index']
  #allocation1 [shape = 'u32[144,128]{1,0:T(1,128)}', space=vmem, size = 0x12000, scoped, tag = 'internal scratch']
  %s0 = inlined_call_operand.vmem [shape: bf16[2,16,16,8], index: 0, kind: input, shape index: {}]
  %s1 = inlined_call_operand.vmem [shape: f32[2,8], index: 1, kind: input, shape index: {}]
  %s2 = inlined_call_operand.vmem [shape: f32[2,16,16,8], index: 2, kind: output, shape index: {}]
  %s3 = sld [smem:[#allocation0]]
  $region41: #{double_conv.5} parent=0
    _
  %s5 = ssub.s32 1, %s3
  %s6 = scalar_select 0, %s5, %s3
  loop: start=0, step=1, limit=6
  $region2: #{double_conv.5} parent=0 // loop_pre_header
    _
  $region3: #{double_conv.5} parent=0 // loop_header
    %s8 = sphi 0, %s12
    %p9 = scmp.ge.s32.totalorder %s8, 6
    %s15 = sphi 0, %s27
    %s16 = sphi 0, %s23
    %s17 = sphi 0, %s15
    %s18 = sphi 0, %s16
    %s19 = sphi 0, %s17
    %s20 = sphi 0, %s18
    %s32 = sphi 0, %s34
    %s35 = sphi 0, %s32
    %s36 = sphi 0, %s35
    %s52 = sphi 0, %s36
    %s56 = sphi 0, %s56
    %s58 = sphi 0, %s56
    %s59 = sphi 0, %s58
    %s73 = sphi 0, %s59
    %s81 = sphi 0, %s83
    %s84 = sphi 0, %s81
    %s85 = sphi 0, %s84
    %s101 = sphi 0, %s85
  $region4: #{double_conv.5} parent=0 // loop_header_branch
    %11 = sbr.rel (%p9) target = $region8
  $region5: #{double_conv.5} parent=0 // loop_body
    %s13 = ssub.s32 %s8, 1
    %s14 = ssub.s32 %s8, 2
    %s21 = sadd.s32 1, %s16
    %p22 = scmp.ge.s32.totalorder %s21, 2
    %s23 = scalar_select %p22, 0, %s21
    %s24 = sadd.s32 1, %s15
    %s25 = scalar_select %p22, %s24, %s15
    %p26 = scmp.ge.s32.totalorder %s25, 2
    %s27 = scalar_select %p26, 0, %s25
    %s28 = ssub.s32 %s15, %s27
    %s29 = ssub.s32 %s16, %s23
    %s30 = sor.u32 %s28, %s29
    %p31 = scmp.eq.s32.totalorder %s30, 0
    %s33 = sadd.s32 %s32, 1
    %s34 = scalar_select %p31, %s32, %s33
    %p37 = pneg %p31
    %p38 = scmp.eq.s32.totalorder %s8, 3
    %p39 = por %p37, %p38
    %p40 = scmp.ne.s32.totalorder %s32, %s35
    %p41 = scmp.eq.s32.totalorder %s8, 0
    %p42 = por %p40, %p41
    %p43 = scmp.ne.s32.totalorder %s32, %s35
    %p44 = scmp.eq.s32.totalorder %s13, 3
    %p45 = por %p43, %p44
    %p46 = scmp.ne.s32.totalorder %s35, %s36
    %p47 = scmp.eq.s32.totalorder %s13, 0
    %p48 = por %p46, %p47
    %p49 = scmp.ne.s32.totalorder %s35, %s36
    %p50 = scmp.eq.s32.totalorder %s14, 3
    %p51 = por %p49, %p50
    %p53 = scmp.ne.s32.totalorder %s36, %s52
    %p54 = scmp.eq.s32.totalorder %s14, 0
    %p55 = por %p53, %p54
    %s57 = sadd.s32 %s56, 1
    %p60 = scmp.eq.s32.totalorder %s8, 3
    %p61 = scmp.ne.s32.totalorder %s56, %s58
    %p62 = scmp.eq.s32.totalorder %s8, 0
    %p63 = por %p61, %p62
    %p64 = scmp.ne.s32.totalorder %s56, %s58
    %p65 = scmp.eq.s32.totalorder %s13, 3
    %p66 = por %p64, %p65
    %p67 = scmp.ne.s32.totalorder %s58, %s59
    %p68 = scmp.eq.s32.totalorder %s13, 0
    %p69 = por %p67, %p68
    %p70 = scmp.ne.s32.totalorder %s58, %s59
    %p71 = scmp.eq.s32.totalorder %s14, 3
    %p72 = por %p70, %p71
    %p74 = scmp.ne.s32.totalorder %s59, %s73
    %p75 = scmp.eq.s32.totalorder %s14, 0
    %p76 = por %p74, %p75
    %s77 = ssub.s32 %s15, %s27
    %s78 = ssub.s32 %s16, %s23
    %s79 = sor.u32 %s77, %s78
    %p80 = scmp.eq.s32.totalorder %s79, 0
    %s82 = sadd.s32 %s81, 1
    %s83 = scalar_select %p80, %s81, %s82
    %p86 = pneg %p80
    %p87 = scmp.eq.s32.totalorder %s8, 3
    %p88 = por %p86, %p87
    %p89 = scmp.ne.s32.totalorder %s81, %s84
    %p90 = scmp.eq.s32.totalorder %s8, 0
    %p91 = por %p89, %p90
    %p92 = scmp.ne.s32.totalorder %s81, %s84
    %p93 = scmp.eq.s32.totalorder %s13, 3
    %p94 = por %p92, %p93
    %p95 = scmp.ne.s32.totalorder %s84, %s85
    %p96 = scmp.eq.s32.totalorder %s13, 0
    %p97 = por %p95, %p96
    %p98 = scmp.ne.s32.totalorder %s84, %s85
    %p99 = scmp.eq.s32.totalorder %s14, 3
    %p100 = por %p98, %p99
    %p102 = scmp.ne.s32.totalorder %s85, %s101
    %p103 = scmp.eq.s32.totalorder %s14, 0
    %p104 = por %p102, %p103
    %p105 = scmp.le.s32.totalorder 1, %s8
    %p106 = scmp.lt.s32.totalorder %s8, 5
    %p107 = pnand %p105, %p106
    %p108 = pneg %p107
    // Predicated region
    $region9: #{double_conv.5} parent=5 // pred_check
      _
    $region10: #{double_conv.5} parent=5 // pred_check_branch
      %110 = sbr.rel (%p107) target = $region12
    $region11: #{double_conv.5} parent=5 // pred_region
      %s111 = ssub.s32 %s8, 1
      // Predicated region
      $region13: #{double_conv.5} parent=11 // pred_check
        %p112 = pneg %p69
      $region14: #{double_conv.5} parent=11 // pred_check_branch
        %114 = sbr.rel (%p112) target = $region16
      $region15: #{double_conv.5} parent=11 // pred_region
        _
      $region16: #{double_conv.5} parent=11 // pred_fallthru
        _
    $region12: #{double_conv.5} parent=5 // pred_fallthru
      _
    %p115 = scmp.lt.s32.totalorder %s8, 4
    // Predicated region
    $region17: #{double_conv.5} parent=5 // pred_check
      %p116 = pneg %p115
    $region18: #{double_conv.5} parent=5 // pred_check_branch
      %118 = sbr.rel (%p116) target = $region20
    $region19: #{double_conv.5} parent=5 // pred_region
      // Predicated region
      $region21: #{double_conv.5} parent=19 // pred_check
        %p119 = pneg %p42
      $region22: #{double_conv.5} parent=19 // pred_check_branch
        %121 = sbr.rel (%p119) target = $region24
      $region23: #{double_conv.5} parent=19 // pred_region
        %s122 = smul.u32 8, %s16
        %p123 = scmp.lt.s32.totalorder %s15, 1
        %s124 = scalar_select %p123, %s15, 1
        %p125 = scmp.lt.s32.totalorder %s122, 15
        %s126 = scalar_select %p125, %s122, 15
        %s127 = smul.addr %s126, 2
        %s128 = smul.addr %s124, 32
        %s129 = sadd.s32 %s127, %s128
        %s130 = smul.addr %s129, 4
        %s131 = scalar_lea.vmem %s0, %s130
        %s132 = smul.u32 8, %s16
      $region24: #{double_conv.5} parent=19 // pred_fallthru
        _
    $region20: #{double_conv.5} parent=5 // pred_fallthru
      _
    %p133 = scmp.le.s32.totalorder 1, %s8
    %p134 = scmp.lt.s32.totalorder %s8, 5
    %p135 = pnand %p133, %p134
    %p136 = pneg %p135
    // Predicated region
    $region25: #{double_conv.5} parent=5 // pred_check
      _
    $region26: #{double_conv.5} parent=5 // pred_check_branch
      %138 = sbr.rel (%p135) target = $region28
    $region27: #{double_conv.5} parent=5 // pred_region
      %s139 = ssub.s32 %s8, 1
      %s140 = smul.u32 8, %s18
      %p141 = scmp.lt.s32.totalorder %s17, 1
      %s142 = scalar_select %p141, %s17, 1
      %p143 = scmp.lt.s32.totalorder %s140, 15
      %s144 = scalar_select %p143, %s140, 15
      %s145 = smul.addr %s144, 2
      %s146 = smul.addr %s142, 32
      %s147 = sadd.s32 %s145, %s146
      %s148 = smul.addr %s147, 4
      %s149 = scalar_lea.vmem %s0, %s148
      %p150 = pneg %p48
      %p151 = pneg %p45
      %p152 = pneg %p69
      %p153 = pneg %p66
      %p154 = pneg %p97
      %p155 = pneg %p94
      %s156 = smul.u32 8, %s18
      %p157 = scmp.lt.s32.totalorder %s17, 1
      %s158 = scalar_select %p157, %s17, 1
      %p159 = scmp.lt.s32.totalorder %s156, 15
      %s160 = scalar_select %p159, %s156, 15
      %s161 = smul.addr %s160, 2
      %s162 = smul.addr %s158, 32
      %s163 = sadd.s32 %s161, %s162
      %s164 = smul.addr %s163, 8
      %s165 = scalar_lea.vmem %s2, %s164
      %s166 = smul.u32 8, %s18
      %p167 = scmp.lt.s32.totalorder %s17, 1
      %s168 = scalar_select %p167, %s17, 1
      %p169 = scmp.lt.s32.totalorder %s166, 15
      %s170 = scalar_select %p169, %s166, 15
      %s171 = smul.addr %s170, 2
      %s172 = smul.addr %s168, 32
      %s173 = sadd.s32 %s171, %s172
      %s174 = smul.addr %s173, 4
      %s175 = scalar_lea.vmem %s0, %s174
      %s176 = smul.u32 8, %s18
      %s177 = smul.u32 8, %s18
      %p178 = scmp.lt.s32.totalorder %s17, 1
      %s179 = scalar_select %p178, %s17, 1
      %p180 = scmp.lt.s32.totalorder %s177, 15
      %s181 = scalar_select %p180, %s177, 15
      %s182 = smul.addr %s181, 2
      %s183 = smul.addr %s179, 32
      %s184 = sadd.s32 %s182, %s183
      %s185 = smul.addr %s184, 8
      %s186 = scalar_lea.vmem %s2, %s185
      %s187 = smul.u32 8, %s18
      %v188 = vld [vmem:[%s1] sm:$0x1]
      %v189 = vld [vmem:[%s1 + $0x1] sm:$0x1]
      %v190 = vld [vmem:[%s175] sm:$0xf]
      %v191 = vld [vmem:[%s175 + $0x4] sm:$0xf]
      %v192 = vld [vmem:[%s175 + $0x8] sm:$0xf]
      %v193 = vld [vmem:[%s175 + $0xc] sm:$0xf]
      %v194 = vld [vmem:[%s175 + $0x10] sm:$0xf]
      %v195 = vld [vmem:[%s175 + $0x14] sm:$0xf]
      %v196 = vld [vmem:[%s175 + $0x18] sm:$0xf]
      %v197 = vld [vmem:[%s175 + $0x1c] sm:$0xf]
      %v198 = vld [vmem:[%s175 + $0x20] sm:$0xf]
      %v199 = vld [vmem:[%s175 + $0x24] sm:$0xf]
      %v200 = vld [vmem:[%s175 + $0x28] sm:$0xf]
      %v201 = vld [vmem:[%s175 + $0x2c] sm:$0xf]
      %v202 = vld [vmem:[%s175 + $0x30] sm:$0xf]
      %v203 = vld [vmem:[%s175 + $0x34] sm:$0xf]
      %v204 = vld [vmem:[%s175 + $0x38] sm:$0xf]
      %v205 = vld [vmem:[%s175 + $0x3c] sm:$0xf]
      %v206 = vunpack.c.l.bf16 %v190
      %v207 = vunpack.c.l.bf16 %v191
      %v208 = vunpack.c.l.bf16 %v192
      %v209 = vunpack.c.l.bf16 %v193
      %v210 = vunpack.c.l.bf16 %v194
      %v211 = vunpack.c.l.bf16 %v195
      %v212 = vunpack.c.l.bf16 %v196
      %v213 = vunpack.c.l.bf16 %v197
      %v214 = vunpack.c.l.bf16 %v198
      %v215 = vunpack.c.l.bf16 %v199
      %v216 = vunpack.c.l.bf16 %v200
      %v217 = vunpack.c.l.bf16 %v201
      %v218 = vunpack.c.l.bf16 %v202
      %v219 = vunpack.c.l.bf16 %v203
      %v220 = vunpack.c.l.bf16 %v204
      %v221 = vunpack.c.l.bf16 %v205
      %v222 = vlaneseq
      %v223 = vshrl.u32 %v222, 7
      %v224 = vsub.s32 0, %v223
      %v225 = vrot.slane %v188, %v224
      %v226 = vmul.f32 %v206, %v225
      %v227 = vmul.f32 %v207, %v225
      %v228 = vmul.f32 %v208, %v225
      %v229 = vmul.f32 %v209, %v225
      %v230 = vmul.f32 %v210, %v225
      %v231 = vmul.f32 %v211, %v225
      %v232 = vmul.f32 %v212, %v225
      %v233 = vmul.f32 %v213, %v225
      %v234 = vmul.f32 %v214, %v225
      %v235 = vmul.f32 %v215, %v225
      %v236 = vmul.f32 %v216, %v225
      %v237 = vmul.f32 %v217, %v225
      %v238 = vmul.f32 %v218, %v225
      %v239 = vmul.f32 %v219, %v225
      %v240 = vmul.f32 %v220, %v225
      %v241 = vmul.f32 %v221, %v225
      %v242 = vlaneseq
      %v243 = vshrl.u32 %v242, 7
      %v244 = vsub.s32 0, %v243
      %v245 = vrot.slane %v189, %v244
      %v246 = vadd.f32 %v226, %v245
      %v247 = vadd.f32 %v227, %v245
      %v248 = vadd.f32 %v228, %v245
      %v249 = vadd.f32 %v229, %v245
      %v250 = vadd.f32 %v230, %v245
      %v251 = vadd.f32 %v231, %v245
      %v252 = vadd.f32 %v232, %v245
      %v253 = vadd.f32 %v233, %v245
      %v254 = vadd.f32 %v234, %v245
      %v255 = vadd.f32 %v235, %v245
      %v256 = vadd.f32 %v236, %v245
      %v257 = vadd.f32 %v237, %v245
      %v258 = vadd.f32 %v238, %v245
      %v259 = vadd.f32 %v239, %v245
      %v260 = vadd.f32 %v240, %v245
      %v261 = vadd.f32 %v241, %v245
      %v262 = vmax.f32 %v246, 0.0
      %v263 = vmax.f32 %v247, 0.0
      %v264 = vmax.f32 %v248, 0.0
      %v265 = vmax.f32 %v249, 0.0
      %v266 = vmax.f32 %v250, 0.0
      %v267 = vmax.f32 %v251, 0.0
      %v268 = vmax.f32 %v252, 0.0
      %v269 = vmax.f32 %v253, 0.0
      %v270 = vmax.f32 %v254, 0.0
      %v271 = vmax.f32 %v255, 0.0
      %v272 = vmax.f32 %v256, 0.0
      %v273 = vmax.f32 %v257, 0.0
      %v274 = vmax.f32 %v258, 0.0
      %v275 = vmax.f32 %v259, 0.0
      %v276 = vmax.f32 %v260, 0.0
      %v277 = vmax.f32 %v261, 0.0
      %vm278 = vcmask 64512
      %279 = vst.msk [vmem:[%s186] sm:$0xff] %vm278, %v262
      %280 = vst.msk [vmem:[%s186 + $0x8] sm:$0xff] %vm278, %v263
      %281 = vst.msk [vmem:[%s186 + $0x10] sm:$0xff] %vm278, %v264
      %282 = vst.msk [vmem:[%s186 + $0x18] sm:$0xff] %vm278, %v265
      %283 = vst.msk [vmem:[%s186 + $0x20] sm:$0xff] %vm278, %v266
      %284 = vst.msk [vmem:[%s186 + $0x28] sm:$0xff] %vm278, %v267
      %285 = vst.msk [vmem:[%s186 + $0x30] sm:$0xff] %vm278, %v268
      %286 = vst.msk [vmem:[%s186 + $0x38] sm:$0xff] %vm278, %v269
      %287 = vst.msk [vmem:[%s186 + $0x40] sm:$0xff] %vm278, %v270
      %288 = vst.msk [vmem:[%s186 + $0x48] sm:$0xff] %vm278, %v271
      %289 = vst.msk [vmem:[%s186 + $0x50] sm:$0xff] %vm278, %v272
      %290 = vst.msk [vmem:[%s186 + $0x58] sm:$0xff] %vm278, %v273
      %291 = vst.msk [vmem:[%s186 + $0x60] sm:$0xff] %vm278, %v274
      %292 = vst.msk [vmem:[%s186 + $0x68] sm:$0xff] %vm278, %v275
      %293 = vst.msk [vmem:[%s186 + $0x70] sm:$0xff] %vm278, %v276
      %294 = vst.msk [vmem:[%s186 + $0x78] sm:$0xff] %vm278, %v277
      %s295 = smul.u32 8, %s18
      %p296 = scmp.lt.s32.totalorder %s17, 1
      %s297 = scalar_select %p296, %s17, 1
      %p298 = scmp.lt.s32.totalorder %s295, 15
      %s299 = scalar_select %p298, %s295, 15
      %s300 = smul.addr %s299, 2
      %s301 = smul.addr %s297, 32
      %s302 = sadd.s32 %s300, %s301
      %s303 = smul.addr %s302, 8
      %s304 = scalar_lea.vmem %s2, %s303
      // Predicated region
      $region29: #{double_conv.5} parent=27 // pred_check
        %p305 = pneg %p94
      $region30: #{double_conv.5} parent=27 // pred_check_branch
        %307 = sbr.rel (%p305) target = $region32
      $region31: #{double_conv.5} parent=27 // pred_region
        %s308 = smul.u32 8, %s18
      $region32: #{double_conv.5} parent=27 // pred_fallthru
        _
    $region28: #{double_conv.5} parent=5 // pred_fallthru
      _
    %p309 = scmp.le.s32.totalorder 2, %s8
    // Predicated region
    $region33: #{double_conv.5} parent=5 // pred_check
      %p310 = pneg %p309
    $region34: #{double_conv.5} parent=5 // pred_check_branch
      %312 = sbr.rel (%p310) target = $region36
    $region35: #{double_conv.5} parent=5 // pred_region
      %s313 = ssub.s32 %s8, 2
      // Predicated region
      $region37: #{double_conv.5} parent=35 // pred_check
        %p314 = pneg %p100
      $region38: #{double_conv.5} parent=35 // pred_check_branch
        %316 = sbr.rel (%p314) target = $region40
      $region39: #{double_conv.5} parent=35 // pred_region
        %s317 = smul.u32 8, %s20
        %p318 = scmp.lt.s32.totalorder %s19, 1
        %s319 = scalar_select %p318, %s19, 1
        %p320 = scmp.lt.s32.totalorder %s317, 15
        %s321 = scalar_select %p320, %s317, 15
        %s322 = smul.addr %s321, 2
        %s323 = smul.addr %s319, 32
        %s324 = sadd.s32 %s322, %s323
        %s325 = smul.addr %s324, 8
        %s326 = scalar_lea.vmem %s2, %s325
      $region40: #{double_conv.5} parent=35 // pred_fallthru
        _
    $region36: #{double_conv.5} parent=5 // pred_fallthru
      _
  $region6: #{double_conv.5} parent=0 // loop_footer
    %s12 = sadd.s32 1, %s8
  $region7: #{double_conv.5} parent=0 // loop_footer_branch
    %7 = sbr.rel target = $region3
  $region8: #{double_conv.5} parent=0 // loop_exit
    _

// kernel: double_conv.4
$region0: #{double_conv.4}
  #allocation0 [shape = 'u32[]', space=smem, size = 0x4, offset = 0x4, fixed_abs, tag = 'smem constant byte address 0x4 - core index']
  #allocation1 [shape = 'u32[144,128]{1,0:T(1,128)}', space=vmem, size = 0x12000, scoped, tag = 'internal scratch']
  %s0 = inlined_call_operand.vmem [shape: bf16[2,16,16,8], index: 0, kind: input, shape index: {}, may-alias: {0,1,2}]
  %s1 = inlined_call_operand.vmem [shape: bf16[2,16,16,8], index: 1, kind: input, shape index: {}, may-alias: {0,1,2}]
  %s2 = inlined_call_operand.vmem [shape: bf16[2,16,16,8], index: 2, kind: input, shape index: {}, may-alias: {0,1,2}]
  %s3 = inlined_call_operand.vmem [shape: bf16[72,8], index: 3, kind: input, shape index: {}]
  %s4 = inlined_call_operand.vmem [shape: f32[2,8], index: 4, kind: input, shape index: {}]
  %s5 = inlined_call_operand.vmem [shape: bf16[2,16,16,8], index: 5, kind: output, shape index: {0}]
  %s6 = inlined_call_operand.vmem [shape: f32[2,2,2,8], index: 6, kind: output, shape index: {1}]
  %7 = xla_tuple %s5, %s6
  %s8 = sld [smem:[#allocation0]]
  $region61: #{double_conv.4} parent=0
    _
  %s10 = ssub.s32 1, %s8
  %s11 = scalar_select 0, %s10, %s8
  loop: start=0, step=1, limit=6
  $region2: #{double_conv.4} parent=0 // loop_pre_header
    _
  $region3: #{double_conv.4} parent=0 // loop_header
    %s13 = sphi 0, %s17
    %p14 = scmp.ge.s32.totalorder %s13, 6
    %s20 = sphi 0, %s32
    %s21 = sphi 0, %s28
    %s22 = sphi 0, %s20
    %s23 = sphi 0, %s21
    %s24 = sphi 0, %s22
    %s25 = sphi 0, %s23
    %s37 = sphi 0, %s39
    %s40 = sphi 0, %s37
    %s41 = sphi 0, %s40
    %s57 = sphi 0, %s41
    %s73 = sphi 0, %s75
    %s76 = sphi 0, %s73
    %s77 = sphi 0, %s76
    %s93 = sphi 0, %s77
    %s109 = sphi 0, %s111
    %s112 = sphi 0, %s109
    %s113 = sphi 0, %s112
    %s129 = sphi 0, %s113
    %s133 = sphi 0, %s133
    %s135 = sphi 0, %s133
    %s136 = sphi 0, %s135
    %s150 = sphi 0, %s136
    %s154 = sphi 0, %s154
    %s156 = sphi 0, %s154
    %s157 = sphi 0, %s156
    %s171 = sphi 0, %s157
    %s179 = sphi 0, %s181
    %s182 = sphi 0, %s179
    %s183 = sphi 0, %s182
    %s199 = sphi 0, %s183
    %s207 = sphi 0, %s209
    %s210 = sphi 0, %s207
    %s211 = sphi 0, %s210
    %s227 = sphi 0, %s211
  $region4: #{double_conv.4} parent=0 // loop_header_branch
    %16 = sbr.rel (%p14) target = $region8
  $region5: #{double_conv.4} parent=0 // loop_body
    %s18 = ssub.s32 %s13, 1
    %s19 = ssub.s32 %s13, 2
    %s26 = sadd.s32 1, %s21
    %p27 = scmp.ge.s32.totalorder %s26, 2
    %s28 = scalar_select %p27, 0, %s26
    %s29 = sadd.s32 1, %s20
    %s30 = scalar_select %p27, %s29, %s20
    %p31 = scmp.ge.s32.totalorder %s30, 2
    %s32 = scalar_select %p31, 0, %s30
    %s33 = ssub.s32 %s20, %s32
    %s34 = ssub.s32 %s21, %s28
    %s35 = sor.u32 %s33, %s34
    %p36 = scmp.eq.s32.totalorder %s35, 0
    %s38 = sadd.s32 %s37, 1
    %s39 = scalar_select %p36, %s37, %s38
    %p42 = pneg %p36
    %p43 = scmp.eq.s32.totalorder %s13, 3
    %p44 = por %p42, %p43
    %p45 = scmp.ne.s32.totalorder %s37, %s40
    %p46 = scmp.eq.s32.totalorder %s13, 0
    %p47 = por %p45, %p46
    %p48 = scmp.ne.s32.totalorder %s37, %s40
    %p49 = scmp.eq.s32.totalorder %s18, 3
    %p50 = por %p48, %p49
    %p51 = scmp.ne.s32.totalorder %s40, %s41
    %p52 = scmp.eq.s32.totalorder %s18, 0
    %p53 = por %p51, %p52
    %p54 = scmp.ne.s32.totalorder %s40, %s41
    %p55 = scmp.eq.s32.totalorder %s19, 3
    %p56 = por %p54, %p55
    %p58 = scmp.ne.s32.totalorder %s41, %s57
    %p59 = scmp.eq.s32.totalorder %s19, 0
    %p60 = por %p58, %p59
    %s61 = smul.u32 %s21, 8
    %s62 = ssub.s32 %s61, 1
    %p63 = scmp.gt.s32.totalorder %s62, 0
    %s64 = scalar_select %p63, %s62, 0
    %s65 = smul.u32 %s28, 8
    %s66 = ssub.s32 %s65, 1
    %p67 = scmp.gt.s32.totalorder %s66, 0
    %s68 = scalar_select %p67, %s66, 0
    %s69 = ssub.s32 %s20, %s32
    %s70 = ssub.s32 %s64, %s68
    %s71 = sor.u32 %s69, %s70
    %p72 = scmp.eq.s32.totalorder %s71, 0
    %s74 = sadd.s32 %s73, 1
    %s75 = scalar_select %p72, %s73, %s74
    %p78 = pneg %p72
    %p79 = scmp.eq.s32.totalorder %s13, 3
    %p80 = por %p78, %p79
    %p81 = scmp.ne.s32.totalorder %s73, %s76
    %p82 = scmp.eq.s32.totalorder %s13, 0
    %p83 = por %p81, %p82
    %p84 = scmp.ne.s32.totalorder %s73, %s76
    %p85 = scmp.eq.s32.totalorder %s18, 3
    %p86 = por %p84, %p85
    %p87 = scmp.ne.s32.totalorder %s76, %s77
    %p88 = scmp.eq.s32.totalorder %s18, 0
    %p89 = por %p87, %p88
    %p90 = scmp.ne.s32.totalorder %s76, %s77
    %p91 = scmp.eq.s32.totalorder %s19, 3
    %p92 = por %p90, %p91
    %p94 = scmp.ne.s32.totalorder %s77, %s93
    %p95 = scmp.eq.s32.totalorder %s19, 0
    %p96 = por %p94, %p95
    %s97 = sadd.s32 %s21, 1
    %s98 = smul.u32 %s97, 8
    %p99 = scmp.lt.s32.totalorder %s98, 15
    %s100 = scalar_select %p99, %s98, 15
    %s101 = sadd.s32 %s28, 1
    %s102 = smul.u32 %s101, 8
    %p103 = scmp.lt.s32.totalorder %s102, 15
    %s104 = scalar_select %p103, %s102, 15
    %s105 = ssub.s32 %s20, %s32
    %s106 = ssub.s32 %s100, %s104
    %s107 = sor.u32 %s105, %s106
    %p108 = scmp.eq.s32.totalorder %s107, 0
    %s110 = sadd.s32 %s109, 1
    %s111 = scalar_select %p108, %s109, %s110
    %p114 = pneg %p108
    %p115 = scmp.eq.s32.totalorder %s13, 3
    %p116 = por %p114, %p115
    %p117 = scmp.ne.s32.totalorder %s109, %s112
    %p118 = scmp.eq.s32.totalorder %s13, 0
    %p119 = por %p117, %p118
    %p120 = scmp.ne.s32.totalorder %s109, %s112
    %p121 = scmp.eq.s32.totalorder %s18, 3
    %p122 = por %p120, %p121
    %p123 = scmp.ne.s32.totalorder %s112, %s113
    %p124 = scmp.eq.s32.totalorder %s18, 0
    %p125 = por %p123, %p124
    %p126 = scmp.ne.s32.totalorder %s112, %s113
    %p127 = scmp.eq.s32.totalorder %s19, 3
    %p128 = por %p126, %p127
    %p130 = scmp.ne.s32.totalorder %s113, %s129
    %p131 = scmp.eq.s32.totalorder %s19, 0
    %p132 = por %p130, %p131
    %s134 = sadd.s32 %s133, 1
    %p137 = scmp.eq.s32.totalorder %s13, 3
    %p138 = scmp.ne.s32.totalorder %s133, %s135
    %p139 = scmp.eq.s32.totalorder %s13, 0
    %p140 = por %p138, %p139
    %p141 = scmp.ne.s32.totalorder %s133, %s135
    %p142 = scmp.eq.s32.totalorder %s18, 3
    %p143 = por %p141, %p142
    %p144 = scmp.ne.s32.totalorder %s135, %s136
    %p145 = scmp.eq.s32.totalorder %s18, 0
    %p146 = por %p144, %p145
    %p147 = scmp.ne.s32.totalorder %s135, %s136
    %p148 = scmp.eq.s32.totalorder %s19, 3
    %p149 = por %p147, %p148
    %p151 = scmp.ne.s32.totalorder %s136, %s150
    %p152 = scmp.eq.s32.totalorder %s19, 0
    %p153 = por %p151, %p152
    %s155 = sadd.s32 %s154, 1
    %p158 = scmp.eq.s32.totalorder %s13, 3
    %p159 = scmp.ne.s32.totalorder %s154, %s156
    %p160 = scmp.eq.s32.totalorder %s13, 0
    %p161 = por %p159, %p160
    %p162 = scmp.ne.s32.totalorder %s154, %s156
    %p163 = scmp.eq.s32.totalorder %s18, 3
    %p164 = por %p162, %p163
    %p165 = scmp.ne.s32.totalorder %s156, %s157
    %p166 = scmp.eq.s32.totalorder %s18, 0
    %p167 = por %p165, %p166
    %p168 = scmp.ne.s32.totalorder %s156, %s157
    %p169 = scmp.eq.s32.totalorder %s19, 3
    %p170 = por %p168, %p169
    %p172 = scmp.ne.s32.totalorder %s157, %s171
    %p173 = scmp.eq.s32.totalorder %s19, 0
    %p174 = por %p172, %p173
    %s175 = ssub.s32 %s20, %s32
    %s176 = ssub.s32 %s21, %s28
    %s177 = sor.u32 %s175, %s176
    %p178 = scmp.eq.s32.totalorder %s177, 0
    %s180 = sadd.s32 %s179, 1
    %s181 = scalar_select %p178, %s179, %s180
    %p184 = pneg %p178
    %p185 = scmp.eq.s32.totalorder %s13, 3
    %p186 = por %p184, %p185
    %p187 = scmp.ne.s32.totalorder %s179, %s182
    %p188 = scmp.eq.s32.totalorder %s13, 0
    %p189 = por %p187, %p188
    %p190 = scmp.ne.s32.totalorder %s179, %s182
    %p191 = scmp.eq.s32.totalorder %s18, 3
    %p192 = por %p190, %p191
    %p193 = scmp.ne.s32.totalorder %s182, %s183
    %p194 = scmp.eq.s32.totalorder %s18, 0
    %p195 = por %p193, %p194
    %p196 = scmp.ne.s32.totalorder %s182, %s183
    %p197 = scmp.eq.s32.totalorder %s19, 3
    %p198 = por %p196, %p197
    %p200 = scmp.ne.s32.totalorder %s183, %s199
    %p201 = scmp.eq.s32.totalorder %s19, 0
    %p202 = por %p200, %p201
    %s203 = ssub.s32 %s20, %s32
    %s204 = ssub.s32 %s21, %s28
    %s205 = sor.u32 %s203, %s204
    %p206 = scmp.eq.s32.totalorder %s205, 0
    %s208 = sadd.s32 %s207, 1
    %s209 = scalar_select %p206, %s207, %s208
    %p212 = pneg %p206
    %p213 = scmp.eq.s32.totalorder %s13, 3
    %p214 = por %p212, %p213
    %p215 = scmp.ne.s32.totalorder %s207, %s210
    %p216 = scmp.eq.s32.totalorder %s13, 0
    %p217 = por %p215, %p216
    %p218 = scmp.ne.s32.totalorder %s207, %s210
    %p219 = scmp.eq.s32.totalorder %s18, 3
    %p220 = por %p218, %p219
    %p221 = scmp.ne.s32.totalorder %s210, %s211
    %p222 = scmp.eq.s32.totalorder %s18, 0
    %p223 = por %p221, %p222
    %p224 = scmp.ne.s32.totalorder %s210, %s211
    %p225 = scmp.eq.s32.totalorder %s19, 3
    %p226 = por %p224, %p225
    %p228 = scmp.ne.s32.totalorder %s211, %s227
    %p229 = scmp.eq.s32.totalorder %s19, 0
    %p230 = por %p228, %p229
    %p231 = scmp.le.s32.totalorder 1, %s13
    %p232 = scmp.lt.s32.totalorder %s13, 5
    %p233 = pnand %p231, %p232
    %p234 = pneg %p233
    // Predicated region
    $region9: #{double_conv.4} parent=5 // pred_check
      _
    $region10: #{double_conv.4} parent=5 // pred_check_branch
      %236 = sbr.rel (%p233) target = $region12
    $region11: #{double_conv.4} parent=5 // pred_region
      %s237 = ssub.s32 %s13, 1
      // Predicated region
      $region13: #{double_conv.4} parent=11 // pred_check
        %p238 = pneg %p146
      $region14: #{double_conv.4} parent=11 // pred_check_branch
        %240 = sbr.rel (%p238) target = $region16
      $region15: #{double_conv.4} parent=11 // pred_region
        _
      $region16: #{double_conv.4} parent=11 // pred_fallthru
        _
      // Predicated region
      $region17: #{double_conv.4} parent=11 // pred_check
        %p241 = pneg %p167
      $region18: #{double_conv.4} parent=11 // pred_check_branch
        %243 = sbr.rel (%p241) target = $region20
      $region19: #{double_conv.4} parent=11 // pred_region
        _
      $region20: #{double_conv.4} parent=11 // pred_fallthru
        _
    $region12: #{double_conv.4} parent=5 // pred_fallthru
      _
    %p244 = scmp.lt.s32.totalorder %s13, 4
    // Predicated region
    $region21: #{double_conv.4} parent=5 // pred_check
      %p245 = pneg %p244
    $region22: #{double_conv.4} parent=5 // pred_check_branch
      %247 = sbr.rel (%p245) target = $region24
    $region23: #{double_conv.4} parent=5 // pred_region
      // Predicated region
      $region25: #{double_conv.4} parent=23 // pred_check
        %p248 = pneg %p47
      $region26: #{double_conv.4} parent=23 // pred_check_branch
        %250 = sbr.rel (%p248) target = $region28
      $region27: #{double_conv.4} parent=23 // pred_region
        %s251 = smul.u32 8, %s21
        %p252 = scmp.lt.s32.totalorder %s20, 1
        %s253 = scalar_select %p252, %s20, 1
        %p254 = scmp.lt.s32.totalorder %s251, 15
        %s255 = scalar_select %p254, %s251, 15
        %s256 = smul.addr %s255, 2
        %s257 = smul.addr %s253, 32
        %s258 = sadd.s32 %s256, %s257
        %s259 = smul.addr %s258, 4
        %s260 = scalar_lea.vmem %s0, %s259
        %s261 = smul.u32 8, %s21
      $region28: #{double_conv.4} parent=23 // pred_fallthru
        _
      // Predicated region
      $region29: #{double_conv.4} parent=23 // pred_check
        %p262 = pneg %p83
      $region30: #{double_conv.4} parent=23 // pred_check_branch
        %264 = sbr.rel (%p262) target = $region32
      $region31: #{double_conv.4} parent=23 // pred_region
        %s265 = smul.u32 %s21, 8
        %s266 = ssub.s32 %s265, 1
        %p267 = scmp.gt.s32.totalorder %s266, 0
        %s268 = scalar_select %p267, %s266, 0
        %p269 = scmp.lt.s32.totalorder %s20, 1
        %s270 = scalar_select %p269, %s20, 1
        %p271 = scmp.lt.s32.totalorder %s268, 15
        %s272 = scalar_select %p271, %s268, 15
        %s273 = smul.addr %s272, 2
        %s274 = smul.addr %s270, 32
        %s275 = sadd.s32 %s273, %s274
        %s276 = smul.addr %s275, 4
        %s277 = scalar_lea.vmem %s1, %s276
        %s278 = smul.u32 %s21, 8
        %s279 = ssub.s32 %s278, 1
        %p280 = scmp.gt.s32.totalorder %s279, 0
        %s281 = scalar_select %p280, %s279, 0
      $region32: #{double_conv.4} parent=23 // pred_fallthru
        _
      // Predicated region
      $region33: #{double_conv.4} parent=23 // pred_check
        %p282 = pneg %p119
      $region34: #{double_conv.4} parent=23 // pred_check_branch
        %284 = sbr.rel (%p282) target = $region36
      $region35: #{double_conv.4} parent=23 // pred_region
        %s285 = sadd.s32 %s21, 1
        %s286 = smul.u32 %s285, 8
        %p287 = scmp.lt.s32.totalorder %s286, 15
        %s288 = scalar_select %p287, %s286, 15
        %p289 = scmp.lt.s32.totalorder %s20, 1
        %s290 = scalar_select %p289, %s20, 1
        %p291 = scmp.lt.s32.totalorder %s288, 15
        %s292 = scalar_select %p291, %s288, 15
        %s293 = smul.addr %s292, 2
        %s294 = smul.addr %s290, 32
        %s295 = sadd.s32 %s293, %s294
        %s296 = smul.addr %s295, 4
        %s297 = scalar_lea.vmem %s2, %s296
        %s298 = sadd.s32 %s21, 1
        %s299 = smul.u32 %s298, 8
        %p300 = scmp.lt.s32.totalorder %s299, 15
        %s301 = scalar_select %p300, %s299, 15
      $region36: #{double_conv.4} parent=23 // pred_fallthru
        _
    $region24: #{double_conv.4} parent=5 // pred_fallthru
      _
    %p302 = scmp.le.s32.totalorder 1, %s13
    %p303 = scmp.lt.s32.totalorder %s13, 5
    %p304 = pnand %p302, %p303
    %p305 = pneg %p304
    // Predicated region
    $region37: #{double_conv.4} parent=5 // pred_check
      _
    $region38: #{double_conv.4} parent=5 // pred_check_branch
      %307 = sbr.rel (%p304) target = $region40
    $region39: #{double_conv.4} parent=5 // pred_region
      %s308 = ssub.s32 %s13, 1
      %s309 = smul.u32 8, %s23
      %p310 = scmp.lt.s32.totalorder %s22, 1
      %s311 = scalar_select %p310, %s22, 1
      %p312 = scmp.lt.s32.totalorder %s309, 15
      %s313 = scalar_select %p312, %s309, 15
      %s314 = smul.addr %s313, 2
      %s315 = smul.addr %s311, 32
      %s316 = sadd.s32 %s314, %s315
      %s317 = smul.addr %s316, 4
      %s318 = scalar_lea.vmem %s0, %s317
      %p319 = pneg %p53
      %p320 = pneg %p50
      %s321 = smul.u32 %s23, 8
      %s322 = ssub.s32 %s321, 1
      %p323 = scmp.gt.s32.totalorder %s322, 0
      %s324 = scalar_select %p323, %s322, 0
      %p325 = scmp.lt.s32.totalorder %s22, 1
      %s326 = scalar_select %p325, %s22, 1
      %p327 = scmp.lt.s32.totalorder %s324, 15
      %s328 = scalar_select %p327, %s324, 15
      %s329 = smul.addr %s328, 2
      %s330 = smul.addr %s326, 32
      %s331 = sadd.s32 %s329, %s330
      %s332 = smul.addr %s331, 4
      %s333 = scalar_lea.vmem %s1, %s332
      %p334 = pneg %p89
      %p335 = pneg %p86
      %s336 = sadd.s32 %s23, 1
      %s337 = smul.u32 %s336, 8
      %p338 = scmp.lt.s32.totalorder %s337, 15
      %s339 = scalar_select %p338, %s337, 15
      %p340 = scmp.lt.s32.totalorder %s22, 1
      %s341 = scalar_select %p340, %s22, 1
      %p342 = scmp.lt.s32.totalorder %s339, 15
      %s343 = scalar_select %p342, %s339, 15
      %s344 = smul.addr %s343, 2
      %s345 = smul.addr %s341, 32
      %s346 = sadd.s32 %s344, %s345
      %s347 = smul.addr %s346, 4
      %s348 = scalar_lea.vmem %s2, %s347
      %p349 = pneg %p125
      %p350 = pneg %p122
      %p351 = pneg %p146
      %p352 = pneg %p143
      %p353 = pneg %p167
      %p354 = pneg %p164
      %p355 = pneg %p195
      %p356 = pneg %p192
      %s357 = smul.u32 8, %s23
      %p358 = scmp.lt.s32.totalorder %s22, 1
      %s359 = scalar_select %p358, %s22, 1
      %p360 = scmp.lt.s32.totalorder %s357, 15
      %s361 = scalar_select %p360, %s357, 15
      %s362 = smul.addr %s361, 2
      %s363 = smul.addr %s359, 32
      %s364 = sadd.s32 %s362, %s363
      %s365 = smul.addr %s364, 4
      %s366 = scalar_lea.vmem %s5, %s365
      %p367 = pneg %p223
      %p368 = pneg %p220
      %p369 = scmp.lt.s32.totalorder %s22, 1
      %s370 = scalar_select %p369, %s22, 1
      %p371 = scmp.lt.s32.totalorder %s23, 1
      %s372 = scalar_select %p371, %s23, 1
      %s373 = smul.addr %s370, 2
      %s374 = sadd.s32 %s372, %s373
      %s375 = smul.addr %s374, 2
      %s376 = scalar_lea.vmem %s6, %s375
      %s377 = smul.u32 8, %s23
      %p378 = scmp.lt.s32.totalorder %s22, 1
      %s379 = scalar_select %p378, %s22, 1
      %p380 = scmp.lt.s32.totalorder %s377, 15
      %s381 = scalar_select %p380, %s377, 15
      %s382 = smul.addr %s381, 2
      %s383 = smul.addr %s379, 32
      %s384 = sadd.s32 %s382, %s383
      %s385 = smul.addr %s384, 4
      %s386 = scalar_lea.vmem %s0, %s385
      %s387 = smul.u32 8, %s23
      %s388 = smul.u32 %s23, 8
      %s389 = ssub.s32 %s388, 1
      %p390 = scmp.gt.s32.totalorder %s389, 0
      %s391 = scalar_select %p390, %s389, 0
      %p392 = scmp.lt.s32.totalorder %s22, 1
      %s393 = scalar_select %p392, %s22, 1
      %p394 = scmp.lt.s32.totalorder %s391, 15
      %s395 = scalar_select %p394, %s391, 15
      %s396 = smul.addr %s395, 2
      %s397 = smul.addr %s393, 32
      %s398 = sadd.s32 %s396, %s397
      %s399 = smul.addr %s398, 4
      %s400 = scalar_lea.vmem %s1, %s399
      %s401 = smul.u32 %s23, 8
      %s402 = ssub.s32 %s401, 1
      %p403 = scmp.gt.s32.totalorder %s402, 0
      %s404 = scalar_select %p403, %s402, 0
      %s405 = sadd.s32 %s23, 1
      %s406 = smul.u32 %s405, 8
      %p407 = scmp.lt.s32.totalorder %s406, 15
      %s408 = scalar_select %p407, %s406, 15
      %p409 = scmp.lt.s32.totalorder %s22, 1
      %s410 = scalar_select %p409, %s22, 1
      %p411 = scmp.lt.s32.totalorder %s408, 15
      %s412 = scalar_select %p411, %s408, 15
      %s413 = smul.addr %s412, 2
      %s414 = smul.addr %s410, 32
      %s415 = sadd.s32 %s413, %s414
      %s416 = smul.addr %s415, 4
      %s417 = scalar_lea.vmem %s2, %s416
      %s418 = sadd.s32 %s23, 1
      %s419 = smul.u32 %s418, 8
      %p420 = scmp.lt.s32.totalorder %s419, 15
      %s421 = scalar_select %p420, %s419, 15
      %s422 = smul.u32 8, %s23
      %p423 = scmp.lt.s32.totalorder %s22, 1
      %s424 = scalar_select %p423, %s22, 1
      %p425 = scmp.lt.s32.totalorder %s422, 15
      %s426 = scalar_select %p425, %s422, 15
      %s427 = smul.addr %s426, 2
      %s428 = smul.addr %s424, 32
      %s429 = sadd.s32 %s427, %s428
      %s430 = smul.addr %s429, 4
      %s431 = scalar_lea.vmem %s5, %s430
      %s432 = smul.u32 8, %s23
      %p433 = scmp.lt.s32.totalorder %s22, 1
      %s434 = scalar_select %p433, %s22, 1
      %p435 = scmp.lt.s32.totalorder %s23, 1
      %s436 = scalar_select %p435, %s23, 1
      %s437 = smul.addr %s434, 2
      %s438 = sadd.s32 %s436, %s437
      %s439 = smul.addr %s438, 2
      %s440 = scalar_lea.vmem %s6, %s439
      %v442 = vld [vmem:[%s4] sm:$0x1]
      %v443 = vld [vmem:[%s4 + $0x1] sm:$0x1]
      %p444 = scmp.gt.s32.totalorder %s23, 0
      %s445 = scalar_select %p444, 1, 0
      %s446 = scvt.s32.f32 %s445
      %p448 = scmp.ne.f32.partialorder %s446, %s446
      %s449 = sshrl.u32 %s446, 16
      %s450 = sand.u32 %s449, 1
      %s451 = sadd.s32 32767, %s450
      %s452 = sadd.s32 %s446, %s451
      %s453 = sand.u32 %s452, 4294901760
      %s454 = scalar_select %p448, 2143289344, %s453
      %s456 = sshrl.u32 %s454, 16
      %p457 = scmp.lt.s32.totalorder %s23, 1
      %s458 = scalar_select %p457, 1, 0
      %s459 = scvt.s32.f32 %s458
      %p461 = scmp.ne.f32.partialorder %s459, %s459
      %s462 = sshrl.u32 %s459, 16
      %s463 = sand.u32 %s462, 1
      %s464 = sadd.s32 32767, %s463
      %s465 = sadd.s32 %s459, %s464
      %s466 = sand.u32 %s465, 4294901760
      %s467 = scalar_select %p461, 2143289344, %s466
      %s469 = sshrl.u32 %s467, 16
      %v470 = vld [vmem:[%s400] sm:$0xf]
      %v471 = vld [vmem:[%s400 + $0x4] sm:$0xf]
      %v472 = vunpack.c.l.bf16 %v470
      %v473 = vunpack.c.l.bf16 %v471
      %v474 = vlaneseq
      %v475 = vshrl.u32 %v474, 7
      %v476 = vsub.s32 0, %v475
      %v477 = vrot.slane %v442, %v476
      %v478 = vmul.f32 %v472, %v477
      %v479 = vmul.f32 %v473, %v477
      %v480 = vlaneseq
      %v481 = vshrl.u32 %v480, 7
      %v482 = vsub.s32 0, %v481
      %v483 = vrot.slane %v443, %v482
      %v484 = vadd.f32 %v478, %v483
      %v485 = vadd.f32 %v479, %v483
      %v486 = vmax.f32 %v484, 0.0
      %v487 = vmax.f32 %v485, 0.0
      %v488 = vpack.c.bf16 %v487, %v486
      %s489 = sshll.u32 %s456, 16
      %s490 = sor.u32 %s456, %s489
      %v491 = vstv %s490
      %v493 = vmul.bf16 %v488, %v491
      %v494 = vld [vmem:[%s386] sm:$0xf]
      %v495 = vld [vmem:[%s386 + $0x4] sm:$0xf]
      %v496 = vld [vmem:[%s386 + $0x8] sm:$0xf]
      %v497 = vld [vmem:[%s386 + $0xc] sm:$0xf]
      %v498 = vld [vmem:[%s386 + $0x10] sm:$0xf]
      %v499 = vld [vmem:[%s386 + $0x14] sm:$0xf]
      %v500 = vld [vmem:[%s386 + $0x18] sm:$0xf]
      %v501 = vld [vmem:[%s386 + $0x1c] sm:$0xf]
      %v502 = vld [vmem:[%s386 + $0x20] sm:$0xf]
      %v503 = vld [vmem:[%s386 + $0x24] sm:$0xf]
      %v504 = vld [vmem:[%s386 + $0x28] sm:$0xf]
      %v505 = vld [vmem:[%s386 + $0x2c] sm:$0xf]
      %v506 = vld [vmem:[%s386 + $0x30] sm:$0xf]
      %v507 = vld [vmem:[%s386 + $0x34] sm:$0xf]
      %v508 = vld [vmem:[%s386 + $0x38] sm:$0xf]
      %v509 = vld [vmem:[%s386 + $0x3c] sm:$0xf]
      %v510 = vunpack.c.l.bf16 %v494
      %v511 = vunpack.c.l.bf16 %v495
      %v512 = vunpack.c.l.bf16 %v496
      %v513 = vunpack.c.l.bf16 %v497
      %v514 = vunpack.c.l.bf16 %v498
      %v515 = vunpack.c.l.bf16 %v499
      %v516 = vunpack.c.l.bf16 %v500
      %v517 = vunpack.c.l.bf16 %v501
      %v518 = vunpack.c.l.bf16 %v502
      %v519 = vunpack.c.l.bf16 %v503
      %v520 = vunpack.c.l.bf16 %v504
      %v521 = vunpack.c.l.bf16 %v505
      %v522 = vunpack.c.l.bf16 %v506
      %v523 = vunpack.c.l.bf16 %v507
      %v524 = vunpack.c.l.bf16 %v508
      %v525 = vunpack.c.l.bf16 %v509
      %v526 = vmul.f32 %v510, %v477
      %v527 = vmul.f32 %v511, %v477
      %v528 = vmul.f32 %v512, %v477
      %v529 = vmul.f32 %v513, %v477
      %v530 = vmul.f32 %v514, %v477
      %v531 = vmul.f32 %v515, %v477
      %v532 = vmul.f32 %v516, %v477
      %v533 = vmul.f32 %v517, %v477
      %v534 = vmul.f32 %v518, %v477
      %v535 = vmul.f32 %v519, %v477
      %v536 = vmul.f32 %v520, %v477
      %v537 = vmul.f32 %v521, %v477
      %v538 = vmul.f32 %v522, %v477
      %v539 = vmul.f32 %v523, %v477
      %v540 = vmul.f32 %v524, %v477
      %v541 = vmul.f32 %v525, %v477
      %v542 = vadd.f32 %v526, %v483
      %v543 = vadd.f32 %v527, %v483
      %v544 = vadd.f32 %v528, %v483
      %v545 = vadd.f32 %v529, %v483
      %v546 = vadd.f32 %v530, %v483
      %v547 = vadd.f32 %v531, %v483
      %v548 = vadd.f32 %v532, %v483
      %v549 = vadd.f32 %v533, %v483
      %v550 = vadd.f32 %v534, %v483
      %v551 = vadd.f32 %v535, %v483
      %v552 = vadd.f32 %v536, %v483
      %v553 = vadd.f32 %v537, %v483
      %v554 = vadd.f32 %v538, %v483
      %v555 = vadd.f32 %v539, %v483
      %v556 = vadd.f32 %v540, %v483
      %v557 = vadd.f32 %v541, %v483
      %v558 = vmax.f32 %v542, 0.0
      %v559 = vmax.f32 %v543, 0.0
      %v560 = vmax.f32 %v544, 0.0
      %v561 = vmax.f32 %v545, 0.0
      %v562 = vmax.f32 %v546, 0.0
      %v563 = vmax.f32 %v547, 0.0
      %v564 = vmax.f32 %v548, 0.0
      %v565 = vmax.f32 %v549, 0.0
      %v566 = vmax.f32 %v550, 0.0
      %v567 = vmax.f32 %v551, 0.0
      %v568 = vmax.f32 %v552, 0.0
      %v569 = vmax.f32 %v553, 0.0
      %v570 = vmax.f32 %v554, 0.0
      %v571 = vmax.f32 %v555, 0.0
      %v572 = vmax.f32 %v556, 0.0
      %v573 = vmax.f32 %v557, 0.0
      %v574 = vpack.c.bf16 %v559, %v558
      %v575 = vpack.c.bf16 %v561, %v560
      %v576 = vpack.c.bf16 %v563, %v562
      %v577 = vpack.c.bf16 %v565, %v564
      %v578 = vpack.c.bf16 %v567, %v566
      %v579 = vpack.c.bf16 %v569, %v568
      %v580 = vpack.c.bf16 %v571, %v570
      %v581 = vpack.c.bf16 %v573, %v572
      %v582 = vld [vmem:[%s417] sm:$0xf]
      %v583 = vld [vmem:[%s417 + $0x4] sm:$0xf]
      %v584 = vunpack.c.l.bf16 %v582
      %v585 = vunpack.c.l.bf16 %v583
      %v586 = vmul.f32 %v584, %v477
      %v587 = vmul.f32 %v585, %v477
      %v588 = vadd.f32 %v586, %v483
      %v589 = vadd.f32 %v587, %v483
      %v590 = vmax.f32 %v588, 0.0
      %v591 = vmax.f32 %v589, 0.0
      %v592 = vpack.c.bf16 %v591, %v590
      %s593 = sshll.u32 %s469, 16
      %s594 = sor.u32 %s469, %s593
      %v595 = vstv %s594
      %v597 = vmul.bf16 %v592, %v595
      %v598 = vld [vmem:[%s3] sm:$0xf]
      %v599 = vld [vmem:[%s3 + $0x4] sm:$0xf]
      %v600 = vld [vmem:[%s3 + $0x8] sm:$0xf]
      %v601 = vld [vmem:[%s3 + $0xc] sm:$0xf]
      %v602 = vld [vmem:[%s3 + $0x10] sm:$0xf]
      %v603 = vld [vmem:[%s3 + $0x14] sm:$0xf]
      %v604 = vld [vmem:[%s3 + $0x18] sm:$0xf]
      %v605 = vld [vmem:[%s3 + $0x1c] sm:$0xf]
      %v606 = vld [vmem:[%s3 + $0x20] sm:$0xf]
      %v608 = vshrl.u32 %v493, 16
      %v610 = vrot.slane %v608, 7
      %v611 = vshll.u32 %v493, 16
      %v613 = vor.u32 %v610, %v611
      %v615 = vshrl.u32 %v574, 16
      %v617 = vrot.slane %v615, 7
      %v618 = vshll.u32 %v574, 16
      %v620 = vor.u32 %v617, %v618
      %v622 = vshrl.u32 %v575, 16
      %v624 = vrot.slane %v622, 7
      %v625 = vshll.u32 %v575, 16
      %v627 = vor.u32 %v624, %v625
      %v629 = vshrl.u32 %v576, 16
      %v631 = vrot.slane %v629, 7
      %v632 = vshll.u32 %v576, 16
      %v634 = vor.u32 %v631, %v632
      %v636 = vshrl.u32 %v577, 16
      %v638 = vrot.slane %v636, 7
      %v639 = vshll.u32 %v577, 16
      %v641 = vor.u32 %v638, %v639
      %v643 = vshrl.u32 %v578, 16
      %v645 = vrot.slane %v643, 7
      %v646 = vshll.u32 %v578, 16
      %v648 = vor.u32 %v645, %v646
      %v650 = vshrl.u32 %v579, 16
      %v652 = vrot.slane %v650, 7
      %v653 = vshll.u32 %v579, 16
      %v655 = vor.u32 %v652, %v653
      %v657 = vshrl.u32 %v580, 16
      %v659 = vrot.slane %v657, 7
      %v660 = vshll.u32 %v580, 16
      %v662 = vor.u32 %v659, %v660
      %vm671 = vcmask 1040384
      %vm672 = vsmask.f32 256
      %vm673 = vmand %vm671, %vm672
      %v674 = vsel %vm673, 0, %v613
      %v675 = vsel %vm673, 0, %v620
      %v676 = vsel %vm673, 0, %v627
      %v677 = vsel %vm673, 0, %v634
      %v678 = vsel %vm673, 0, %v641
      %v679 = vsel %vm673, 0, %v648
      %v680 = vsel %vm673, 0, %v655
      %v681 = vsel %vm673, 0, %v662
      %v682 = vrot.slane %v611, 1
      %v683 = vor.u32 %v608, %v682
      %v684 = vrot.slane %v618, 1
      %v685 = vor.u32 %v615, %v684
      %v686 = vrot.slane %v625, 1
      %v687 = vor.u32 %v622, %v686
      %v688 = vrot.slane %v632, 1
      %v689 = vor.u32 %v629, %v688
      %v690 = vrot.slane %v639, 1
      %v691 = vor.u32 %v636, %v690
      %v692 = vrot.slane %v646, 1
      %v693 = vor.u32 %v643, %v692
      %v694 = vrot.slane %v653, 1
      %v695 = vor.u32 %v650, %v694
      %v696 = vrot.slane %v660, 1
      %v697 = vor.u32 %v657, %v696
      %vm706 = vcmask 1047552
      %vm707 = vsmask.f32 7424
      %vm708 = vmand %vm706, %vm707
      %v709 = vsel %vm708, %v683, 0
      %v710 = vsel %vm708, %v685, 0
      %v711 = vsel %vm708, %v687, 0
      %v712 = vsel %vm708, %v689, 0
      %v713 = vsel %vm708, %v691, 0
      %v714 = vsel %vm708, %v693, 0
      %v715 = vsel %vm708, %v695, 0
      %v716 = vsel %vm708, %v697, 0
      %v718 = vshrl.u32 %v581, 16
      %v720 = vrot.slane %v718, 7
      %v721 = vshll.u32 %v581, 16
      %v723 = vor.u32 %v720, %v721
      %v725 = vsel %vm673, 0, %v723
      %v726 = vrot.slane %v721, 1
      %v727 = vor.u32 %v718, %v726
      %v729 = vsel %vm708, %v727, 0
      %v731 = vshrl.u32 %v597, 16
      %v733 = vrot.slane %v731, 7
      %v734 = vshll.u32 %v597, 16
      %v736 = vor.u32 %v733, %v734
      %v738 = vsel %vm673, 0, %v736
      %v739 = vrot.slane %v734, 1
      %v740 = vor.u32 %v731, %v739
      %v742 = vsel %vm708, %v740, 0
      %751 = vrot.lane.b32.xlu0 %v493, 8
      %v752 = vpop.permute.xlu0 %751
      %753 = vrot.lane.b32.xlu0 %v574, 8
      %v754 = vpop.permute.xlu0 %753
      %755 = vrot.lane.b32.xlu0 %v575, 8
      %v756 = vpop.permute.xlu0 %755
      %757 = vrot.lane.b32.xlu0 %v576, 8
      %v758 = vpop.permute.xlu0 %757
      %759 = vrot.lane.b32.xlu0 %v577, 8
      %v760 = vpop.permute.xlu0 %759
      %761 = vrot.lane.b32.xlu0 %v578, 8
      %v762 = vpop.permute.xlu0 %761
      %763 = vrot.lane.b32.xlu0 %v579, 8
      %v764 = vpop.permute.xlu0 %763
      %765 = vrot.lane.b32.xlu0 %v580, 8
      %v766 = vpop.permute.xlu0 %765
      %775 = vrot.lane.b32.xlu0 %v709, 16
      %v776 = vpop.permute.xlu0 %775
      %777 = vrot.lane.b32.xlu0 %v710, 16
      %v778 = vpop.permute.xlu0 %777
      %779 = vrot.lane.b32.xlu0 %v711, 16
      %v780 = vpop.permute.xlu0 %779
      %781 = vrot.lane.b32.xlu0 %v712, 16
      %v782 = vpop.permute.xlu0 %781
      %783 = vrot.lane.b32.xlu0 %v713, 16
      %v784 = vpop.permute.xlu0 %783
      %785 = vrot.lane.b32.xlu0 %v714, 16
      %v786 = vpop.permute.xlu0 %785
      %787 = vrot.lane.b32.xlu0 %v715, 16
      %v788 = vpop.permute.xlu0 %787
      %789 = vrot.lane.b32.xlu0 %v716, 16
      %v790 = vpop.permute.xlu0 %789
      %799 = vrot.lane.b32.xlu0 %v675, 24
      %v800 = vpop.permute.xlu0 %799
      %801 = vrot.lane.b32.xlu0 %v676, 24
      %v802 = vpop.permute.xlu0 %801
      %803 = vrot.lane.b32.xlu0 %v677, 24
      %v804 = vpop.permute.xlu0 %803
      %805 = vrot.lane.b32.xlu0 %v678, 24
      %v806 = vpop.permute.xlu0 %805
      %807 = vrot.lane.b32.xlu0 %v679, 24
      %v808 = vpop.permute.xlu0 %807
      %809 = vrot.lane.b32.xlu0 %v680, 24
      %v810 = vpop.permute.xlu0 %809
      %811 = vrot.lane.b32.xlu0 %v681, 24
      %v812 = vpop.permute.xlu0 %811
      %813 = vrot.lane.b32.xlu0 %v725, 24
      %v814 = vpop.permute.xlu0 %813
      %816 = vrot.lane.b32.xlu0 %v574, 32
      %v817 = vpop.permute.xlu0 %816
      %818 = vrot.lane.b32.xlu0 %v575, 32
      %v819 = vpop.permute.xlu0 %818
      %820 = vrot.lane.b32.xlu0 %v576, 32
      %v821 = vpop.permute.xlu0 %820
      %822 = vrot.lane.b32.xlu0 %v577, 32
      %v823 = vpop.permute.xlu0 %822
      %824 = vrot.lane.b32.xlu0 %v578, 32
      %v825 = vpop.permute.xlu0 %824
      %826 = vrot.lane.b32.xlu0 %v579, 32
      %v827 = vpop.permute.xlu0 %826
      %828 = vrot.lane.b32.xlu0 %v580, 32
      %v829 = vpop.permute.xlu0 %828
      %830 = vrot.lane.b32.xlu0 %v581, 32
      %v831 = vpop.permute.xlu0 %830
      %833 = vrot.lane.b32.xlu0 %v710, 40
      %v834 = vpop.permute.xlu0 %833
      %835 = vrot.lane.b32.xlu0 %v711, 40
      %v836 = vpop.permute.xlu0 %835
      %837 = vrot.lane.b32.xlu0 %v712, 40
      %v838 = vpop.permute.xlu0 %837
      %839 = vrot.lane.b32.xlu0 %v713, 40
      %v840 = vpop.permute.xlu0 %839
      %841 = vrot.lane.b32.xlu0 %v714, 40
      %v842 = vpop.permute.xlu0 %841
      %843 = vrot.lane.b32.xlu0 %v715, 40
      %v844 = vpop.permute.xlu0 %843
      %845 = vrot.lane.b32.xlu0 %v716, 40
      %v846 = vpop.permute.xlu0 %845
      %847 = vrot.lane.b32.xlu0 %v729, 40
      %v848 = vpop.permute.xlu0 %847
      %850 = vrot.lane.b32.xlu0 %v676, 48
      %v851 = vpop.permute.xlu0 %850
      %852 = vrot.lane.b32.xlu0 %v677, 48
      %v853 = vpop.permute.xlu0 %852
      %854 = vrot.lane.b32.xlu0 %v678, 48
      %v855 = vpop.permute.xlu0 %854
      %856 = vrot.lane.b32.xlu0 %v679, 48
      %v857 = vpop.permute.xlu0 %856
      %858 = vrot.lane.b32.xlu0 %v680, 48
      %v859 = vpop.permute.xlu0 %858
      %860 = vrot.lane.b32.xlu0 %v681, 48
      %v861 = vpop.permute.xlu0 %860
      %862 = vrot.lane.b32.xlu0 %v725, 48
      %v863 = vpop.permute.xlu0 %862
      %864 = vrot.lane.b32.xlu0 %v738, 48
      %v865 = vpop.permute.xlu0 %864
      %867 = vrot.lane.b32.xlu0 %v575, 56
      %v868 = vpop.permute.xlu0 %867
      %869 = vrot.lane.b32.xlu0 %v576, 56
      %v870 = vpop.permute.xlu0 %869
      %871 = vrot.lane.b32.xlu0 %v577, 56
      %v872 = vpop.permute.xlu0 %871
      %873 = vrot.lane.b32.xlu0 %v578, 56
      %v874 = vpop.permute.xlu0 %873
      %875 = vrot.lane.b32.xlu0 %v579, 56
      %v876 = vpop.permute.xlu0 %875
      %877 = vrot.lane.b32.xlu0 %v580, 56
      %v878 = vpop.permute.xlu0 %877
      %879 = vrot.lane.b32.xlu0 %v581, 56
      %v880 = vpop.permute.xlu0 %879
      %881 = vrot.lane.b32.xlu0 %v597, 56
      %v882 = vpop.permute.xlu0 %881
      %884 = vrot.lane.b32.xlu0 %v711, 64
      %v885 = vpop.permute.xlu0 %884
      %886 = vrot.lane.b32.xlu0 %v712, 64
      %v887 = vpop.permute.xlu0 %886
      %888 = vrot.lane.b32.xlu0 %v713, 64
      %v889 = vpop.permute.xlu0 %888
      %890 = vrot.lane.b32.xlu0 %v714, 64
      %v891 = vpop.permute.xlu0 %890
      %892 = vrot.lane.b32.xlu0 %v715, 64
      %v893 = vpop.permute.xlu0 %892
      %894 = vrot.lane.b32.xlu0 %v716, 64
      %v895 = vpop.permute.xlu0 %894
      %896 = vrot.lane.b32.xlu0 %v729, 64
      %v897 = vpop.permute.xlu0 %896
      %898 = vrot.lane.b32.xlu0 %v742, 64
      %v899 = vpop.permute.xlu0 %898
      %vm900 = vcmask 64512
      %v903 = vsel %vm900, %v674, %v752
      %v906 = vsel %vm900, %v675, %v754
      %v909 = vsel %vm900, %v676, %v756
      %v912 = vsel %vm900, %v677, %v758
      %v915 = vsel %vm900, %v678, %v760
      %v918 = vsel %vm900, %v679, %v762
      %v921 = vsel %vm900, %v680, %v764
      %v924 = vsel %vm900, %v681, %v766
      %vm925 = vcmask 130048
      %v927 = vsel %vm925, %v903, %v776
      %v929 = vsel %vm925, %v906, %v778
      %v931 = vsel %vm925, %v909, %v780
      %v933 = vsel %vm925, %v912, %v782
      %v935 = vsel %vm925, %v915, %v784
      %v937 = vsel %vm925, %v918, %v786
      %v939 = vsel %vm925, %v921, %v788
      %v941 = vsel %vm925, %v924, %v790
      %vm942 = vcmask 195584
      %v944 = vsel %vm942, %v927, %v800
      %v946 = vsel %vm942, %v929, %v802
      %v948 = vsel %vm942, %v931, %v804
      %v950 = vsel %vm942, %v933, %v806
      %v952 = vsel %vm942, %v935, %v808
      %v954 = vsel %vm942, %v937, %v810
      %v956 = vsel %vm942, %v939, %v812
      %v958 = vsel %vm942, %v941, %v814
      %vm959 = vcmask 261120
      %v961 = vsel %vm959, %v944, %v817
      %v963 = vsel %vm959, %v946, %v819
      %v965 = vsel %vm959, %v948, %v821
      %v967 = vsel %vm959, %v950, %v823
      %v969 = vsel %vm959, %v952, %v825
      %v971 = vsel %vm959, %v954, %v827
      %v973 = vsel %vm959, %v956, %v829
      %v975 = vsel %vm959, %v958, %v831
      %vm976 = vcmask 326656
      %v978 = vsel %vm976, %v961, %v834
      %v980 = vsel %vm976, %v963, %v836
      %v982 = vsel %vm976, %v965, %v838
      %v984 = vsel %vm976, %v967, %v840
      %v986 = vsel %vm976, %v969, %v842
      %v988 = vsel %vm976, %v971, %v844
      %v990 = vsel %vm976, %v973, %v846
      %v992 = vsel %vm976, %v975, %v848
      %vm993 = vcmask 392192
      %v995 = vsel %vm993, %v978, %v851
      %v997 = vsel %vm993, %v980, %v853
      %v999 = vsel %vm993, %v982, %v855
      %v1001 = vsel %vm993, %v984, %v857
      %v1003 = vsel %vm993, %v986, %v859
      %v1005 = vsel %vm993, %v988, %v861
      %v1007 = vsel %vm993, %v990, %v863
      %v1009 = vsel %vm993, %v992, %v865
      %vm1010 = vcmask 457728
      %v1012 = vsel %vm1010, %v995, %v868
      %v1014 = vsel %vm1010, %v997, %v870
      %v1016 = vsel %vm1010, %v999, %v872
      %v1018 = vsel %vm1010, %v1001, %v874
      %v1020 = vsel %vm1010, %v1003, %v876
      %v1022 = vsel %vm1010, %v1005, %v878
      %v1024 = vsel %vm1010, %v1007, %v880
      %v1026 = vsel %vm1010, %v1009, %v882
      %vm1027 = vcmask 523264
      %v1029 = vsel %vm1027, %v1012, %v885
      %v1031 = vsel %vm1027, %v1014, %v887
      %v1033 = vsel %vm1027, %v1016, %v889
      %v1035 = vsel %vm1027, %v1018, %v891
      %v1037 = vsel %vm1027, %v1020, %v893
      %v1039 = vsel %vm1027, %v1022, %v895
      %v1041 = vsel %vm1027, %v1024, %v897
      %v1043 = vsel %vm1027, %v1026, %v899
      %v1053 = vunpack.c.l.b16 %v598
      %v1054 = vunpack.c.l.b16 %v599
      %v1055 = vunpack.c.l.b16 %v600
      %v1056 = vunpack.c.l.b16 %v601
      %v1057 = vunpack.c.l.b16 %v602
      %v1058 = vunpack.c.l.b16 %v603
      %v1059 = vunpack.c.l.b16 %v604
      %v1060 = vunpack.c.l.b16 %v605
      %v1061 = vunpack.c.l.b16 %v606
      %v1062 = vpack.c.b16 %v1054, %v1053
      %v1063 = vpack.c.b16 %v1056, %v1055
      %v1064 = vpack.c.b16 %v1058, %v1057
      %v1065 = vpack.c.b16 %v1060, %v1059
      %v1066 = vpack.c.b16 %v1061, %v1061
      %vm1071 = vcmask 588800
      %v1072 = vsel %vm1071, %v1029, 0
      %v1074 = vsel %vm1071, %v1031, 0
      %v1076 = vsel %vm1071, %v1033, 0
      %v1078 = vsel %vm1071, %v1035, 0
      %v1080 = vsel %vm1071, %v1037, 0
      %v1082 = vsel %vm1071, %v1039, 0
      %v1084 = vsel %vm1071, %v1041, 0
      %v1086 = vsel %vm1071, %v1043, 0
      %vm1088 = vcmask 1043456
      %v1090 = vsel %vm1088, %v1066, 0
      %1092 = vmatprep.subr.bf16.mxu0 0
      %1093 = vmatpush1.bf16.msra.mxu0 %v1062
      %1094 = vmatprep.subr.bf16.mxu0 0
      %1095 = vmatpush1.bf16.msra.mxu0 %v1063
      %1096 = vmatprep.subr.bf16.mxu0 0
      %1097 = vmatpush1.bf16.msra.mxu0 %v1064
      %1098 = vmatprep.subr.bf16.mxu0 0
      %1099 = vmatpush1.bf16.msra.mxu0 %v1065
      %1100 = vmatprep.subr.bf16.mxu0 0
      %1101 = vmatpush1.bf16.msra.mxu0 %v1090
      %1102 = vmatprep.subr.bf16.mxu0 0
      %1103 = vmatpush1.bf16.msra.mxu0 0
      %1104 = vmatprep.subr.bf16.mxu0 0
      %1105 = vmatpush1.bf16.msra.mxu0 0
      %1106 = vmatprep.subr.bf16.mxu0 0
      %1107 = vmatpush1.bf16.msra.mxu0 0
      %1108 = vmatprep.subr.bf16.mxu0 0
      %1109 = vmatpush1.bf16.msra.mxu0 0
      %1110 = vmatprep.subr.bf16.mxu0 0
      %1111 = vmatpush1.bf16.msra.mxu0 0
      %1112 = vmatprep.subr.bf16.mxu0 0
      %1113 = vmatpush1.bf16.msra.mxu0 0
      %1114 = vmatprep.subr.bf16.mxu0 0
      %1115 = vmatpush1.bf16.msra.mxu0 0
      %1116 = vmatprep.subr.bf16.mxu0 0
      %1117 = vmatpush1.bf16.msra.mxu0 0
      %1118 = vmatprep.subr.bf16.mxu0 0
      %1119 = vmatpush1.bf16.msra.mxu0 0
      %1120 = vmatprep.subr.bf16.mxu0 0
      %1121 = vmatpush1.bf16.msra.mxu0 0
      %1122 = vmatprep.subr.bf16.mxu0 0
      %1123 = vmatpush1.bf16.msra.mxu0 0
      %1124 = vmatprep.mubr.bf16.mxu0 0
      %1125 = vmatmul.mubr.bf16.gmra.mrb[0].mxu0 %v1072
      %v1126 = vpop.f32.mrb[0].mxu0
      %v1127 = vadd.f32 0.0, %v1126
      %v1128 = vpop.f32.mrb[0].mxu0
      %v1129 = vpop.f32.mrb[0].mxu0
      %v1130 = vadd.f32 0.0, %v1129
      %v1131 = vpop.f32.mrb[0].mxu0
      %1132 = vmatprep.mubr.bf16.mxu0 0
      %1133 = vmatmul.mubr.bf16.gmra.mrb[0].mxu0 %v1074
      %v1134 = vpop.f32.mrb[0].mxu0
      %v1135 = vadd.f32 0.0, %v1134
      %v1136 = vpop.f32.mrb[0].mxu0
      %v1137 = vpop.f32.mrb[0].mxu0
      %v1138 = vadd.f32 0.0, %v1137
      %v1139 = vpop.f32.mrb[0].mxu0
      %1140 = vmatprep.mubr.bf16.mxu0 0
      %1141 = vmatmul.mubr.bf16.gmra.mrb[0].mxu0 %v1076
      %v1142 = vpop.f32.mrb[0].mxu0
      %v1143 = vadd.f32 0.0, %v1142
      %v1144 = vpop.f32.mrb[0].mxu0
      %v1145 = vpop.f32.mrb[0].mxu0
      %v1146 = vadd.f32 0.0, %v1145
      %v1147 = vpop.f32.mrb[0].mxu0
      %1148 = vmatprep.mubr.bf16.mxu0 0
      %1149 = vmatmul.mubr.bf16.gmra.mrb[0].mxu0 %v1078
      %v1150 = vpop.f32.mrb[0].mxu0
      %v1151 = vadd.f32 0.0, %v1150
      %v1152 = vpop.f32.mrb[0].mxu0
      %v1153 = vpop.f32.mrb[0].mxu0
      %v1154 = vadd.f32 0.0, %v1153
      %v1155 = vpop.f32.mrb[0].mxu0
      %1156 = vmatprep.mubr.bf16.mxu0 0
      %1157 = vmatmul.mubr.bf16.gmra.mrb[0].mxu0 %v1080
      %v1158 = vpop.f32.mrb[0].mxu0
      %v1159 = vadd.f32 0.0, %v1158
      %v1160 = vpop.f32.mrb[0].mxu0
      %v1161 = vpop.f32.mrb[0].mxu0
      %v1162 = vadd.f32 0.0, %v1161
      %v1163 = vpop.f32.mrb[0].mxu0
      %1164 = vmatprep.mubr.bf16.mxu0 0
      %1165 = vmatmul.mubr.bf16.gmra.mrb[0].mxu0 %v1082
      %v1166 = vpop.f32.mrb[0].mxu0
      %v1167 = vadd.f32 0.0, %v1166
      %v1168 = vpop.f32.mrb[0].mxu0
      %v1169 = vpop.f32.mrb[0].mxu0
      %v1170 = vadd.f32 0.0, %v1169
      %v1171 = vpop.f32.mrb[0].mxu0
      %1172 = vmatprep.mubr.bf16.mxu0 0
      %1173 = vmatmul.mubr.bf16.gmra.mrb[0].mxu0 %v1084
      %v1174 = vpop.f32.mrb[0].mxu0
      %v1175 = vadd.f32 0.0, %v1174
      %v1176 = vpop.f32.mrb[0].mxu0
      %v1177 = vpop.f32.mrb[0].mxu0
      %v1178 = vadd.f32 0.0, %v1177
      %v1179 = vpop.f32.mrb[0].mxu0
      %1180 = vmatprep.mubr.bf16.mxu0 0
      %1181 = vmatmul.mubr.bf16.gmra.mrb[0].mxu0 %v1086
      %v1182 = vpop.f32.mrb[0].mxu0
      %v1183 = vadd.f32 0.0, %v1182
      %v1184 = vpop.f32.mrb[0].mxu0
      %v1185 = vpop.f32.mrb[0].mxu0
      %v1186 = vadd.f32 0.0, %v1185
      %v1187 = vpop.f32.mrb[0].mxu0
      %1188 = vdwg.mxu0
      %v1189 = vsel %vm900, %v1127, 0.0
      %v1190 = vsel %vm900, %v1130, 0.0
      %v1191 = vadd.f32 %v1189, %v1190
      %v1192 = vsel %vm900, %v1135, 0.0
      %v1193 = vadd.f32 %v1191, %v1192
      %v1194 = vsel %vm900, %v1138, 0.0
      %v1195 = vadd.f32 %v1193, %v1194
      %v1196 = vsel %vm900, %v1143, 0.0
      %v1197 = vadd.f32 %v1195, %v1196
      %v1198 = vsel %vm900, %v1146, 0.0
      %v1199 = vadd.f32 %v1197, %v1198
      %v1200 = vsel %vm900, %v1151, 0.0
      %v1201 = vadd.f32 %v1199, %v1200
      %v1202 = vsel %vm900, %v1154, 0.0
      %v1203 = vadd.f32 %v1201, %v1202
      %v1204 = vsel %vm900, %v1159, 0.0
      %v1205 = vadd.f32 %v1203, %v1204
      %v1206 = vsel %vm900, %v1162, 0.0
      %v1207 = vadd.f32 %v1205, %v1206
      %v1208 = vsel %vm900, %v1167, 0.0
      %v1209 = vadd.f32 %v1207, %v1208
      %v1210 = vsel %vm900, %v1170, 0.0
      %v1211 = vadd.f32 %v1209, %v1210
      %v1212 = vsel %vm900, %v1175, 0.0
      %v1213 = vadd.f32 %v1211, %v1212
      %v1214 = vsel %vm900, %v1178, 0.0
      %v1215 = vadd.f32 %v1213, %v1214
      %v1216 = vsel %vm900, %v1183, 0.0
      %v1217 = vadd.f32 %v1215, %v1216
      %v1218 = vsel %vm900, %v1186, 0.0
      %v1219 = vadd.f32 %v1217, %v1218
      %v1220 = vrot.slane %v1219, 4
      %v1221 = vadd.f32 %v1219, %v1220
      %v1222 = vrot.slane %v1221, 2
      %v1223 = vadd.f32 %v1221, %v1222
      %v1224 = vrot.slane %v1223, 1
      %v1225 = vadd.f32 %v1223, %v1224
      %v1226 = vrcp.pop 128.0
      %v1227 = vmul.f32 %v1225, %v1226
      %v1228 = vsub.f32 %v1127, %v1227
      %v1229 = vsub.f32 %v1130, %v1227
      %v1230 = vsub.f32 %v1135, %v1227
      %v1231 = vsub.f32 %v1138, %v1227
      %v1232 = vsub.f32 %v1143, %v1227
      %v1233 = vsub.f32 %v1146, %v1227
      %v1234 = vsub.f32 %v1151, %v1227
      %v1235 = vsub.f32 %v1154, %v1227
      %v1236 = vsub.f32 %v1159, %v1227
      %v1237 = vsub.f32 %v1162, %v1227
      %v1238 = vsub.f32 %v1167, %v1227
      %v1239 = vsub.f32 %v1170, %v1227
      %v1240 = vsub.f32 %v1175, %v1227
      %v1241 = vsub.f32 %v1178, %v1227
      %v1242 = vsub.f32 %v1183, %v1227
      %v1243 = vsub.f32 %v1186, %v1227
      %v1244 = vmul.f32 %v1228, %v1228
      %v1245 = vmul.f32 %v1229, %v1229
      %v1246 = vmul.f32 %v1230, %v1230
      %v1247 = vmul.f32 %v1231, %v1231
      %v1248 = vmul.f32 %v1232, %v1232
      %v1249 = vmul.f32 %v1233, %v1233
      %v1250 = vmul.f32 %v1234, %v1234
      %v1251 = vmul.f32 %v1235, %v1235
      %v1252 = vmul.f32 %v1236, %v1236
      %v1253 = vmul.f32 %v1237, %v1237
      %v1254 = vmul.f32 %v1238, %v1238
      %v1255 = vmul.f32 %v1239, %v1239
      %v1256 = vmul.f32 %v1240, %v1240
      %v1257 = vmul.f32 %v1241, %v1241
      %v1258 = vmul.f32 %v1242, %v1242
      %v1259 = vmul.f32 %v1243, %v1243
      %v1260 = vsel %vm900, %v1244, 0.0
      %v1261 = vsel %vm900, %v1245, 0.0
      %v1262 = vadd.f32 %v1260, %v1261
      %v1263 = vsel %vm900, %v1246, 0.0
      %v1264 = vadd.f32 %v1262, %v1263
      %v1265 = vsel %vm900, %v1247, 0.0
      %v1266 = vadd.f32 %v1264, %v1265
      %v1267 = vsel %vm900, %v1248, 0.0
      %v1268 = vadd.f32 %v1266, %v1267
      %v1269 = vsel %vm900, %v1249, 0.0
      %v1270 = vadd.f32 %v1268, %v1269
      %v1271 = vsel %vm900, %v1250, 0.0
      %v1272 = vadd.f32 %v1270, %v1271
      %v1273 = vsel %vm900, %v1251, 0.0
      %v1274 = vadd.f32 %v1272, %v1273
      %v1275 = vsel %vm900, %v1252, 0.0
      %v1276 = vadd.f32 %v1274, %v1275
      %v1277 = vsel %vm900, %v1253, 0.0
      %v1278 = vadd.f32 %v1276, %v1277
      %v1279 = vsel %vm900, %v1254, 0.0
      %v1280 = vadd.f32 %v1278, %v1279
      %v1281 = vsel %vm900, %v1255, 0.0
      %v1282 = vadd.f32 %v1280, %v1281
      %v1283 = vsel %vm900, %v1256, 0.0
      %v1284 = vadd.f32 %v1282, %v1283
      %v1285 = vsel %vm900, %v1257, 0.0
      %v1286 = vadd.f32 %v1284, %v1285
      %v1287 = vsel %vm900, %v1258, 0.0
      %v1288 = vadd.f32 %v1286, %v1287
      %v1289 = vsel %vm900, %v1259, 0.0
      %v1290 = vadd.f32 %v1288, %v1289
      %v1291 = vrot.slane %v1290, 4
      %v1292 = vadd.f32 %v1290, %v1291
      %v1293 = vrot.slane %v1292, 2
      %v1294 = vadd.f32 %v1292, %v1293
      %v1295 = vrot.slane %v1294, 1
      %v1296 = vadd.f32 %v1294, %v1295
      %vm1297 = vcmask 1040384
      %v1298 = vsel %vm1297, %v1225, %v1296
      %vm1299 = vcmask 58368
      %1300 = vst.msk [vmem:[%s440] sm:$0x3] %vm1299, %v1298
      %v1301 = vpack.c.bf16 %v1130, %v1127
      %v1302 = vpack.c.bf16 %v1138, %v1135
      %v1303 = vpack.c.bf16 %v1146, %v1143
      %v1304 = vpack.c.bf16 %v1154, %v1151
      %v1305 = vpack.c.bf16 %v1162, %v1159
      %v1306 = vpack.c.bf16 %v1170, %v1167
      %v1307 = vpack.c.bf16 %v1178, %v1175
      %v1308 = vpack.c.bf16 %v1186, %v1183
      %v1317 = vunpack.c.l.b16 %v1301
      %v1318 = vunpack.c.h.b16 %v1301
      %v1319 = vunpack.c.l.b16 %v1302
      %v1320 = vunpack.c.h.b16 %v1302
      %v1321 = vunpack.c.l.b16 %v1303
      %v1322 = vunpack.c.h.b16 %v1303
      %v1323 = vunpack.c.l.b16 %v1304
      %v1324 = vunpack.c.h.b16 %v1304
      %v1325 = vunpack.c.l.b16 %v1305
      %v1326 = vunpack.c.h.b16 %v1305
      %v1327 = vunpack.c.l.b16 %v1306
      %v1328 = vunpack.c.h.b16 %v1306
      %v1329 = vunpack.c.l.b16 %v1307
      %v1330 = vunpack.c.h.b16 %v1307
      %v1331 = vunpack.c.l.b16 %v1308
      %v1332 = vunpack.c.h.b16 %v1308
      %v1333 = vpack.c.b16 %v1317, %v1317
      %v1334 = vpack.c.b16 %v1318, %v1318
      %v1335 = vpack.c.b16 %v1319, %v1319
      %v1336 = vpack.c.b16 %v1320, %v1320
      %v1337 = vpack.c.b16 %v1321, %v1321
      %v1338 = vpack.c.b16 %v1322, %v1322
      %v1339 = vpack.c.b16 %v1323, %v1323
      %v1340 = vpack.c.b16 %v1324, %v1324
      %v1341 = vpack.c.b16 %v1325, %v1325
      %v1342 = vpack.c.b16 %v1326, %v1326
      %v1343 = vpack.c.b16 %v1327, %v1327
      %v1344 = vpack.c.b16 %v1328, %v1328
      %v1345 = vpack.c.b16 %v1329, %v1329
      %v1346 = vpack.c.b16 %v1330, %v1330
      %v1347 = vpack.c.b16 %v1331, %v1331
      %v1348 = vpack.c.b16 %v1332, %v1332
      %vm1365 = vcmask 60416
      %1366 = vst.msk [vmem:[%s431] sm:$0xf] %vm1365, %v1333
      %1367 = vst.msk [vmem:[%s431 + $0x4] sm:$0xf] %vm1365, %v1334
      %1368 = vst.msk [vmem:[%s431 + $0x8] sm:$0xf] %vm1365, %v1335
      %1369 = vst.msk [vmem:[%s431 + $0xc] sm:$0xf] %vm1365, %v1336
      %1370 = vst.msk [vmem:[%s431 + $0x10] sm:$0xf] %vm1365, %v1337
      %1371 = vst.msk [vmem:[%s431 + $0x14] sm:$0xf] %vm1365, %v1338
      %1372 = vst.msk [vmem:[%s431 + $0x18] sm:$0xf] %vm1365, %v1339
      %1373 = vst.msk [vmem:[%s431 + $0x1c] sm:$0xf] %vm1365, %v1340
      %1374 = vst.msk [vmem:[%s431 + $0x20] sm:$0xf] %vm1365, %v1341
      %1375 = vst.msk [vmem:[%s431 + $0x24] sm:$0xf] %vm1365, %v1342
      %1376 = vst.msk [vmem:[%s431 + $0x28] sm:$0xf] %vm1365, %v1343
      %1377 = vst.msk [vmem:[%s431 + $0x2c] sm:$0xf] %vm1365, %v1344
      %1378 = vst.msk [vmem:[%s431 + $0x30] sm:$0xf] %vm1365, %v1345
      %1379 = vst.msk [vmem:[%s431 + $0x34] sm:$0xf] %vm1365, %v1346
      %1380 = vst.msk [vmem:[%s431 + $0x38] sm:$0xf] %vm1365, %v1347
      %1381 = vst.msk [vmem:[%s431 + $0x3c] sm:$0xf] %vm1365, %v1348
      %s1382 = smul.u32 8, %s23
      %p1383 = scmp.lt.s32.totalorder %s22, 1
      %s1384 = scalar_select %p1383, %s22, 1
      %p1385 = scmp.lt.s32.totalorder %s1382, 15
      %s1386 = scalar_select %p1385, %s1382, 15
      %s1387 = smul.addr %s1386, 2
      %s1388 = smul.addr %s1384, 32
      %s1389 = sadd.s32 %s1387, %s1388
      %s1390 = smul.addr %s1389, 4
      %s1391 = scalar_lea.vmem %s5, %s1390
      %p1392 = scmp.lt.s32.totalorder %s22, 1
      %s1393 = scalar_select %p1392, %s22, 1
      %p1394 = scmp.lt.s32.totalorder %s23, 1
      %s1395 = scalar_select %p1394, %s23, 1
      %s1396 = smul.addr %s1393, 2
      %s1397 = sadd.s32 %s1395, %s1396
      %s1398 = smul.addr %s1397, 2
      %s1399 = scalar_lea.vmem %s6, %s1398
      // Predicated region
      $region41: #{double_conv.4} parent=39 // pred_check
        %p1400 = pneg %p192
      $region42: #{double_conv.4} parent=39 // pred_check_branch
        %1402 = sbr.rel (%p1400) target = $region44
      $region43: #{double_conv.4} parent=39 // pred_region
        %s1403 = smul.u32 8, %s23
      $region44: #{double_conv.4} parent=39 // pred_fallthru
        _
      // Predicated region
      $region45: #{double_conv.4} parent=39 // pred_check
        %p1404 = pneg %p220
      $region46: #{double_conv.4} parent=39 // pred_check_branch
        %1406 = sbr.rel (%p1404) target = $region48
      $region47: #{double_conv.4} parent=39 // pred_region
        _
      $region48: #{double_conv.4} parent=39 // pred_fallthru
        _
    $region40: #{double_conv.4} parent=5 // pred_fallthru
      _
    %p1407 = scmp.le.s32.totalorder 2, %s13
    // Predicated region
    $region49: #{double_conv.4} parent=5 // pred_check
      %p1408 = pneg %p1407
    $region50: #{double_conv.4} parent=5 // pred_check_branch
      %1410 = sbr.rel (%p1408) target = $region52
    $region51: #{double_conv.4} parent=5 // pred_region
      %s1411 = ssub.s32 %s13, 2
      // Predicated region
      $region53: #{double_conv.4} parent=51 // pred_check
        %p1412 = pneg %p198
      $region54: #{double_conv.4} parent=51 // pred_check_branch
        %1414 = sbr.rel (%p1412) target = $region56
      $region55: #{double_conv.4} parent=51 // pred_region
        %s1415 = smul.u32 8, %s25
        %p1416 = scmp.lt.s32.totalorder %s24, 1
        %s1417 = scalar_select %p1416, %s24, 1
        %p1418 = scmp.lt.s32.totalorder %s1415, 15
        %s1419 = scalar_select %p1418, %s1415, 15
        %s1420 = smul.addr %s1419, 2
        %s1421 = smul.addr %s1417, 32
        %s1422 = sadd.s32 %s1420, %s1421
        %s1423 = smul.addr %s1422, 4
        %s1424 = scalar_lea.vmem %s5, %s1423
      $region56: #{double_conv.4} parent=51 // pred_fallthru
        _
      // Predicated region
      $region57: #{double_conv.4} parent=51 // pred_check
        %p1425 = pneg %p226
      $region58: #{double_conv.4} parent=51 // pred_check_branch
        %1427 = sbr.rel (%p1425) target = $region60
      $region59: #{double_conv.4} parent=51 // pred_region
        %p1428 = scmp.lt.s32.totalorder %s24, 1
        %s1429 = scalar_select %p1428, %s24, 1
        %p1430 = scmp.lt.s32.totalorder %s25, 1
        %s1431 = scalar_select %p1430, %s25, 1
        %s1432 = smul.addr %s1429, 2
        %s1433 = sadd.s32 %s1431, %s1432
        %s1434 = smul.addr %s1433, 2
        %s1435 = scalar_lea.vmem %s6, %s1434
      $region60: #{double_conv.4} parent=51 // pred_fallthru
        _
    $region52: #{double_conv.4} parent=5 // pred_fallthru
      _
  $region6: #{double_conv.4} parent=0 // loop_footer
    %s17 = sadd.s32 1, %s13
  $region7: #{double_conv.4} parent=0 // loop_footer_branch
    %12 = sbr.rel target = $region3
  $region8: #{double_conv.4} parent=0 // loop_exit
    _

// kernel: double_conv.3
$region0: #{double_conv.3}
  #allocation0 [shape = 'u32[]', space=smem, size = 0x4, offset = 0x4, fixed_abs, tag = 'smem constant byte address 0x4 - core index']
  #allocation1 [shape = 'u32[144,128]{1,0:T(1,128)}', space=vmem, size = 0x12000, scoped, tag = 'internal scratch']
  %s0 = inlined_call_operand.vmem [shape: bf16[2,16,16,4], index: 0, kind: input, shape index: {}, may-alias: {0,1,2}]
  %s1 = inlined_call_operand.vmem [shape: bf16[2,16,16,4], index: 1, kind: input, shape index: {}, may-alias: {0,1,2}]
  %s2 = inlined_call_operand.vmem [shape: bf16[2,16,16,4], index: 2, kind: input, shape index: {}, may-alias: {0,1,2}]
  %s3 = inlined_call_operand.vmem [shape: bf16[36,8], index: 3, kind: input, shape index: {}]
  %s4 = inlined_call_operand.vmem [shape: bf16[2,16,16,8], index: 4, kind: output, shape index: {0}]
  %s5 = inlined_call_operand.vmem [shape: f32[2,2,2,8], index: 5, kind: output, shape index: {1}]
  %6 = xla_tuple %s4, %s5
  %s7 = sld [smem:[#allocation0]]
  $region57: #{double_conv.3} parent=0
    _
  %s9 = ssub.s32 1, %s7
  %s10 = scalar_select 0, %s9, %s7
  loop: start=0, step=1, limit=6
  $region2: #{double_conv.3} parent=0 // loop_pre_header
    _
  $region3: #{double_conv.3} parent=0 // loop_header
    %s12 = sphi 0, %s16
    %p13 = scmp.ge.s32.totalorder %s12, 6
    %s19 = sphi 0, %s31
    %s20 = sphi 0, %s27
    %s21 = sphi 0, %s19
    %s22 = sphi 0, %s20
    %s23 = sphi 0, %s21
    %s24 = sphi 0, %s22
    %s36 = sphi 0, %s38
    %s39 = sphi 0, %s36
    %s40 = sphi 0, %s39
    %s56 = sphi 0, %s40
    %s72 = sphi 0, %s74
    %s75 = sphi 0, %s72
    %s76 = sphi 0, %s75
    %s92 = sphi 0, %s76
    %s108 = sphi 0, %s110
    %s111 = sphi 0, %s108
    %s112 = sphi 0, %s111
    %s128 = sphi 0, %s112
    %s132 = sphi 0, %s132
    %s134 = sphi 0, %s132
    %s135 = sphi 0, %s134
    %s149 = sphi 0, %s135
    %s157 = sphi 0, %s159
    %s160 = sphi 0, %s157
    %s161 = sphi 0, %s160
    %s177 = sphi 0, %s161
    %s185 = sphi 0, %s187
    %s188 = sphi 0, %s185
    %s189 = sphi 0, %s188
    %s205 = sphi 0, %s189
  $region4: #{double_conv.3} parent=0 // loop_header_branch
    %15 = sbr.rel (%p13) target = $region8
  $region5: #{double_conv.3} parent=0 // loop_body
    %s17 = ssub.s32 %s12, 1
    %s18 = ssub.s32 %s12, 2
    %s25 = sadd.s32 1, %s20
    %p26 = scmp.ge.s32.totalorder %s25, 2
    %s27 = scalar_select %p26, 0, %s25
    %s28 = sadd.s32 1, %s19
    %s29 = scalar_select %p26, %s28, %s19
    %p30 = scmp.ge.s32.totalorder %s29, 2
    %s31 = scalar_select %p30, 0, %s29
    %s32 = ssub.s32 %s19, %s31
    %s33 = ssub.s32 %s20, %s27
    %s34 = sor.u32 %s32, %s33
    %p35 = scmp.eq.s32.totalorder %s34, 0
    %s37 = sadd.s32 %s36, 1
    %s38 = scalar_select %p35, %s36, %s37
    %p41 = pneg %p35
    %p42 = scmp.eq.s32.totalorder %s12, 3
    %p43 = por %p41, %p42
    %p44 = scmp.ne.s32.totalorder %s36, %s39
    %p45 = scmp.eq.s32.totalorder %s12, 0
    %p46 = por %p44, %p45
    %p47 = scmp.ne.s32.totalorder %s36, %s39
    %p48 = scmp.eq.s32.totalorder %s17, 3
    %p49 = por %p47, %p48
    %p50 = scmp.ne.s32.totalorder %s39, %s40
    %p51 = scmp.eq.s32.totalorder %s17, 0
    %p52 = por %p50, %p51
    %p53 = scmp.ne.s32.totalorder %s39, %s40
    %p54 = scmp.eq.s32.totalorder %s18, 3
    %p55 = por %p53, %p54
    %p57 = scmp.ne.s32.totalorder %s40, %s56
    %p58 = scmp.eq.s32.totalorder %s18, 0
    %p59 = por %p57, %p58
    %s60 = smul.u32 %s20, 8
    %s61 = ssub.s32 %s60, 1
    %p62 = scmp.gt.s32.totalorder %s61, 0
    %s63 = scalar_select %p62, %s61, 0
    %s64 = smul.u32 %s27, 8
    %s65 = ssub.s32 %s64, 1
    %p66 = scmp.gt.s32.totalorder %s65, 0
    %s67 = scalar_select %p66, %s65, 0
    %s68 = ssub.s32 %s19, %s31
    %s69 = ssub.s32 %s63, %s67
    %s70 = sor.u32 %s68, %s69
    %p71 = scmp.eq.s32.totalorder %s70, 0
    %s73 = sadd.s32 %s72, 1
    %s74 = scalar_select %p71, %s72, %s73
    %p77 = pneg %p71
    %p78 = scmp.eq.s32.totalorder %s12, 3
    %p79 = por %p77, %p78
    %p80 = scmp.ne.s32.totalorder %s72, %s75
    %p81 = scmp.eq.s32.totalorder %s12, 0
    %p82 = por %p80, %p81
    %p83 = scmp.ne.s32.totalorder %s72, %s75
    %p84 = scmp.eq.s32.totalorder %s17, 3
    %p85 = por %p83, %p84
    %p86 = scmp.ne.s32.totalorder %s75, %s76
    %p87 = scmp.eq.s32.totalorder %s17, 0
    %p88 = por %p86, %p87
    %p89 = scmp.ne.s32.totalorder %s75, %s76
    %p90 = scmp.eq.s32.totalorder %s18, 3
    %p91 = por %p89, %p90
    %p93 = scmp.ne.s32.totalorder %s76, %s92
    %p94 = scmp.eq.s32.totalorder %s18, 0
    %p95 = por %p93, %p94
    %s96 = sadd.s32 %s20, 1
    %s97 = smul.u32 %s96, 8
    %p98 = scmp.lt.s32.totalorder %s97, 15
    %s99 = scalar_select %p98, %s97, 15
    %s100 = sadd.s32 %s27, 1
    %s101 = smul.u32 %s100, 8
    %p102 = scmp.lt.s32.totalorder %s101, 15
    %s103 = scalar_select %p102, %s101, 15
    %s104 = ssub.s32 %s19, %s31
    %s105 = ssub.s32 %s99, %s103
    %s106 = sor.u32 %s104, %s105
    %p107 = scmp.eq.s32.totalorder %s106, 0
    %s109 = sadd.s32 %s108, 1
    %s110 = scalar_select %p107, %s108, %s109
    %p113 = pneg %p107
    %p114 = scmp.eq.s32.totalorder %s12, 3
    %p115 = por %p113, %p114
    %p116 = scmp.ne.s32.totalorder %s108, %s111
    %p117 = scmp.eq.s32.totalorder %s12, 0
    %p118 = por %p116, %p117
    %p119 = scmp.ne.s32.totalorder %s108, %s111
    %p120 = scmp.eq.s32.totalorder %s17, 3
    %p121 = por %p119, %p120
    %p122 = scmp.ne.s32.totalorder %s111, %s112
    %p123 = scmp.eq.s32.totalorder %s17, 0
    %p124 = por %p122, %p123
    %p125 = scmp.ne.s32.totalorder %s111, %s112
    %p126 = scmp.eq.s32.totalorder %s18, 3
    %p127 = por %p125, %p126
    %p129 = scmp.ne.s32.totalorder %s112, %s128
    %p130 = scmp.eq.s32.totalorder %s18, 0
    %p131 = por %p129, %p130
    %s133 = sadd.s32 %s132, 1
    %p136 = scmp.eq.s32.totalorder %s12, 3
    %p137 = scmp.ne.s32.totalorder %s132, %s134
    %p138 = scmp.eq.s32.totalorder %s12, 0
    %p139 = por %p137, %p138
    %p140 = scmp.ne.s32.totalorder %s132, %s134
    %p141 = scmp.eq.s32.totalorder %s17, 3
    %p142 = por %p140, %p141
    %p143 = scmp.ne.s32.totalorder %s134, %s135
    %p144 = scmp.eq.s32.totalorder %s17, 0
    %p145 = por %p143, %p144
    %p146 = scmp.ne.s32.totalorder %s134, %s135
    %p147 = scmp.eq.s32.totalorder %s18, 3
    %p148 = por %p146, %p147
    %p150 = scmp.ne.s32.totalorder %s135, %s149
    %p151 = scmp.eq.s32.totalorder %s18, 0
    %p152 = por %p150, %p151
    %s153 = ssub.s32 %s19, %s31
    %s154 = ssub.s32 %s20, %s27
    %s155 = sor.u32 %s153, %s154
    %p156 = scmp.eq.s32.totalorder %s155, 0
    %s158 = sadd.s32 %s157, 1
    %s159 = scalar_select %p156, %s157, %s158
    %p162 = pneg %p156
    %p163 = scmp.eq.s32.totalorder %s12, 3
    %p164 = por %p162, %p163
    %p165 = scmp.ne.s32.totalorder %s157, %s160
    %p166 = scmp.eq.s32.totalorder %s12, 0
    %p167 = por %p165, %p166
    %p168 = scmp.ne.s32.totalorder %s157, %s160
    %p169 = scmp.eq.s32.totalorder %s17, 3
    %p170 = por %p168, %p169
    %p171 = scmp.ne.s32.totalorder %s160, %s161
    %p172 = scmp.eq.s32.totalorder %s17, 0
    %p173 = por %p171, %p172
    %p174 = scmp.ne.s32.totalorder %s160, %s161
    %p175 = scmp.eq.s32.totalorder %s18, 3
    %p176 = por %p174, %p175
    %p178 = scmp.ne.s32.totalorder %s161, %s177
    %p179 = scmp.eq.s32.totalorder %s18, 0
    %p180 = por %p178, %p179
    %s181 = ssub.s32 %s19, %s31
    %s182 = ssub.s32 %s20, %s27
    %s183 = sor.u32 %s181, %s182
    %p184 = scmp.eq.s32.totalorder %s183, 0
    %s186 = sadd.s32 %s185, 1
    %s187 = scalar_select %p184, %s185, %s186
    %p190 = pneg %p184
    %p191 = scmp.eq.s32.totalorder %s12, 3
    %p192 = por %p190, %p191
    %p193 = scmp.ne.s32.totalorder %s185, %s188
    %p194 = scmp.eq.s32.totalorder %s12, 0
    %p195 = por %p193, %p194
    %p196 = scmp.ne.s32.totalorder %s185, %s188
    %p197 = scmp.eq.s32.totalorder %s17, 3
    %p198 = por %p196, %p197
    %p199 = scmp.ne.s32.totalorder %s188, %s189
    %p200 = scmp.eq.s32.totalorder %s17, 0
    %p201 = por %p199, %p200
    %p202 = scmp.ne.s32.totalorder %s188, %s189
    %p203 = scmp.eq.s32.totalorder %s18, 3
    %p204 = por %p202, %p203
    %p206 = scmp.ne.s32.totalorder %s189, %s205
    %p207 = scmp.eq.s32.totalorder %s18, 0
    %p208 = por %p206, %p207
    %p209 = scmp.le.s32.totalorder 1, %s12
    %p210 = scmp.lt.s32.totalorder %s12, 5
    %p211 = pnand %p209, %p210
    %p212 = pneg %p211
    // Predicated region
    $region9: #{double_conv.3} parent=5 // pred_check
      _
    $region10: #{double_conv.3} parent=5 // pred_check_branch
      %214 = sbr.rel (%p211) target = $region12
    $region11: #{double_conv.3} parent=5 // pred_region
      %s215 = ssub.s32 %s12, 1
      // Predicated region
      $region13: #{double_conv.3} parent=11 // pred_check
        %p216 = pneg %p145
      $region14: #{double_conv.3} parent=11 // pred_check_branch
        %218 = sbr.rel (%p216) target = $region16
      $region15: #{double_conv.3} parent=11 // pred_region
        _
      $region16: #{double_conv.3} parent=11 // pred_fallthru
        _
    $region12: #{double_conv.3} parent=5 // pred_fallthru
      _
    %p219 = scmp.lt.s32.totalorder %s12, 4
    // Predicated region
    $region17: #{double_conv.3} parent=5 // pred_check
      %p220 = pneg %p219
    $region18: #{double_conv.3} parent=5 // pred_check_branch
      %222 = sbr.rel (%p220) target = $region20
    $region19: #{double_conv.3} parent=5 // pred_region
      // Predicated region
      $region21: #{double_conv.3} parent=19 // pred_check
        %p223 = pneg %p46
      $region22: #{double_conv.3} parent=19 // pred_check_branch
        %225 = sbr.rel (%p223) target = $region24
      $region23: #{double_conv.3} parent=19 // pred_region
        %s226 = smul.u32 8, %s20
        %p227 = scmp.lt.s32.totalorder %s19, 1
        %s228 = scalar_select %p227, %s19, 1
        %p229 = scmp.lt.s32.totalorder %s226, 15
        %s230 = scalar_select %p229, %s226, 15
        %s231 = smul.addr %s230, 2
        %s232 = smul.addr %s228, 32
        %s233 = sadd.s32 %s231, %s232
        %s234 = smul.addr %s233, 4
        %s235 = scalar_lea.vmem %s0, %s234
        %s236 = smul.u32 8, %s20
      $region24: #{double_conv.3} parent=19 // pred_fallthru
        _
      // Predicated region
      $region25: #{double_conv.3} parent=19 // pred_check
        %p237 = pneg %p82
      $region26: #{double_conv.3} parent=19 // pred_check_branch
        %239 = sbr.rel (%p237) target = $region28
      $region27: #{double_conv.3} parent=19 // pred_region
        %s240 = smul.u32 %s20, 8
        %s241 = ssub.s32 %s240, 1
        %p242 = scmp.gt.s32.totalorder %s241, 0
        %s243 = scalar_select %p242, %s241, 0
        %p244 = scmp.lt.s32.totalorder %s19, 1
        %s245 = scalar_select %p244, %s19, 1
        %p246 = scmp.lt.s32.totalorder %s243, 15
        %s247 = scalar_select %p246, %s243, 15
        %s248 = smul.addr %s247, 2
        %s249 = smul.addr %s245, 32
        %s250 = sadd.s32 %s248, %s249
        %s251 = smul.addr %s250, 4
        %s252 = scalar_lea.vmem %s1, %s251
        %s253 = smul.u32 %s20, 8
        %s254 = ssub.s32 %s253, 1
        %p255 = scmp.gt.s32.totalorder %s254, 0
        %s256 = scalar_select %p255, %s254, 0
      $region28: #{double_conv.3} parent=19 // pred_fallthru
        _
      // Predicated region
      $region29: #{double_conv.3} parent=19 // pred_check
        %p257 = pneg %p118
      $region30: #{double_conv.3} parent=19 // pred_check_branch
        %259 = sbr.rel (%p257) target = $region32
      $region31: #{double_conv.3} parent=19 // pred_region
        %s260 = sadd.s32 %s20, 1
        %s261 = smul.u32 %s260, 8
        %p262 = scmp.lt.s32.totalorder %s261, 15
        %s263 = scalar_select %p262, %s261, 15
        %p264 = scmp.lt.s32.totalorder %s19, 1
        %s265 = scalar_select %p264, %s19, 1
        %p266 = scmp.lt.s32.totalorder %s263, 15
        %s267 = scalar_select %p266, %s263, 15
        %s268 = smul.addr %s267, 2
        %s269 = smul.addr %s265, 32
        %s270 = sadd.s32 %s268, %s269
        %s271 = smul.addr %s270, 4
        %s272 = scalar_lea.vmem %s2, %s271
        %s273 = sadd.s32 %s20, 1
        %s274 = smul.u32 %s273, 8
        %p275 = scmp.lt.s32.totalorder %s274, 15
        %s276 = scalar_select %p275, %s274, 15
      $region32: #{double_conv.3} parent=19 // pred_fallthru
        _
    $region20: #{double_conv.3} parent=5 // pred_fallthru
      _
    %p277 = scmp.le.s32.totalorder 1, %s12
    %p278 = scmp.lt.s32.totalorder %s12, 5
    %p279 = pnand %p277, %p278
    %p280 = pneg %p279
    // Predicated region
    $region33: #{double_conv.3} parent=5 // pred_check
      _
    $region34: #{double_conv.3} parent=5 // pred_check_branch
      %282 = sbr.rel (%p279) target = $region36
    $region35: #{double_conv.3} parent=5 // pred_region
      %s283 = ssub.s32 %s12, 1
      %s284 = smul.u32 8, %s22
      %p285 = scmp.lt.s32.totalorder %s21, 1
      %s286 = scalar_select %p285, %s21, 1
      %p287 = scmp.lt.s32.totalorder %s284, 15
      %s288 = scalar_select %p287, %s284, 15
      %s289 = smul.addr %s288, 2
      %s290 = smul.addr %s286, 32
      %s291 = sadd.s32 %s289, %s290
      %s292 = smul.addr %s291, 4
      %s293 = scalar_lea.vmem %s0, %s292
      %p294 = pneg %p52
      %p295 = pneg %p49
      %s296 = smul.u32 %s22, 8
      %s297 = ssub.s32 %s296, 1
      %p298 = scmp.gt.s32.totalorder %s297, 0
      %s299 = scalar_select %p298, %s297, 0
      %p300 = scmp.lt.s32.totalorder %s21, 1
      %s301 = scalar_select %p300, %s21, 1
      %p302 = scmp.lt.s32.totalorder %s299, 15
      %s303 = scalar_select %p302, %s299, 15
      %s304 = smul.addr %s303, 2
      %s305 = smul.addr %s301, 32
      %s306 = sadd.s32 %s304, %s305
      %s307 = smul.addr %s306, 4
      %s308 = scalar_lea.vmem %s1, %s307
      %p309 = pneg %p88
      %p310 = pneg %p85
      %s311 = sadd.s32 %s22, 1
      %s312 = smul.u32 %s311, 8
      %p313 = scmp.lt.s32.totalorder %s312, 15
      %s314 = scalar_select %p313, %s312, 15
      %p315 = scmp.lt.s32.totalorder %s21, 1
      %s316 = scalar_select %p315, %s21, 1
      %p317 = scmp.lt.s32.totalorder %s314, 15
      %s318 = scalar_select %p317, %s314, 15
      %s319 = smul.addr %s318, 2
      %s320 = smul.addr %s316, 32
      %s321 = sadd.s32 %s319, %s320
      %s322 = smul.addr %s321, 4
      %s323 = scalar_lea.vmem %s2, %s322
      %p324 = pneg %p124
      %p325 = pneg %p121
      %p326 = pneg %p145
      %p327 = pneg %p142
      %p328 = pneg %p173
      %p329 = pneg %p170
      %s330 = smul.u32 8, %s22
      %p331 = scmp.lt.s32.totalorder %s21, 1
      %s332 = scalar_select %p331, %s21, 1
      %p333 = scmp.lt.s32.totalorder %s330, 15
      %s334 = scalar_select %p333, %s330, 15
      %s335 = smul.addr %s334, 2
      %s336 = smul.addr %s332, 32
      %s337 = sadd.s32 %s335, %s336
      %s338 = smul.addr %s337, 4
      %s339 = scalar_lea.vmem %s4, %s338
      %p340 = pneg %p201
      %p341 = pneg %p198
      %p342 = scmp.lt.s32.totalorder %s21, 1
      %s343 = scalar_select %p342, %s21, 1
      %p344 = scmp.lt.s32.totalorder %s22, 1
      %s345 = scalar_select %p344, %s22, 1
      %s346 = smul.addr %s343, 2
      %s347 = sadd.s32 %s345, %s346
      %s348 = smul.addr %s347, 2
      %s349 = scalar_lea.vmem %s5, %s348
      %s350 = smul.u32 8, %s22
      %p351 = scmp.lt.s32.totalorder %s21, 1
      %s352 = scalar_select %p351, %s21, 1
      %p353 = scmp.lt.s32.totalorder %s350, 15
      %s354 = scalar_select %p353, %s350, 15
      %s355 = smul.addr %s354, 2
      %s356 = smul.addr %s352, 32
      %s357 = sadd.s32 %s355, %s356
      %s358 = smul.addr %s357, 4
      %s359 = scalar_lea.vmem %s0, %s358
      %s360 = smul.u32 8, %s22
      %s361 = smul.u32 %s22, 8
      %s362 = ssub.s32 %s361, 1
      %p363 = scmp.gt.s32.totalorder %s362, 0
      %s364 = scalar_select %p363, %s362, 0
      %p365 = scmp.lt.s32.totalorder %s21, 1
      %s366 = scalar_select %p365, %s21, 1
      %p367 = scmp.lt.s32.totalorder %s364, 15
      %s368 = scalar_select %p367, %s364, 15
      %s369 = smul.addr %s368, 2
      %s370 = smul.addr %s366, 32
      %s371 = sadd.s32 %s369, %s370
      %s372 = smul.addr %s371, 4
      %s373 = scalar_lea.vmem %s1, %s372
      %s374 = smul.u32 %s22, 8
      %s375 = ssub.s32 %s374, 1
      %p376 = scmp.gt.s32.totalorder %s375, 0
      %s377 = scalar_select %p376, %s375, 0
      %s378 = sadd.s32 %s22, 1
      %s379 = smul.u32 %s378, 8
      %p380 = scmp.lt.s32.totalorder %s379, 15
      %s381 = scalar_select %p380, %s379, 15
      %p382 = scmp.lt.s32.totalorder %s21, 1
      %s383 = scalar_select %p382, %s21, 1
      %p384 = scmp.lt.s32.totalorder %s381, 15
      %s385 = scalar_select %p384, %s381, 15
      %s386 = smul.addr %s385, 2
      %s387 = smul.addr %s383, 32
      %s388 = sadd.s32 %s386, %s387
      %s389 = smul.addr %s388, 4
      %s390 = scalar_lea.vmem %s2, %s389
      %s391 = sadd.s32 %s22, 1
      %s392 = smul.u32 %s391, 8
      %p393 = scmp.lt.s32.totalorder %s392, 15
      %s394 = scalar_select %p393, %s392, 15
      %s395 = smul.u32 8, %s22
      %p396 = scmp.lt.s32.totalorder %s21, 1
      %s397 = scalar_select %p396, %s21, 1
      %p398 = scmp.lt.s32.totalorder %s395, 15
      %s399 = scalar_select %p398, %s395, 15
      %s400 = smul.addr %s399, 2
      %s401 = smul.addr %s397, 32
      %s402 = sadd.s32 %s400, %s401
      %s403 = smul.addr %s402, 4
      %s404 = scalar_lea.vmem %s4, %s403
      %s405 = smul.u32 8, %s22
      %p406 = scmp.lt.s32.totalorder %s21, 1
      %s407 = scalar_select %p406, %s21, 1
      %p408 = scmp.lt.s32.totalorder %s22, 1
      %s409 = scalar_select %p408, %s22, 1
      %s410 = smul.addr %s407, 2
      %s411 = sadd.s32 %s409, %s410
      %s412 = smul.addr %s411, 2
      %s413 = scalar_lea.vmem %s5, %s412
      %p415 = scmp.gt.s32.totalorder %s22, 0
      %s416 = scalar_select %p415, 1, 0
      %s417 = scvt.s32.f32 %s416
      %p419 = scmp.ne.f32.partialorder %s417, %s417
      %s420 = sshrl.u32 %s417, 16
      %s421 = sand.u32 %s420, 1
      %s422 = sadd.s32 32767, %s421
      %s423 = sadd.s32 %s417, %s422
      %s424 = sand.u32 %s423, 4294901760
      %s425 = scalar_select %p419, 2143289344, %s424
      %s427 = sshrl.u32 %s425, 16
      %p428 = scmp.lt.s32.totalorder %s22, 1
      %s429 = scalar_select %p428, 1, 0
      %s430 = scvt.s32.f32 %s429
      %p432 = scmp.ne.f32.partialorder %s430, %s430
      %s433 = sshrl.u32 %s430, 16
      %s434 = sand.u32 %s433, 1
      %s435 = sadd.s32 32767, %s434
      %s436 = sadd.s32 %s430, %s435
      %s437 = sand.u32 %s436, 4294901760
      %s438 = scalar_select %p432, 2143289344, %s437
      %s440 = sshrl.u32 %s438, 16
      %v441 = vld [vmem:[%s373] sm:$0xf]
      %v442 = vld [vmem:[%s373 + $0x4] sm:$0xf]
      %s443 = sshll.u32 %s427, 16
      %s444 = sor.u32 %s427, %s443
      %v445 = vstv %s444
      %v447 = vmul.bf16 %v441, %v445
      %v448 = vmul.bf16 %v442, %v445
      %v449 = vld [vmem:[%s359] sm:$0xf]
      %v450 = vld [vmem:[%s359 + $0x4] sm:$0xf]
      %v451 = vld [vmem:[%s359 + $0x8] sm:$0xf]
      %v452 = vld [vmem:[%s359 + $0xc] sm:$0xf]
      %v453 = vld [vmem:[%s359 + $0x10] sm:$0xf]
      %v454 = vld [vmem:[%s359 + $0x14] sm:$0xf]
      %v455 = vld [vmem:[%s359 + $0x18] sm:$0xf]
      %v456 = vld [vmem:[%s359 + $0x1c] sm:$0xf]
      %v457 = vld [vmem:[%s359 + $0x20] sm:$0xf]
      %v458 = vld [vmem:[%s359 + $0x24] sm:$0xf]
      %v459 = vld [vmem:[%s359 + $0x28] sm:$0xf]
      %v460 = vld [vmem:[%s359 + $0x2c] sm:$0xf]
      %v461 = vld [vmem:[%s359 + $0x30] sm:$0xf]
      %v462 = vld [vmem:[%s359 + $0x34] sm:$0xf]
      %v463 = vld [vmem:[%s359 + $0x38] sm:$0xf]
      %v464 = vld [vmem:[%s359 + $0x3c] sm:$0xf]
      %v465 = vld [vmem:[%s390] sm:$0xf]
      %v466 = vld [vmem:[%s390 + $0x4] sm:$0xf]
      %s467 = sshll.u32 %s440, 16
      %s468 = sor.u32 %s440, %s467
      %v469 = vstv %s468
      %v471 = vmul.bf16 %v465, %v469
      %v472 = vmul.bf16 %v466, %v469
      %v473 = vld [vmem:[%s3] sm:$0xf]
      %v474 = vld [vmem:[%s3 + $0x4] sm:$0xf]
      %v475 = vld [vmem:[%s3 + $0x8] sm:$0xf]
      %v476 = vld [vmem:[%s3 + $0xc] sm:$0xf]
      %v477 = vld [vmem:[%s3 + $0x10] sm:$0x3]
      %v494 = vunpack.c.l.b16 %v447
      %v495 = vunpack.c.l.b16 %v448
      %v496 = vunpack.c.l.b16 %v449
      %v497 = vunpack.c.l.b16 %v450
      %v498 = vunpack.c.l.b16 %v451
      %v499 = vunpack.c.l.b16 %v452
      %v500 = vunpack.c.l.b16 %v453
      %v501 = vunpack.c.l.b16 %v454
      %v502 = vunpack.c.l.b16 %v455
      %v503 = vunpack.c.l.b16 %v456
      %v504 = vunpack.c.l.b16 %v457
      %v505 = vunpack.c.l.b16 %v458
      %v506 = vunpack.c.l.b16 %v459
      %v507 = vunpack.c.l.b16 %v460
      %v508 = vunpack.c.l.b16 %v461
      %v509 = vunpack.c.l.b16 %v462
      %v510 = vpack.c.b16 %v495, %v494
      %v511 = vpack.c.b16 %v497, %v496
      %v512 = vpack.c.b16 %v499, %v498
      %v513 = vpack.c.b16 %v501, %v500
      %v514 = vpack.c.b16 %v503, %v502
      %v515 = vpack.c.b16 %v505, %v504
      %v516 = vpack.c.b16 %v507, %v506
      %v517 = vpack.c.b16 %v509, %v508
      %v519 = vshrl.u32 %v510, 16
      %v521 = vrot.slane %v519, 7
      %v522 = vshll.u32 %v510, 16
      %v524 = vor.u32 %v521, %v522
      %v526 = vshrl.u32 %v511, 16
      %v528 = vrot.slane %v526, 7
      %v529 = vshll.u32 %v511, 16
      %v531 = vor.u32 %v528, %v529
      %v533 = vshrl.u32 %v512, 16
      %v535 = vrot.slane %v533, 7
      %v536 = vshll.u32 %v512, 16
      %v538 = vor.u32 %v535, %v536
      %v540 = vshrl.u32 %v513, 16
      %v542 = vrot.slane %v540, 7
      %v543 = vshll.u32 %v513, 16
      %v545 = vor.u32 %v542, %v543
      %v547 = vshrl.u32 %v514, 16
      %v549 = vrot.slane %v547, 7
      %v550 = vshll.u32 %v514, 16
      %v552 = vor.u32 %v549, %v550
      %v554 = vshrl.u32 %v515, 16
      %v556 = vrot.slane %v554, 7
      %v557 = vshll.u32 %v515, 16
      %v559 = vor.u32 %v556, %v557
      %v561 = vshrl.u32 %v516, 16
      %v563 = vrot.slane %v561, 7
      %v564 = vshll.u32 %v516, 16
      %v566 = vor.u32 %v563, %v564
      %v568 = vshrl.u32 %v517, 16
      %v570 = vrot.slane %v568, 7
      %v571 = vshll.u32 %v517, 16
      %v573 = vor.u32 %v570, %v571
      %vm582 = vcmask 1040384
      %vm583 = vsmask.f32 256
      %vm584 = vmand %vm582, %vm583
      %v585 = vsel %vm584, 0, %v524
      %v586 = vsel %vm584, 0, %v531
      %v587 = vsel %vm584, 0, %v538
      %v588 = vsel %vm584, 0, %v545
      %v589 = vsel %vm584, 0, %v552
      %v590 = vsel %vm584, 0, %v559
      %v591 = vsel %vm584, 0, %v566
      %v592 = vsel %vm584, 0, %v573
      %v593 = vrot.slane %v522, 1
      %v594 = vor.u32 %v519, %v593
      %v595 = vrot.slane %v529, 1
      %v596 = vor.u32 %v526, %v595
      %v597 = vrot.slane %v536, 1
      %v598 = vor.u32 %v533, %v597
      %v599 = vrot.slane %v543, 1
      %v600 = vor.u32 %v540, %v599
      %v601 = vrot.slane %v550, 1
      %v602 = vor.u32 %v547, %v601
      %v603 = vrot.slane %v557, 1
      %v604 = vor.u32 %v554, %v603
      %v605 = vrot.slane %v564, 1
      %v606 = vor.u32 %v561, %v605
      %v607 = vrot.slane %v571, 1
      %v608 = vor.u32 %v568, %v607
      %vm617 = vcmask 1047552
      %vm618 = vsmask.f32 7424
      %vm619 = vmand %vm617, %vm618
      %v620 = vsel %vm619, %v594, 0
      %v621 = vsel %vm619, %v596, 0
      %v622 = vsel %vm619, %v598, 0
      %v623 = vsel %vm619, %v600, 0
      %v624 = vsel %vm619, %v602, 0
      %v625 = vsel %vm619, %v604, 0
      %v626 = vsel %vm619, %v606, 0
      %v627 = vsel %vm619, %v608, 0
      %v630 = vunpack.c.l.b16 %v463
      %v631 = vunpack.c.l.b16 %v464
      %v632 = vpack.c.b16 %v631, %v630
      %v634 = vshrl.u32 %v632, 16
      %v636 = vrot.slane %v634, 7
      %v637 = vshll.u32 %v632, 16
      %v639 = vor.u32 %v636, %v637
      %v641 = vsel %vm584, 0, %v639
      %v642 = vrot.slane %v637, 1
      %v643 = vor.u32 %v634, %v642
      %v645 = vsel %vm619, %v643, 0
      %v648 = vunpack.c.l.b16 %v471
      %v649 = vunpack.c.l.b16 %v472
      %v650 = vpack.c.b16 %v649, %v648
      %v652 = vshrl.u32 %v650, 16
      %v654 = vrot.slane %v652, 7
      %v655 = vshll.u32 %v650, 16
      %v657 = vor.u32 %v654, %v655
      %v659 = vsel %vm584, 0, %v657
      %v660 = vrot.slane %v655, 1
      %v661 = vor.u32 %v652, %v660
      %v663 = vsel %vm619, %v661, 0
      %664 = vrot.lane.b32.xlu0 %v510, 4
      %v665 = vpop.permute.xlu0 %664
      %666 = vrot.lane.b32.xlu0 %v511, 4
      %v667 = vpop.permute.xlu0 %666
      %668 = vrot.lane.b32.xlu0 %v512, 4
      %v669 = vpop.permute.xlu0 %668
      %670 = vrot.lane.b32.xlu0 %v513, 4
      %v671 = vpop.permute.xlu0 %670
      %672 = vrot.lane.b32.xlu0 %v514, 4
      %v673 = vpop.permute.xlu0 %672
      %674 = vrot.lane.b32.xlu0 %v515, 4
      %v675 = vpop.permute.xlu0 %674
      %676 = vrot.lane.b32.xlu0 %v516, 4
      %v677 = vpop.permute.xlu0 %676
      %678 = vrot.lane.b32.xlu0 %v517, 4
      %v679 = vpop.permute.xlu0 %678
      %688 = vrot.lane.b32.xlu0 %v620, 8
      %v689 = vpop.permute.xlu0 %688
      %690 = vrot.lane.b32.xlu0 %v621, 8
      %v691 = vpop.permute.xlu0 %690
      %692 = vrot.lane.b32.xlu0 %v622, 8
      %v693 = vpop.permute.xlu0 %692
      %694 = vrot.lane.b32.xlu0 %v623, 8
      %v695 = vpop.permute.xlu0 %694
      %696 = vrot.lane.b32.xlu0 %v624, 8
      %v697 = vpop.permute.xlu0 %696
      %698 = vrot.lane.b32.xlu0 %v625, 8
      %v699 = vpop.permute.xlu0 %698
      %700 = vrot.lane.b32.xlu0 %v626, 8
      %v701 = vpop.permute.xlu0 %700
      %702 = vrot.lane.b32.xlu0 %v627, 8
      %v703 = vpop.permute.xlu0 %702
      %712 = vrot.lane.b32.xlu0 %v586, 12
      %v713 = vpop.permute.xlu0 %712
      %714 = vrot.lane.b32.xlu0 %v587, 12
      %v715 = vpop.permute.xlu0 %714
      %716 = vrot.lane.b32.xlu0 %v588, 12
      %v717 = vpop.permute.xlu0 %716
      %718 = vrot.lane.b32.xlu0 %v589, 12
      %v719 = vpop.permute.xlu0 %718
      %720 = vrot.lane.b32.xlu0 %v590, 12
      %v721 = vpop.permute.xlu0 %720
      %722 = vrot.lane.b32.xlu0 %v591, 12
      %v723 = vpop.permute.xlu0 %722
      %724 = vrot.lane.b32.xlu0 %v592, 12
      %v725 = vpop.permute.xlu0 %724
      %726 = vrot.lane.b32.xlu0 %v641, 12
      %v727 = vpop.permute.xlu0 %726
      %728 = vrot.lane.b32.xlu0 %v511, 16
      %v729 = vpop.permute.xlu0 %728
      %730 = vrot.lane.b32.xlu0 %v512, 16
      %v731 = vpop.permute.xlu0 %730
      %732 = vrot.lane.b32.xlu0 %v513, 16
      %v733 = vpop.permute.xlu0 %732
      %734 = vrot.lane.b32.xlu0 %v514, 16
      %v735 = vpop.permute.xlu0 %734
      %736 = vrot.lane.b32.xlu0 %v515, 16
      %v737 = vpop.permute.xlu0 %736
      %738 = vrot.lane.b32.xlu0 %v516, 16
      %v739 = vpop.permute.xlu0 %738
      %740 = vrot.lane.b32.xlu0 %v517, 16
      %v741 = vpop.permute.xlu0 %740
      %742 = vrot.lane.b32.xlu0 %v632, 16
      %v743 = vpop.permute.xlu0 %742
      %745 = vrot.lane.b32.xlu0 %v621, 20
      %v746 = vpop.permute.xlu0 %745
      %747 = vrot.lane.b32.xlu0 %v622, 20
      %v748 = vpop.permute.xlu0 %747
      %749 = vrot.lane.b32.xlu0 %v623, 20
      %v750 = vpop.permute.xlu0 %749
      %751 = vrot.lane.b32.xlu0 %v624, 20
      %v752 = vpop.permute.xlu0 %751
      %753 = vrot.lane.b32.xlu0 %v625, 20
      %v754 = vpop.permute.xlu0 %753
      %755 = vrot.lane.b32.xlu0 %v626, 20
      %v756 = vpop.permute.xlu0 %755
      %757 = vrot.lane.b32.xlu0 %v627, 20
      %v758 = vpop.permute.xlu0 %757
      %759 = vrot.lane.b32.xlu0 %v645, 20
      %v760 = vpop.permute.xlu0 %759
      %762 = vrot.lane.b32.xlu0 %v587, 24
      %v763 = vpop.permute.xlu0 %762
      %764 = vrot.lane.b32.xlu0 %v588, 24
      %v765 = vpop.permute.xlu0 %764
      %766 = vrot.lane.b32.xlu0 %v589, 24
      %v767 = vpop.permute.xlu0 %766
      %768 = vrot.lane.b32.xlu0 %v590, 24
      %v769 = vpop.permute.xlu0 %768
      %770 = vrot.lane.b32.xlu0 %v591, 24
      %v771 = vpop.permute.xlu0 %770
      %772 = vrot.lane.b32.xlu0 %v592, 24
      %v773 = vpop.permute.xlu0 %772
      %774 = vrot.lane.b32.xlu0 %v641, 24
      %v775 = vpop.permute.xlu0 %774
      %776 = vrot.lane.b32.xlu0 %v659, 24
      %v777 = vpop.permute.xlu0 %776
      %778 = vrot.lane.b32.xlu0 %v512, 28
      %v779 = vpop.permute.xlu0 %778
      %780 = vrot.lane.b32.xlu0 %v513, 28
      %v781 = vpop.permute.xlu0 %780
      %782 = vrot.lane.b32.xlu0 %v514, 28
      %v783 = vpop.permute.xlu0 %782
      %784 = vrot.lane.b32.xlu0 %v515, 28
      %v785 = vpop.permute.xlu0 %784
      %786 = vrot.lane.b32.xlu0 %v516, 28
      %v787 = vpop.permute.xlu0 %786
      %788 = vrot.lane.b32.xlu0 %v517, 28
      %v789 = vpop.permute.xlu0 %788
      %790 = vrot.lane.b32.xlu0 %v632, 28
      %v791 = vpop.permute.xlu0 %790
      %792 = vrot.lane.b32.xlu0 %v650, 28
      %v793 = vpop.permute.xlu0 %792
      %795 = vrot.lane.b32.xlu0 %v622, 32
      %v796 = vpop.permute.xlu0 %795
      %797 = vrot.lane.b32.xlu0 %v623, 32
      %v798 = vpop.permute.xlu0 %797
      %799 = vrot.lane.b32.xlu0 %v624, 32
      %v800 = vpop.permute.xlu0 %799
      %801 = vrot.lane.b32.xlu0 %v625, 32
      %v802 = vpop.permute.xlu0 %801
      %803 = vrot.lane.b32.xlu0 %v626, 32
      %v804 = vpop.permute.xlu0 %803
      %805 = vrot.lane.b32.xlu0 %v627, 32
      %v806 = vpop.permute.xlu0 %805
      %807 = vrot.lane.b32.xlu0 %v645, 32
      %v808 = vpop.permute.xlu0 %807
      %809 = vrot.lane.b32.xlu0 %v663, 32
      %v810 = vpop.permute.xlu0 %809
      %vm811 = vcmask 31744
      %v814 = vsel %vm811, %v585, %v665
      %v817 = vsel %vm811, %v586, %v667
      %v820 = vsel %vm811, %v587, %v669
      %v823 = vsel %vm811, %v588, %v671
      %v826 = vsel %vm811, %v589, %v673
      %v829 = vsel %vm811, %v590, %v675
      %v832 = vsel %vm811, %v591, %v677
      %v835 = vsel %vm811, %v592, %v679
      %vm836 = vcmask 64512
      %v838 = vsel %vm836, %v814, %v689
      %v840 = vsel %vm836, %v817, %v691
      %v842 = vsel %vm836, %v820, %v693
      %v844 = vsel %vm836, %v823, %v695
      %v846 = vsel %vm836, %v826, %v697
      %v848 = vsel %vm836, %v829, %v699
      %v850 = vsel %vm836, %v832, %v701
      %v852 = vsel %vm836, %v835, %v703
      %vm853 = vcmask 97280
      %v855 = vsel %vm853, %v838, %v713
      %v857 = vsel %vm853, %v840, %v715
      %v859 = vsel %vm853, %v842, %v717
      %v861 = vsel %vm853, %v844, %v719
      %v863 = vsel %vm853, %v846, %v721
      %v865 = vsel %vm853, %v848, %v723
      %v867 = vsel %vm853, %v850, %v725
      %v869 = vsel %vm853, %v852, %v727
      %vm870 = vcmask 130048
      %v872 = vsel %vm870, %v855, %v729
      %v874 = vsel %vm870, %v857, %v731
      %v876 = vsel %vm870, %v859, %v733
      %v878 = vsel %vm870, %v861, %v735
      %v880 = vsel %vm870, %v863, %v737
      %v882 = vsel %vm870, %v865, %v739
      %v884 = vsel %vm870, %v867, %v741
      %v886 = vsel %vm870, %v869, %v743
      %vm887 = vcmask 162816
      %v889 = vsel %vm887, %v872, %v746
      %v891 = vsel %vm887, %v874, %v748
      %v893 = vsel %vm887, %v876, %v750
      %v895 = vsel %vm887, %v878, %v752
      %v897 = vsel %vm887, %v880, %v754
      %v899 = vsel %vm887, %v882, %v756
      %v901 = vsel %vm887, %v884, %v758
      %v903 = vsel %vm887, %v886, %v760
      %vm904 = vcmask 195584
      %v906 = vsel %vm904, %v889, %v763
      %v908 = vsel %vm904, %v891, %v765
      %v910 = vsel %vm904, %v893, %v767
      %v912 = vsel %vm904, %v895, %v769
      %v914 = vsel %vm904, %v897, %v771
      %v916 = vsel %vm904, %v899, %v773
      %v918 = vsel %vm904, %v901, %v775
      %v920 = vsel %vm904, %v903, %v777
      %vm921 = vcmask 228352
      %v923 = vsel %vm921, %v906, %v779
      %v925 = vsel %vm921, %v908, %v781
      %v927 = vsel %vm921, %v910, %v783
      %v929 = vsel %vm921, %v912, %v785
      %v931 = vsel %vm921, %v914, %v787
      %v933 = vsel %vm921, %v916, %v789
      %v935 = vsel %vm921, %v918, %v791
      %v937 = vsel %vm921, %v920, %v793
      %vm938 = vcmask 261120
      %v940 = vsel %vm938, %v923, %v796
      %v942 = vsel %vm938, %v925, %v798
      %v944 = vsel %vm938, %v927, %v800
      %v946 = vsel %vm938, %v929, %v802
      %v948 = vsel %vm938, %v931, %v804
      %v950 = vsel %vm938, %v933, %v806
      %v952 = vsel %vm938, %v935, %v808
      %v954 = vsel %vm938, %v937, %v810
      %v960 = vunpack.c.l.b16 %v473
      %v961 = vunpack.c.l.b16 %v474
      %v962 = vunpack.c.l.b16 %v475
      %v963 = vunpack.c.l.b16 %v476
      %v964 = vunpack.c.l.b16 %v477
      %v965 = vpack.c.b16 %v961, %v960
      %v966 = vpack.c.b16 %v963, %v962
      %v967 = vpack.c.b16 %v964, %v964
      %vm970 = vcmask 293888
      %v971 = vsel %vm970, %v940, 0
      %v973 = vsel %vm970, %v942, 0
      %v975 = vsel %vm970, %v944, 0
      %v977 = vsel %vm970, %v946, 0
      %v979 = vsel %vm970, %v948, 0
      %v981 = vsel %vm970, %v950, 0
      %v983 = vsel %vm970, %v952, 0
      %v985 = vsel %vm970, %v954, 0
      %vm987 = vcmask 1041408
      %v989 = vsel %vm987, %v967, 0
      %991 = vmatprep.subr.bf16.mxu0 0
      %992 = vmatpush1.bf16.msra.mxu0 %v965
      %993 = vmatprep.subr.bf16.mxu0 0
      %994 = vmatpush1.bf16.msra.mxu0 %v966
      %995 = vmatprep.subr.bf16.mxu0 0
      %996 = vmatpush1.bf16.msra.mxu0 %v989
      %997 = vmatprep.subr.bf16.mxu0 0
      %998 = vmatpush1.bf16.msra.mxu0 0
      %999 = vmatprep.subr.bf16.mxu0 0
      %1000 = vmatpush1.bf16.msra.mxu0 0
      %1001 = vmatprep.subr.bf16.mxu0 0
      %1002 = vmatpush1.bf16.msra.mxu0 0
      %1003 = vmatprep.subr.bf16.mxu0 0
      %1004 = vmatpush1.bf16.msra.mxu0 0
      %1005 = vmatprep.subr.bf16.mxu0 0
      %1006 = vmatpush1.bf16.msra.mxu0 0
      %1007 = vmatprep.subr.bf16.mxu0 0
      %1008 = vmatpush1.bf16.msra.mxu0 0
      %1009 = vmatprep.subr.bf16.mxu0 0
      %1010 = vmatpush1.bf16.msra.mxu0 0
      %1011 = vmatprep.subr.bf16.mxu0 0
      %1012 = vmatpush1.bf16.msra.mxu0 0
      %1013 = vmatprep.subr.bf16.mxu0 0
      %1014 = vmatpush1.bf16.msra.mxu0 0
      %1015 = vmatprep.subr.bf16.mxu0 0
      %1016 = vmatpush1.bf16.msra.mxu0 0
      %1017 = vmatprep.subr.bf16.mxu0 0
      %1018 = vmatpush1.bf16.msra.mxu0 0
      %1019 = vmatprep.subr.bf16.mxu0 0
      %1020 = vmatpush1.bf16.msra.mxu0 0
      %1021 = vmatprep.subr.bf16.mxu0 0
      %1022 = vmatpush1.bf16.msra.mxu0 0
      %1023 = vmatprep.mubr.bf16.mxu0 0
      %1024 = vmatmul.mubr.bf16.gmra.mrb[0].mxu0 %v971
      %v1025 = vpop.f32.mrb[0].mxu0
      %v1026 = vadd.f32 0.0, %v1025
      %v1027 = vpop.f32.mrb[0].mxu0
      %v1028 = vpop.f32.mrb[0].mxu0
      %v1029 = vadd.f32 0.0, %v1028
      %v1030 = vpop.f32.mrb[0].mxu0
      %1031 = vmatprep.mubr.bf16.mxu0 0
      %1032 = vmatmul.mubr.bf16.gmra.mrb[0].mxu0 %v973
      %v1033 = vpop.f32.mrb[0].mxu0
      %v1034 = vadd.f32 0.0, %v1033
      %v1035 = vpop.f32.mrb[0].mxu0
      %v1036 = vpop.f32.mrb[0].mxu0
      %v1037 = vadd.f32 0.0, %v1036
      %v1038 = vpop.f32.mrb[0].mxu0
      %1039 = vmatprep.mubr.bf16.mxu0 0
      %1040 = vmatmul.mubr.bf16.gmra.mrb[0].mxu0 %v975
      %v1041 = vpop.f32.mrb[0].mxu0
      %v1042 = vadd.f32 0.0, %v1041
      %v1043 = vpop.f32.mrb[0].mxu0
      %v1044 = vpop.f32.mrb[0].mxu0
      %v1045 = vadd.f32 0.0, %v1044
      %v1046 = vpop.f32.mrb[0].mxu0
      %1047 = vmatprep.mubr.bf16.mxu0 0
      %1048 = vmatmul.mubr.bf16.gmra.mrb[0].mxu0 %v977
      %v1049 = vpop.f32.mrb[0].mxu0
      %v1050 = vadd.f32 0.0, %v1049
      %v1051 = vpop.f32.mrb[0].mxu0
      %v1052 = vpop.f32.mrb[0].mxu0
      %v1053 = vadd.f32 0.0, %v1052
      %v1054 = vpop.f32.mrb[0].mxu0
      %1055 = vmatprep.mubr.bf16.mxu0 0
      %1056 = vmatmul.mubr.bf16.gmra.mrb[0].mxu0 %v979
      %v1057 = vpop.f32.mrb[0].mxu0
      %v1058 = vadd.f32 0.0, %v1057
      %v1059 = vpop.f32.mrb[0].mxu0
      %v1060 = vpop.f32.mrb[0].mxu0
      %v1061 = vadd.f32 0.0, %v1060
      %v1062 = vpop.f32.mrb[0].mxu0
      %1063 = vmatprep.mubr.bf16.mxu0 0
      %1064 = vmatmul.mubr.bf16.gmra.mrb[0].mxu0 %v981
      %v1065 = vpop.f32.mrb[0].mxu0
      %v1066 = vadd.f32 0.0, %v1065
      %v1067 = vpop.f32.mrb[0].mxu0
      %v1068 = vpop.f32.mrb[0].mxu0
      %v1069 = vadd.f32 0.0, %v1068
      %v1070 = vpop.f32.mrb[0].mxu0
      %1071 = vmatprep.mubr.bf16.mxu0 0
      %1072 = vmatmul.mubr.bf16.gmra.mrb[0].mxu0 %v983
      %v1073 = vpop.f32.mrb[0].mxu0
      %v1074 = vadd.f32 0.0, %v1073
      %v1075 = vpop.f32.mrb[0].mxu0
      %v1076 = vpop.f32.mrb[0].mxu0
      %v1077 = vadd.f32 0.0, %v1076
      %v1078 = vpop.f32.mrb[0].mxu0
      %1079 = vmatprep.mubr.bf16.mxu0 0
      %1080 = vmatmul.mubr.bf16.gmra.mrb[0].mxu0 %v985
      %v1081 = vpop.f32.mrb[0].mxu0
      %v1082 = vadd.f32 0.0, %v1081
      %v1083 = vpop.f32.mrb[0].mxu0
      %v1084 = vpop.f32.mrb[0].mxu0
      %v1085 = vadd.f32 0.0, %v1084
      %v1086 = vpop.f32.mrb[0].mxu0
      %1087 = vdwg.mxu0
      %v1088 = vsel %vm836, %v1026, 0.0
      %v1089 = vsel %vm836, %v1029, 0.0
      %v1090 = vadd.f32 %v1088, %v1089
      %v1091 = vsel %vm836, %v1034, 0.0
      %v1092 = vadd.f32 %v1090, %v1091
      %v1093 = vsel %vm836, %v1037, 0.0
      %v1094 = vadd.f32 %v1092, %v1093
      %v1095 = vsel %vm836, %v1042, 0.0
      %v1096 = vadd.f32 %v1094, %v1095
      %v1097 = vsel %vm836, %v1045, 0.0
      %v1098 = vadd.f32 %v1096, %v1097
      %v1099 = vsel %vm836, %v1050, 0.0
      %v1100 = vadd.f32 %v1098, %v1099
      %v1101 = vsel %vm836, %v1053, 0.0
      %v1102 = vadd.f32 %v1100, %v1101
      %v1103 = vsel %vm836, %v1058, 0.0
      %v1104 = vadd.f32 %v1102, %v1103
      %v1105 = vsel %vm836, %v1061, 0.0
      %v1106 = vadd.f32 %v1104, %v1105
      %v1107 = vsel %vm836, %v1066, 0.0
      %v1108 = vadd.f32 %v1106, %v1107
      %v1109 = vsel %vm836, %v1069, 0.0
      %v1110 = vadd.f32 %v1108, %v1109
      %v1111 = vsel %vm836, %v1074, 0.0
      %v1112 = vadd.f32 %v1110, %v1111
      %v1113 = vsel %vm836, %v1077, 0.0
      %v1114 = vadd.f32 %v1112, %v1113
      %v1115 = vsel %vm836, %v1082, 0.0
      %v1116 = vadd.f32 %v1114, %v1115
      %v1117 = vsel %vm836, %v1085, 0.0
      %v1118 = vadd.f32 %v1116, %v1117
      %v1119 = vrot.slane %v1118, 4
      %v1120 = vadd.f32 %v1118, %v1119
      %v1121 = vrot.slane %v1120, 2
      %v1122 = vadd.f32 %v1120, %v1121
      %v1123 = vrot.slane %v1122, 1
      %v1124 = vadd.f32 %v1122, %v1123
      %v1125 = vrcp.pop 128.0
      %v1126 = vmul.f32 %v1124, %v1125
      %v1127 = vsub.f32 %v1026, %v1126
      %v1128 = vsub.f32 %v1029, %v1126
      %v1129 = vsub.f32 %v1034, %v1126
      %v1130 = vsub.f32 %v1037, %v1126
      %v1131 = vsub.f32 %v1042, %v1126
      %v1132 = vsub.f32 %v1045, %v1126
      %v1133 = vsub.f32 %v1050, %v1126
      %v1134 = vsub.f32 %v1053, %v1126
      %v1135 = vsub.f32 %v1058, %v1126
      %v1136 = vsub.f32 %v1061, %v1126
      %v1137 = vsub.f32 %v1066, %v1126
      %v1138 = vsub.f32 %v1069, %v1126
      %v1139 = vsub.f32 %v1074, %v1126
      %v1140 = vsub.f32 %v1077, %v1126
      %v1141 = vsub.f32 %v1082, %v1126
      %v1142 = vsub.f32 %v1085, %v1126
      %v1143 = vmul.f32 %v1127, %v1127
      %v1144 = vmul.f32 %v1128, %v1128
      %v1145 = vmul.f32 %v1129, %v1129
      %v1146 = vmul.f32 %v1130, %v1130
      %v1147 = vmul.f32 %v1131, %v1131
      %v1148 = vmul.f32 %v1132, %v1132
      %v1149 = vmul.f32 %v1133, %v1133
      %v1150 = vmul.f32 %v1134, %v1134
      %v1151 = vmul.f32 %v1135, %v1135
      %v1152 = vmul.f32 %v1136, %v1136
      %v1153 = vmul.f32 %v1137, %v1137
      %v1154 = vmul.f32 %v1138, %v1138
      %v1155 = vmul.f32 %v1139, %v1139
      %v1156 = vmul.f32 %v1140, %v1140
      %v1157 = vmul.f32 %v1141, %v1141
      %v1158 = vmul.f32 %v1142, %v1142
      %v1159 = vsel %vm836, %v1143, 0.0
      %v1160 = vsel %vm836, %v1144, 0.0
      %v1161 = vadd.f32 %v1159, %v1160
      %v1162 = vsel %vm836, %v1145, 0.0
      %v1163 = vadd.f32 %v1161, %v1162
      %v1164 = vsel %vm836, %v1146, 0.0
      %v1165 = vadd.f32 %v1163, %v1164
      %v1166 = vsel %vm836, %v1147, 0.0
      %v1167 = vadd.f32 %v1165, %v1166
      %v1168 = vsel %vm836, %v1148, 0.0
      %v1169 = vadd.f32 %v1167, %v1168
      %v1170 = vsel %vm836, %v1149, 0.0
      %v1171 = vadd.f32 %v1169, %v1170
      %v1172 = vsel %vm836, %v1150, 0.0
      %v1173 = vadd.f32 %v1171, %v1172
      %v1174 = vsel %vm836, %v1151, 0.0
      %v1175 = vadd.f32 %v1173, %v1174
      %v1176 = vsel %vm836, %v1152, 0.0
      %v1177 = vadd.f32 %v1175, %v1176
      %v1178 = vsel %vm836, %v1153, 0.0
      %v1179 = vadd.f32 %v1177, %v1178
      %v1180 = vsel %vm836, %v1154, 0.0
      %v1181 = vadd.f32 %v1179, %v1180
      %v1182 = vsel %vm836, %v1155, 0.0
      %v1183 = vadd.f32 %v1181, %v1182
      %v1184 = vsel %vm836, %v1156, 0.0
      %v1185 = vadd.f32 %v1183, %v1184
      %v1186 = vsel %vm836, %v1157, 0.0
      %v1187 = vadd.f32 %v1185, %v1186
      %v1188 = vsel %vm836, %v1158, 0.0
      %v1189 = vadd.f32 %v1187, %v1188
      %v1190 = vrot.slane %v1189, 4
      %v1191 = vadd.f32 %v1189, %v1190
      %v1192 = vrot.slane %v1191, 2
      %v1193 = vadd.f32 %v1191, %v1192
      %v1194 = vrot.slane %v1193, 1
      %v1195 = vadd.f32 %v1193, %v1194
      %vm1196 = vcmask 1040384
      %v1197 = vsel %vm1196, %v1124, %v1195
      %vm1198 = vcmask 58368
      %1199 = vst.msk [vmem:[%s413] sm:$0x3] %vm1198, %v1197
      %v1200 = vpack.c.bf16 %v1029, %v1026
      %v1201 = vpack.c.bf16 %v1037, %v1034
      %v1202 = vpack.c.bf16 %v1045, %v1042
      %v1203 = vpack.c.bf16 %v1053, %v1050
      %v1204 = vpack.c.bf16 %v1061, %v1058
      %v1205 = vpack.c.bf16 %v1069, %v1066
      %v1206 = vpack.c.bf16 %v1077, %v1074
      %v1207 = vpack.c.bf16 %v1085, %v1082
      %v1216 = vunpack.c.l.b16 %v1200
      %v1217 = vunpack.c.h.b16 %v1200
      %v1218 = vunpack.c.l.b16 %v1201
      %v1219 = vunpack.c.h.b16 %v1201
      %v1220 = vunpack.c.l.b16 %v1202
      %v1221 = vunpack.c.h.b16 %v1202
      %v1222 = vunpack.c.l.b16 %v1203
      %v1223 = vunpack.c.h.b16 %v1203
      %v1224 = vunpack.c.l.b16 %v1204
      %v1225 = vunpack.c.h.b16 %v1204
      %v1226 = vunpack.c.l.b16 %v1205
      %v1227 = vunpack.c.h.b16 %v1205
      %v1228 = vunpack.c.l.b16 %v1206
      %v1229 = vunpack.c.h.b16 %v1206
      %v1230 = vunpack.c.l.b16 %v1207
      %v1231 = vunpack.c.h.b16 %v1207
      %v1232 = vpack.c.b16 %v1216, %v1216
      %v1233 = vpack.c.b16 %v1217, %v1217
      %v1234 = vpack.c.b16 %v1218, %v1218
      %v1235 = vpack.c.b16 %v1219, %v1219
      %v1236 = vpack.c.b16 %v1220, %v1220
      %v1237 = vpack.c.b16 %v1221, %v1221
      %v1238 = vpack.c.b16 %v1222, %v1222
      %v1239 = vpack.c.b16 %v1223, %v1223
      %v1240 = vpack.c.b16 %v1224, %v1224
      %v1241 = vpack.c.b16 %v1225, %v1225
      %v1242 = vpack.c.b16 %v1226, %v1226
      %v1243 = vpack.c.b16 %v1227, %v1227
      %v1244 = vpack.c.b16 %v1228, %v1228
      %v1245 = vpack.c.b16 %v1229, %v1229
      %v1246 = vpack.c.b16 %v1230, %v1230
      %v1247 = vpack.c.b16 %v1231, %v1231
      %vm1264 = vcmask 60416
      %1265 = vst.msk [vmem:[%s404] sm:$0xf] %vm1264, %v1232
      %1266 = vst.msk [vmem:[%s404 + $0x4] sm:$0xf] %vm1264, %v1233
      %1267 = vst.msk [vmem:[%s404 + $0x8] sm:$0xf] %vm1264, %v1234
      %1268 = vst.msk [vmem:[%s404 + $0xc] sm:$0xf] %vm1264, %v1235
      %1269 = vst.msk [vmem:[%s404 + $0x10] sm:$0xf] %vm1264, %v1236
      %1270 = vst.msk [vmem:[%s404 + $0x14] sm:$0xf] %vm1264, %v1237
      %1271 = vst.msk [vmem:[%s404 + $0x18] sm:$0xf] %vm1264, %v1238
      %1272 = vst.msk [vmem:[%s404 + $0x1c] sm:$0xf] %vm1264, %v1239
      %1273 = vst.msk [vmem:[%s404 + $0x20] sm:$0xf] %vm1264, %v1240
      %1274 = vst.msk [vmem:[%s404 + $0x24] sm:$0xf] %vm1264, %v1241
      %1275 = vst.msk [vmem:[%s404 + $0x28] sm:$0xf] %vm1264, %v1242
      %1276 = vst.msk [vmem:[%s404 + $0x2c] sm:$0xf] %vm1264, %v1243
      %1277 = vst.msk [vmem:[%s404 + $0x30] sm:$0xf] %vm1264, %v1244
      %1278 = vst.msk [vmem:[%s404 + $0x34] sm:$0xf] %vm1264, %v1245
      %1279 = vst.msk [vmem:[%s404 + $0x38] sm:$0xf] %vm1264, %v1246
      %1280 = vst.msk [vmem:[%s404 + $0x3c] sm:$0xf] %vm1264, %v1247
      %s1281 = smul.u32 8, %s22
      %p1282 = scmp.lt.s32.totalorder %s21, 1
      %s1283 = scalar_select %p1282, %s21, 1
      %p1284 = scmp.lt.s32.totalorder %s1281, 15
      %s1285 = scalar_select %p1284, %s1281, 15
      %s1286 = smul.addr %s1285, 2
      %s1287 = smul.addr %s1283, 32
      %s1288 = sadd.s32 %s1286, %s1287
      %s1289 = smul.addr %s1288, 4
      %s1290 = scalar_lea.vmem %s4, %s1289
      %p1291 = scmp.lt.s32.totalorder %s21, 1
      %s1292 = scalar_select %p1291, %s21, 1
      %p1293 = scmp.lt.s32.totalorder %s22, 1
      %s1294 = scalar_select %p1293, %s22, 1
      %s1295 = smul.addr %s1292, 2
      %s1296 = sadd.s32 %s1294, %s1295
      %s1297 = smul.addr %s1296, 2
      %s1298 = scalar_lea.vmem %s5, %s1297
      // Predicated region
      $region37: #{double_conv.3} parent=35 // pred_check
        %p1299 = pneg %p170
      $region38: #{double_conv.3} parent=35 // pred_check_branch
        %1301 = sbr.rel (%p1299) target = $region40
      $region39: #{double_conv.3} parent=35 // pred_region
        %s1302 = smul.u32 8, %s22
      $region40: #{double_conv.3} parent=35 // pred_fallthru
        _
      // Predicated region
      $region41: #{double_conv.3} parent=35 // pred_check
        %p1303 = pneg %p198
      $region42: #{double_conv.3} parent=35 // pred_check_branch
        %1305 = sbr.rel (%p1303) target = $region44
      $region43: #{double_conv.3} parent=35 // pred_region
        _
      $region44: #{double_conv.3} parent=35 // pred_fallthru
        _
    $region36: #{double_conv.3} parent=5 // pred_fallthru
      _
    %p1306 = scmp.le.s32.totalorder 2, %s12
    // Predicated region
    $region45: #{double_conv.3} parent=5 // pred_check
      %p1307 = pneg %p1306
    $region46: #{double_conv.3} parent=5 // pred_check_branch
      %1309 = sbr.rel (%p1307) target = $region48
    $region47: #{double_conv.3} parent=5 // pred_region
      %s1310 = ssub.s32 %s12, 2
      // Predicated region
      $region49: #{double_conv.3} parent=47 // pred_check
        %p1311 = pneg %p176
      $region50: #{double_conv.3} parent=47 // pred_check_branch
        %1313 = sbr.rel (%p1311) target = $region52
      $region51: #{double_conv.3} parent=47 // pred_region
        %s1314 = smul.u32 8, %s24
        %p1315 = scmp.lt.s32.totalorder %s23, 1
        %s1316 = scalar_select %p1315, %s23, 1
        %p1317 = scmp.lt.s32.totalorder %s1314, 15
        %s1318 = scalar_select %p1317, %s1314, 15
        %s1319 = smul.addr %s1318, 2
        %s1320 = smul.addr %s1316, 32
        %s1321 = sadd.s32 %s1319, %s1320
        %s1322 = smul.addr %s1321, 4
        %s1323 = scalar_lea.vmem %s4, %s1322
      $region52: #{double_conv.3} parent=47 // pred_fallthru
        _
      // Predicated region
      $region53: #{double_conv.3} parent=47 // pred_check
        %p1324 = pneg %p204
      $region54: #{double_conv.3} parent=47 // pred_check_branch
        %1326 = sbr.rel (%p1324) target = $region56
      $region55: #{double_conv.3} parent=47 // pred_region
        %p1327 = scmp.lt.s32.totalorder %s23, 1
        %s1328 = scalar_select %p1327, %s23, 1
        %p1329 = scmp.lt.s32.totalorder %s24, 1
        %s1330 = scalar_select %p1329, %s24, 1
        %s1331 = smul.addr %s1328, 2
        %s1332 = sadd.s32 %s1330, %s1331
        %s1333 = smul.addr %s1332, 2
        %s1334 = scalar_lea.vmem %s5, %s1333
      $region56: #{double_conv.3} parent=47 // pred_fallthru
        _
    $region48: #{double_conv.3} parent=5 // pred_fallthru
      _
  $region6: #{double_conv.3} parent=0 // loop_footer
    %s16 = sadd.s32 1, %s12
  $region7: #{double_conv.3} parent=0 // loop_footer_branch
    %11 = sbr.rel target = $region3
  $region8: #{double_conv.3} parent=0 // loop_exit
    _

</llo_original>
